<compile_context>
chip_gen: v7x
topology: tpu7x:2x2x1
jax: 0.10.0
libtpu: 0.0.40
codegen_flags: <defaults>
</compile_context>

<pallas_src>
import math

import jax
import jax.numpy as jnp
from jax.experimental import pallas as pl
from jax.experimental.pallas import tpu as pltpu


# ---------------------------------------------------------------------------
# Host-side weight packing: one contiguous f32 slab, every entry at an
# 8-row-aligned offset.  Shared-LHS weights are N-stacked here.
# ---------------------------------------------------------------------------
def pack_params(params):
    entries = []
    for i, p in enumerate(params["tcn"]):
        entries.append((f"L{i}.w1_0", p["w1_0"]))
        if p["wd"] is not None:
            # conv1 tap-1 and the 1x1 downsample share the same LHS -> N-stack.
            entries.append((f"L{i}.w1_1d", jnp.concatenate([p["w1_1"], p["wd"]], axis=1)))
            entries.append((f"L{i}.bd", p["bd"]))
        else:
            entries.append((f"L{i}.w1_1", p["w1_1"]))
        entries.append((f"L{i}.b1", p["b1"]))
        entries.append((f"L{i}.w2_0", p["w2_0"]))
        entries.append((f"L{i}.w2_1", p["w2_1"]))
        entries.append((f"L{i}.b2", p["b2"]))

    (ws0, bs0), (ws1, bs1), (ws2, bs2) = params["static"]
    (wc0, bc0), (wc1, bc1), (wc2, bc2) = params["composite"]
    (wx0, bx0), (wx1, bx1), (wx2, bx2) = params["s_composite"]

    # static layer-0 and s_composite layer-0 both consume s -> N-stack.
    entries.append(("S0.w", jnp.concatenate([ws0, wx0], axis=1)))
    entries.append(("S0.b", jnp.concatenate([bs0, bx0], axis=1)))
    entries += [("ST1.w", ws1), ("ST1.b", bs1), ("ST2.w", ws2), ("ST2.b", bs2),
                ("SC1.w", wx1), ("SC1.b", bx1), ("SC2.w", wx2), ("SC2.b", bx2)]

    # composite layer 0 split into TCN-part and static-part rows.
    c_last = params["tcn"][-1]["w2_1"].shape[1]
    entries += [("C0.wh", wc0[:c_last]), ("C0.ws", wc0[c_last:]), ("C0.b", bc0),
                ("C1.w", wc1), ("C1.b", bc1), ("C2.w", wc2), ("C2.b", bc2)]

    offs, row, maxc = {}, 0, 0
    for name, a in entries:
        r, c = a.shape
        offs[name] = (row, r, c)
        row += ((r + 7) // 8) * 8
        maxc = max(maxc, c)
    cols = ((maxc + 7) // 8) * 8
    slab = jnp.zeros((row, cols), jnp.float32)
    for name, a in entries:
        r0, r, c = offs[name]
        slab = slab.at[r0:r0 + r, 0:c].set(a.astype(jnp.float32))
    return slab, offs


# ---------------------------------------------------------------------------
# Kernel
# ---------------------------------------------------------------------------
def _make_kernel(cfg, offs):
    T, B = cfg["T"], cfg["B"]
    TB = T * B
    cx, S = cfg["cx"], cfg["num_static"]
    chans, dil, has_ds = cfg["channels"], cfg["dilations"], cfg["has_downsample"]
    s0w, sc0w = cfg["s0_width"], cfg["sc0_width"]
    PAD, CMAX = cfg["pad_rows"], cfg["cmax"]

    def kernel(x_ref, s_ref, w_ref, o_ref, hpad):
        # hpad: (PAD + T*B, CMAX) VMEM scratch.  Rows [0:PAD] stay zero for the
        # whole kernel; rows [PAD:] hold the current activation.  A causal shift
        # by d timesteps is then just a row-slice starting at PAD - d*B.

        def W(name):                               # static slice of the weight slab
            r0, r, c = offs[name]
            return w_ref[r0:r0 + r, 0:c]

        def dot(a, b):
            return jnp.dot(a, b, preferred_element_type=jnp.float32)

        def tile_T(v):
            # (B, C) -> (T*B, C): broadcast over time (row r = t*B + b), no concat.
            return jnp.broadcast_to(v[None], (T, B, v.shape[-1])).reshape(TB, v.shape[-1])

        # Causal zero-pad region (written once, never overwritten below).
        hpad[0:PAD, :] = jnp.zeros((PAD, CMAX), jnp.float32)

        # Level-0 input straight into the scratch: x channels at cols [0:cx],
        # time-tiled static features at cols [cx:cx+S].
        s = s_ref[...]
        hpad[PAD:PAD + TB, 0:cx] = x_ref[...]
        hpad[PAD:PAD + TB, cx:cx + S] = tile_T(s)

        # ---- TCN: stack of TemporalBlocks (causal dilated conv, kernel_size=2) ----
        h = None
        cin = cx + S
        for lvl, (cout, d) in enumerate(zip(chans, dil)):
            sh = PAD - d * B                       # start row of the (t - d) slice
            if lvl > 0:
                hpad[PAD:PAD + TB, 0:cin] = h
            prev = hpad[sh:sh + TB, 0:cin]         # causal shift: zeros for t < d
            cur = hpad[PAD:PAD + TB, 0:cin] if lvl == 0 else h

            if has_ds[lvl]:
                z = dot(cur, W(f"L{lvl}.w1_1d"))   # (TB, 2*cout): [tap1 | downsample]
                tap1 = z[:, 0:cout]
                res = z[:, cout:2 * cout] + W(f"L{lvl}.bd")
            else:
                tap1 = dot(cur, W(f"L{lvl}.w1_1"))
                res = cur                          # cin == cout when no downsample
            y1 = jnp.maximum(dot(prev, W(f"L{lvl}.w1_0")) + tap1 + W(f"L{lvl}.b1"), 0.0)

            hpad[PAD:PAD + TB, 0:cout] = y1
            prev2 = hpad[sh:sh + TB, 0:cout]
            y2 = jnp.maximum(dot(prev2, W(f"L{lvl}.w2_0")) + dot(y1, W(f"L{lvl}.w2_1"))
                             + W(f"L{lvl}.b2"), 0.0)

            h = jnp.maximum(y2 + res, 0.0)
            cin = cout

        # ---- static & s_composite MLPs (layer 0 N-stacked: both consume s) ----
        z0 = jnp.maximum(dot(s, W("S0.w")) + W("S0.b"), 0.0)     # (B, s0w + sc0w)
        st = jnp.maximum(dot(z0[:, 0:s0w], W("ST1.w")) + W("ST1.b"), 0.0)
        ss = dot(st, W("ST2.w")) + W("ST2.b")                    # (B, Hs)
        sc = jnp.maximum(dot(z0[:, s0w:s0w + sc0w], W("SC1.w")) + W("SC1.b"), 0.0)
        s3 = dot(sc, W("SC2.w")) + W("SC2.b")                    # (B, 1)

        # ---- composite MLP; layer 0 weight-split: static part is a (B, .) matmul
        #      broadcast over time instead of a (T*B, .) concat + matmul ----
        cs = dot(ss, W("C0.ws"))                                 # (B, c0)
        c = jnp.maximum(dot(h, W("C0.wh")) + tile_T(cs) + W("C0.b"), 0.0)
        c = jnp.maximum(dot(c, W("C1.w")) + W("C1.b"), 0.0)
        c = dot(c, W("C2.w")) + W("C2.b")                        # (TB, 1)

        o_ref[...] = c + tile_T(s3)

    return kernel


# ---------------------------------------------------------------------------
# Wrapper
# ---------------------------------------------------------------------------
def temporal_conv_static_a_forward(x, s, params):
    """x: (B, Cx, T) float32, s: (B, num_static) float32  ->  (B, T, 1)."""
    B, Cx, T = x.shape
    S = s.shape[1]
    L = len(params["tcn"])
    dilations = [2 ** i for i in range(L)]
    chans = [p["w1_0"].shape[1] for p in params["tcn"]]
    has_ds = [p["wd"] is not None for p in params["tcn"]]

    slab, offs = pack_params(params)

    # time-major, channels-last rows: row r = t*B + b  <->  x[b, :, t]
    # TODO(synk): fuse this relayout into the input DMA for large T*B.
    x_tm = jnp.transpose(x, (2, 0, 1)).reshape(T * B, Cx).astype(jnp.float32)

    PAD = ((max(dilations) * B + 7) // 8) * 8
    CMAX = max(Cx + S, max(chans))
    cfg = dict(T=T, B=B, cx=Cx, num_static=S, channels=chans, dilations=dilations,
               has_downsample=has_ds, pad_rows=PAD, cmax=CMAX,
               s0_width=params["static"][0][0].shape[1],
               sc0_width=params["s_composite"][0][0].shape[1])

    out2d = pl.pallas_call(
        _make_kernel(cfg, offs),
        out_shape=jax.ShapeDtypeStruct((T * B, 1), jnp.float32),
        # whole-array, single-buffered VMEM residents (no grid -> nothing to pipeline)
        in_specs=[pl.BlockSpec(memory_space=pltpu.MemorySpace.VMEM)] * 3,
        out_specs=pl.BlockSpec(memory_space=pltpu.MemorySpace.VMEM),
        scratch_shapes=[pltpu.VMEM((PAD + T * B, CMAX), jnp.float32)],
        compiler_params=pltpu.CompilerParams(vmem_limit_bytes=32 * 1024 * 1024),
    )(x_tm, s.astype(jnp.float32), slab)

    return out2d.reshape(T, B, 1).transpose(1, 0, 2)   # (B, T, 1)


# ---------------------------------------------------------------------------
# Parameter init (mirrors the module; weight_norm folded, weights pre-transposed
# to (in_features, out_features) for row-major x @ W)
# ---------------------------------------------------------------------------
def init_params(key, cx, num_static, num_channels, s_param, c_param, sc_param,
                kernel_size=2):
    if kernel_size != 2:
        raise NotImplementedError("Pallas kernel implements kernel_size=2 (module default).")
    keys = iter(jax.random.split(key, 256))

    def nk():
        return next(keys)

    def conv_w(cin, cout):
        # init_weights(): Normal(0, 0.01); per-tap (cin, cout) matrices
        return (0.01 * jax.random.normal(nk(), (cin, cout), jnp.float32),
                0.01 * jax.random.normal(nk(), (cin, cout), jnp.float32))

    def conv_b(cin, cout, ks):
        k = 1.0 / math.sqrt(cin * ks)
        return jax.random.uniform(nk(), (1, cout), jnp.float32, -k, k)

    def linear(cin, cout):
        k = 1.0 / math.sqrt(cin)
        return (jax.random.uniform(nk(), (cin, cout), jnp.float32, -k, k),
                jax.random.uniform(nk(), (1, cout), jnp.float32, -k, k))

    num_inputs = cx + num_static   # network input channels = temporal + static
    tcn = []
    for i, cout in enumerate(num_channels):
        cin = num_inputs if i == 0 else num_channels[i - 1]
        w1_0, w1_1 = conv_w(cin, cout)
        b1 = conv_b(cin, cout, kernel_size)
        w2_0, w2_1 = conv_w(cout, cout)
        b2 = conv_b(cout, cout, kernel_size)
        if cin != cout:
            wd = 0.01 * jax.random.normal(nk(), (cin, cout), jnp.float32)
            bd = conv_b(cin, cout, 1)
        else:
            wd, bd = None, None
        tcn.append(dict(w1_0=w1_0, w1_1=w1_1, b1=b1,
                        w2_0=w2_0, w2_1=w2_1, b2=b2, wd=wd, bd=bd))

    static = [linear(num_static, s_param[0]),
              linear(s_param[0], s_param[1]),
              linear(s_param[-3], s_param[-2])]
    composite = [linear(num_channels[-1] + s_param[-2], c_param[0]),
                 linear(c_param[0], c_param[1]),
                 linear(c_param[-2], 1)]
    s_composite = [linear(num_static, sc_param[0]),
                   linear(sc_param[0], sc_param[1]),
                   linear(sc_param[-2], 1)]
    return dict(tcn=tcn, static=static, composite=composite, s_composite=s_composite)


# ---------------------------------------------------------------------------
# Pure-JAX reference (batch-first layout, independent code path)
# ---------------------------------------------------------------------------
def reference_forward(x, s, params):
    B, Cx, T = x.shape
    dilations = [2 ** i for i in range(len(params["tcn"]))]

    s1 = jnp.repeat(s[:, :, None], T, axis=2)           # (B, S, T)
    h = jnp.concatenate([x, s1], axis=1)                 # (B, C0, T)

    for lvl, p in enumerate(params["tcn"]):
        d = dilations[lvl]

        def cconv(inp, w0, w1, b):
            shifted = jnp.pad(inp, ((0, 0), (0, 0), (d, 0)))[:, :, :T]
            return (jnp.einsum("bct,co->bot", shifted, w0)
                    + jnp.einsum("bct,co->bot", inp, w1)
                    + b.reshape(1, -1, 1))

        y = jax.nn.relu(cconv(h, p["w1_0"], p["w1_1"], p["b1"]))
        y = jax.nn.relu(cconv(y, p["w2_0"], p["w2_1"], p["b2"]))
        if p["wd"] is not None:
            res = jnp.einsum("bct,co->bot", h, p["wd"]) + p["bd"].reshape(1, -1, 1)
        else:
            res = h
        h = jax.nn.relu(y + res)

    ht = jnp.transpose(h, (0, 2, 1))                     # (B, T, C)

    def mlp(v, wb):
        (w0, b0), (w1, b1), (w2, b2) = wb
        v = jax.nn.relu(v @ w0 + b0)
        v = jax.nn.relu(v @ w1 + b1)
        return v @ w2 + b2

    ss = mlp(s, params["static"])                                        # (B, Hs)
    s2 = jnp.broadcast_to(ss[:, None, :], (B, T, ss.shape[-1]))
    comp = mlp(jnp.concatenate([ht, s2], axis=-1), params["composite"])  # (B, T, 1)
    s3 = mlp(s, params["s_composite"])                                   # (B, 1)
    return comp + s3[:, None, :]


# ---------------------------------------------------------------------------
if __name__ == "__main__":
    # Small shapes consistent with the module structure:
    # 4 TCN levels (dilations 1,2,4,8), kernel_size=2, small channels.
    B, Cx, T = 2, 6, 16
    num_static = 5
    num_channels = [16, 16, 16, 16]
    s_param = [16, 16, 16, 0.2]
    c_param = [16, 16, 0.2]
    sc_param = [16, 16, 16, 0.2]

    key = jax.random.PRNGKey(0)
    kx, ks, kp = jax.random.split(key, 3)
    x = jax.random.normal(kx, (B, Cx, T), dtype=jnp.float32)
    s = jax.random.normal(ks, (B, num_static), dtype=jnp.float32)

    params = init_params(kp, Cx, num_static, num_channels, s_param, c_param, sc_param)

    out = temporal_conv_static_a_forward(x, s, params)
    out = jax.block_until_ready(out)

    ref = reference_forward(x, s, params)
    assert out.shape == (B, T, 1), out.shape
    # NOTE: f32 dots use the MXU's default precision; tolerance covers that.
    max_err = float(jnp.max(jnp.abs(out - ref)))
    assert max_err < 1e-2, f"mismatch vs pure-JAX reference: max_err={max_err}"

    print("KERNEL_OK")
</pallas_src>

<mosaic_0001>
module attributes {stable_mosaic.version = 11 : i64} {
  func.func @kernel(%arg0: memref<32x6xf32, #tpu.memory_space<vmem>>, %arg1: memref<2x5xf32, #tpu.memory_space<vmem>>, %arg2: memref<528x32xf32, #tpu.memory_space<vmem>>, %arg3: memref<32x1xf32, #tpu.memory_space<vmem>>, %arg4: memref<48x16xf32, #tpu.memory_space<vmem>>) attributes {dimension_semantics = [], scalar_prefetch = 0 : i64, scratch_operands = 1 : i64, tpu.core_type = #tpu.core_type<tc>} {
    %cst = arith.constant 0.000000e+00 : f32
    %0 = vector.broadcast %cst : f32 to vector<16x16xf32>
    %c0 = arith.constant 0 : index
    %c0_0 = arith.constant 0 : index
    %1 = vector.load %arg4[%c0, %c0_0] : memref<48x16xf32, #tpu.memory_space<vmem>>, vector<16x16xf32>
    tpu.vector_store %arg4[%c0, %c0_0], %0 {strides = array<i32>} : memref<48x16xf32, #tpu.memory_space<vmem>>, vector<16x16xf32>,
    %c0_1 = arith.constant 0 : index
    %c0_2 = arith.constant 0 : index
    %2 = vector.load %arg1[%c0_1, %c0_2] : memref<2x5xf32, #tpu.memory_space<vmem>>, vector<2x5xf32>
    %c0_3 = arith.constant 0 : index
    %c0_4 = arith.constant 0 : index
    %3 = vector.load %arg0[%c0_3, %c0_4] : memref<32x6xf32, #tpu.memory_space<vmem>>, vector<32x6xf32>
    %c16 = arith.constant 16 : index
    %c0_5 = arith.constant 0 : index
    %4 = vector.load %arg4[%c16, %c0_5] : memref<48x16xf32, #tpu.memory_space<vmem>>, vector<32x6xf32>
    tpu.vector_store %arg4[%c16, %c0_5], %3 {strides = array<i32>} : memref<48x16xf32, #tpu.memory_space<vmem>>, vector<32x6xf32>,
    %5 = vector.shape_cast %2 : vector<2x5xf32> to vector<1x2x5xf32>
    %6 = vector.shape_cast %5 : vector<1x2x5xf32> to vector<1x2x5xf32>
    %7 = vector.broadcast %6 : vector<1x2x5xf32> to vector<16x2x5xf32>
    %8 = vector.shape_cast %7 : vector<16x2x5xf32> to vector<32x5xf32>
    %c16_6 = arith.constant 16 : index
    %c6 = arith.constant 6 : index
    %9 = vector.load %arg4[%c16_6, %c6] : memref<48x16xf32, #tpu.memory_space<vmem>>, vector<32x5xf32>
    tpu.vector_store %arg4[%c16_6, %c6], %8 {strides = array<i32>} : memref<48x16xf32, #tpu.memory_space<vmem>>, vector<32x5xf32>,
    %c14 = arith.constant 14 : index
    %c0_7 = arith.constant 0 : index
    %10 = vector.load %arg4[%c14, %c0_7] : memref<48x16xf32, #tpu.memory_space<vmem>>, vector<32x11xf32>
    %c16_8 = arith.constant 16 : index
    %c0_9 = arith.constant 0 : index
    %11 = vector.load %arg4[%c16_8, %c0_9] : memref<48x16xf32, #tpu.memory_space<vmem>>, vector<32x11xf32>
    %c16_10 = arith.constant 16 : index
    %c0_11 = arith.constant 0 : index
    %12 = vector.load %arg2[%c16_10, %c0_11] : memref<528x32xf32, #tpu.memory_space<vmem>>, vector<11x32xf32>
    %cst_12 = arith.constant dense<0.000000e+00> : vector<32x32xf32>
    %13 = tpu.matmul %11, %12, %cst_12 {dimension_numbers = #tpu.dot_dimension_numbers<[1], [0], [0], [1], [0, 0, 1, 1], [], []>} : vector<32x11xf32>, vector<11x32xf32>, vector<32x32xf32> -> vector<32x32xf32>
    %14 = vector.extract_strided_slice %13 {offsets = [0, 0], sizes = [32, 16], strides = [1, 1]} : vector<32x32xf32> to vector<32x16xf32>
    %15 = vector.extract_strided_slice %13 {offsets = [0, 16], sizes = [32, 16], strides = [1, 1]} : vector<32x32xf32> to vector<32x16xf32>
    %c32 = arith.constant 32 : index
    %c0_13 = arith.constant 0 : index
    %16 = vector.load %arg2[%c32, %c0_13] : memref<528x32xf32, #tpu.memory_space<vmem>>, vector<1x16xf32>
    %17 = vector.broadcast %16 : vector<1x16xf32> to vector<32x16xf32>
    %18 = arith.addf %15, %17 : vector<32x16xf32>
    %c0_14 = arith.constant 0 : index
    %c0_15 = arith.constant 0 : index
    %19 = vector.load %arg2[%c0_14, %c0_15] : memref<528x32xf32, #tpu.memory_space<vmem>>, vector<11x16xf32>
    %cst_16 = arith.constant dense<0.000000e+00> : vector<32x16xf32>
    %20 = tpu.matmul %10, %19, %cst_16 {dimension_numbers = #tpu.dot_dimension_numbers<[1], [0], [0], [1], [0, 0, 1, 1], [], []>} : vector<32x11xf32>, vector<11x16xf32>, vector<32x16xf32> -> vector<32x16xf32>
    %21 = arith.addf %20, %14 : vector<32x16xf32>
    %c40 = arith.constant 40 : index
    %c0_17 = arith.constant 0 : index
    %22 = vector.load %arg2[%c40, %c0_17] : memref<528x32xf32, #tpu.memory_space<vmem>>, vector<1x16xf32>
    %23 = vector.broadcast %22 : vector<1x16xf32> to vector<32x16xf32>
    %24 = arith.addf %21, %23 : vector<32x16xf32>
    %cst_18 = arith.constant 0.000000e+00 : f32
    %25 = vector.broadcast %cst_18 : f32 to vector<32x16xf32>
    %26 = arith.maximumf %24, %25 : vector<32x16xf32>
    %c16_19 = arith.constant 16 : index
    %c0_20 = arith.constant 0 : index
    %27 = vector.load %arg4[%c16_19, %c0_20] : memref<48x16xf32, #tpu.memory_space<vmem>>, vector<32x16xf32>
    tpu.vector_store %arg4[%c16_19, %c0_20], %26 {strides = array<i32>} : memref<48x16xf32, #tpu.memory_space<vmem>>, vector<32x16xf32>,
    %c14_21 = arith.constant 14 : index
    %c0_22 = arith.constant 0 : index
    %28 = vector.load %arg4[%c14_21, %c0_22] : memref<48x16xf32, #tpu.memory_space<vmem>>, vector<32x16xf32>
    %c48 = arith.constant 48 : index
    %c0_23 = arith.constant 0 : index
    %29 = vector.load %arg2[%c48, %c0_23] : memref<528x32xf32, #tpu.memory_space<vmem>>, vector<16x16xf32>
    %cst_24 = arith.constant dense<0.000000e+00> : vector<32x16xf32>
    %30 = tpu.matmul %28, %29, %cst_24 {dimension_numbers = #tpu.dot_dimension_numbers<[1], [0], [0], [1], [0, 0, 1, 1], [], []>} : vector<32x16xf32>, vector<16x16xf32>, vector<32x16xf32> -> vector<32x16xf32>
    %c64 = arith.constant 64 : index
    %c0_25 = arith.constant 0 : index
    %31 = vector.load %arg2[%c64, %c0_25] : memref<528x32xf32, #tpu.memory_space<vmem>>, vector<16x16xf32>
    %cst_26 = arith.constant dense<0.000000e+00> : vector<32x16xf32>
    %32 = tpu.matmul %26, %31, %cst_26 {dimension_numbers = #tpu.dot_dimension_numbers<[1], [0], [0], [1], [0, 0, 1, 1], [], []>} : vector<32x16xf32>, vector<16x16xf32>, vector<32x16xf32> -> vector<32x16xf32>
    %33 = arith.addf %30, %32 : vector<32x16xf32>
    %c80 = arith.constant 80 : index
    %c0_27 = arith.constant 0 : index
    %34 = vector.load %arg2[%c80, %c0_27] : memref<528x32xf32, #tpu.memory_space<vmem>>, vector<1x16xf32>
    %35 = vector.broadcast %34 : vector<1x16xf32> to vector<32x16xf32>
    %36 = arith.addf %33, %35 : vector<32x16xf32>
    %cst_28 = arith.constant 0.000000e+00 : f32
    %37 = vector.broadcast %cst_28 : f32 to vector<32x16xf32>
    %38 = arith.maximumf %36, %37 : vector<32x16xf32>
    %39 = arith.addf %38, %18 : vector<32x16xf32>
    %cst_29 = arith.constant 0.000000e+00 : f32
    %40 = vector.broadcast %cst_29 : f32 to vector<32x16xf32>
    %41 = arith.maximumf %39, %40 : vector<32x16xf32>
    %c16_30 = arith.constant 16 : index
    %c0_31 = arith.constant 0 : index
    %42 = vector.load %arg4[%c16_30, %c0_31] : memref<48x16xf32, #tpu.memory_space<vmem>>, vector<32x16xf32>
    tpu.vector_store %arg4[%c16_30, %c0_31], %41 {strides = array<i32>} : memref<48x16xf32, #tpu.memory_space<vmem>>, vector<32x16xf32>,
    %c12 = arith.constant 12 : index
    %c0_32 = arith.constant 0 : index
    %43 = vector.load %arg4[%c12, %c0_32] : memref<48x16xf32, #tpu.memory_space<vmem>>, vector<32x16xf32>
    %c104 = arith.constant 104 : index
    %c0_33 = arith.constant 0 : index
    %44 = vector.load %arg2[%c104, %c0_33] : memref<528x32xf32, #tpu.memory_space<vmem>>, vector<16x16xf32>
    %cst_34 = arith.constant dense<0.000000e+00> : vector<32x16xf32>
    %45 = tpu.matmul %41, %44, %cst_34 {dimension_numbers = #tpu.dot_dimension_numbers<[1], [0], [0], [1], [0, 0, 1, 1], [], []>} : vector<32x16xf32>, vector<16x16xf32>, vector<32x16xf32> -> vector<32x16xf32>
    %c88 = arith.constant 88 : index
    %c0_35 = arith.constant 0 : index
    %46 = vector.load %arg2[%c88, %c0_35] : memref<528x32xf32, #tpu.memory_space<vmem>>, vector<16x16xf32>
    %cst_36 = arith.constant dense<0.000000e+00> : vector<32x16xf32>
    %47 = tpu.matmul %43, %46, %cst_36 {dimension_numbers = #tpu.dot_dimension_numbers<[1], [0], [0], [1], [0, 0, 1, 1], [], []>} : vector<32x16xf32>, vector<16x16xf32>, vector<32x16xf32> -> vector<32x16xf32>
    %48 = arith.addf %47, %45 : vector<32x16xf32>
    %c120 = arith.constant 120 : index
    %c0_37 = arith.constant 0 : index
    %49 = vector.load %arg2[%c120, %c0_37] : memref<528x32xf32, #tpu.memory_space<vmem>>, vector<1x16xf32>
    %50 = vector.broadcast %49 : vector<1x16xf32> to vector<32x16xf32>
    %51 = arith.addf %48, %50 : vector<32x16xf32>
    %cst_38 = arith.constant 0.000000e+00 : f32
    %52 = vector.broadcast %cst_38 : f32 to vector<32x16xf32>
    %53 = arith.maximumf %51, %52 : vector<32x16xf32>
    %c16_39 = arith.constant 16 : index
    %c0_40 = arith.constant 0 : index
    %54 = vector.load %arg4[%c16_39, %c0_40] : memref<48x16xf32, #tpu.memory_space<vmem>>, vector<32x16xf32>
    tpu.vector_store %arg4[%c16_39, %c0_40], %53 {strides = array<i32>} : memref<48x16xf32, #tpu.memory_space<vmem>>, vector<32x16xf32>,
    %c12_41 = arith.constant 12 : index
    %c0_42 = arith.constant 0 : index
    %55 = vector.load %arg4[%c12_41, %c0_42] : memref<48x16xf32, #tpu.memory_space<vmem>>, vector<32x16xf32>
    %c128 = arith.constant 128 : index
    %c0_43 = arith.constant 0 : index
    %56 = vector.load %arg2[%c128, %c0_43] : memref<528x32xf32, #tpu.memory_space<vmem>>, vector<16x16xf32>
    %cst_44 = arith.constant dense<0.000000e+00> : vector<32x16xf32>
    %57 = tpu.matmul %55, %56, %cst_44 {dimension_numbers = #tpu.dot_dimension_numbers<[1], [0], [0], [1], [0, 0, 1, 1], [], []>} : vector<32x16xf32>, vector<16x16xf32>, vector<32x16xf32> -> vector<32x16xf32>
    %c144 = arith.constant 144 : index
    %c0_45 = arith.constant 0 : index
    %58 = vector.load %arg2[%c144, %c0_45] : memref<528x32xf32, #tpu.memory_space<vmem>>, vector<16x16xf32>
    %cst_46 = arith.constant dense<0.000000e+00> : vector<32x16xf32>
    %59 = tpu.matmul %53, %58, %cst_46 {dimension_numbers = #tpu.dot_dimension_numbers<[1], [0], [0], [1], [0, 0, 1, 1], [], []>} : vector<32x16xf32>, vector<16x16xf32>, vector<32x16xf32> -> vector<32x16xf32>
    %60 = arith.addf %57, %59 : vector<32x16xf32>
    %c160 = arith.constant 160 : index
    %c0_47 = arith.constant 0 : index
    %61 = vector.load %arg2[%c160, %c0_47] : memref<528x32xf32, #tpu.memory_space<vmem>>, vector<1x16xf32>
    %62 = vector.broadcast %61 : vector<1x16xf32> to vector<32x16xf32>
    %63 = arith.addf %60, %62 : vector<32x16xf32>
    %cst_48 = arith.constant 0.000000e+00 : f32
    %64 = vector.broadcast %cst_48 : f32 to vector<32x16xf32>
    %65 = arith.maximumf %63, %64 : vector<32x16xf32>
    %66 = arith.addf %65, %41 : vector<32x16xf32>
    %cst_49 = arith.constant 0.000000e+00 : f32
    %67 = vector.broadcast %cst_49 : f32 to vector<32x16xf32>
    %68 = arith.maximumf %66, %67 : vector<32x16xf32>
    %c16_50 = arith.constant 16 : index
    %c0_51 = arith.constant 0 : index
    %69 = vector.load %arg4[%c16_50, %c0_51] : memref<48x16xf32, #tpu.memory_space<vmem>>, vector<32x16xf32>
    tpu.vector_store %arg4[%c16_50, %c0_51], %68 {strides = array<i32>} : memref<48x16xf32, #tpu.memory_space<vmem>>, vector<32x16xf32>,
    %c8 = arith.constant 8 : index
    %c0_52 = arith.constant 0 : index
    %70 = vector.load %arg4[%c8, %c0_52] : memref<48x16xf32, #tpu.memory_space<vmem>>, vector<32x16xf32>
    %c184 = arith.constant 184 : index
    %c0_53 = arith.constant 0 : index
    %71 = vector.load %arg2[%c184, %c0_53] : memref<528x32xf32, #tpu.memory_space<vmem>>, vector<16x16xf32>
    %cst_54 = arith.constant dense<0.000000e+00> : vector<32x16xf32>
    %72 = tpu.matmul %68, %71, %cst_54 {dimension_numbers = #tpu.dot_dimension_numbers<[1], [0], [0], [1], [0, 0, 1, 1], [], []>} : vector<32x16xf32>, vector<16x16xf32>, vector<32x16xf32> -> vector<32x16xf32>
    %c168 = arith.constant 168 : index
    %c0_55 = arith.constant 0 : index
    %73 = vector.load %arg2[%c168, %c0_55] : memref<528x32xf32, #tpu.memory_space<vmem>>, vector<16x16xf32>
    %cst_56 = arith.constant dense<0.000000e+00> : vector<32x16xf32>
    %74 = tpu.matmul %70, %73, %cst_56 {dimension_numbers = #tpu.dot_dimension_numbers<[1], [0], [0], [1], [0, 0, 1, 1], [], []>} : vector<32x16xf32>, vector<16x16xf32>, vector<32x16xf32> -> vector<32x16xf32>
    %75 = arith.addf %74, %72 : vector<32x16xf32>
    %c200 = arith.constant 200 : index
    %c0_57 = arith.constant 0 : index
    %76 = vector.load %arg2[%c200, %c0_57] : memref<528x32xf32, #tpu.memory_space<vmem>>, vector<1x16xf32>
    %77 = vector.broadcast %76 : vector<1x16xf32> to vector<32x16xf32>
    %78 = arith.addf %75, %77 : vector<32x16xf32>
    %cst_58 = arith.constant 0.000000e+00 : f32
    %79 = vector.broadcast %cst_58 : f32 to vector<32x16xf32>
    %80 = arith.maximumf %78, %79 : vector<32x16xf32>
    %c16_59 = arith.constant 16 : index
    %c0_60 = arith.constant 0 : index
    %81 = vector.load %arg4[%c16_59, %c0_60] : memref<48x16xf32, #tpu.memory_space<vmem>>, vector<32x16xf32>
    tpu.vector_store %arg4[%c16_59, %c0_60], %80 {strides = array<i32>} : memref<48x16xf32, #tpu.memory_space<vmem>>, vector<32x16xf32>,
    %c8_61 = arith.constant 8 : index
    %c0_62 = arith.constant 0 : index
    %82 = vector.load %arg4[%c8_61, %c0_62] : memref<48x16xf32, #tpu.memory_space<vmem>>, vector<32x16xf32>
    %c208 = arith.constant 208 : index
    %c0_63 = arith.constant 0 : index
    %83 = vector.load %arg2[%c208, %c0_63] : memref<528x32xf32, #tpu.memory_space<vmem>>, vector<16x16xf32>
    %cst_64 = arith.constant dense<0.000000e+00> : vector<32x16xf32>
    %84 = tpu.matmul %82, %83, %cst_64 {dimension_numbers = #tpu.dot_dimension_numbers<[1], [0], [0], [1], [0, 0, 1, 1], [], []>} : vector<32x16xf32>, vector<16x16xf32>, vector<32x16xf32> -> vector<32x16xf32>
    %c224 = arith.constant 224 : index
    %c0_65 = arith.constant 0 : index
    %85 = vector.load %arg2[%c224, %c0_65] : memref<528x32xf32, #tpu.memory_space<vmem>>, vector<16x16xf32>
    %cst_66 = arith.constant dense<0.000000e+00> : vector<32x16xf32>
    %86 = tpu.matmul %80, %85, %cst_66 {dimension_numbers = #tpu.dot_dimension_numbers<[1], [0], [0], [1], [0, 0, 1, 1], [], []>} : vector<32x16xf32>, vector<16x16xf32>, vector<32x16xf32> -> vector<32x16xf32>
    %87 = arith.addf %84, %86 : vector<32x16xf32>
    %c240 = arith.constant 240 : index
    %c0_67 = arith.constant 0 : index
    %88 = vector.load %arg2[%c240, %c0_67] : memref<528x32xf32, #tpu.memory_space<vmem>>, vector<1x16xf32>
    %89 = vector.broadcast %88 : vector<1x16xf32> to vector<32x16xf32>
    %90 = arith.addf %87, %89 : vector<32x16xf32>
    %cst_68 = arith.constant 0.000000e+00 : f32
    %91 = vector.broadcast %cst_68 : f32 to vector<32x16xf32>
    %92 = arith.maximumf %90, %91 : vector<32x16xf32>
    %93 = arith.addf %92, %68 : vector<32x16xf32>
    %cst_69 = arith.constant 0.000000e+00 : f32
    %94 = vector.broadcast %cst_69 : f32 to vector<32x16xf32>
    %95 = arith.maximumf %93, %94 : vector<32x16xf32>
    %c16_70 = arith.constant 16 : index
    %c0_71 = arith.constant 0 : index
    %96 = vector.load %arg4[%c16_70, %c0_71] : memref<48x16xf32, #tpu.memory_space<vmem>>, vector<32x16xf32>
    tpu.vector_store %arg4[%c16_70, %c0_71], %95 {strides = array<i32>} : memref<48x16xf32, #tpu.memory_space<vmem>>, vector<32x16xf32>,
    %c0_72 = arith.constant 0 : index
    %c0_73 = arith.constant 0 : index
    %97 = vector.load %arg4[%c0_72, %c0_73] : memref<48x16xf32, #tpu.memory_space<vmem>>, vector<32x16xf32>
    %c264 = arith.constant 264 : index
    %c0_74 = arith.constant 0 : index
    %98 = vector.load %arg2[%c264, %c0_74] : memref<528x32xf32, #tpu.memory_space<vmem>>, vector<16x16xf32>
    %cst_75 = arith.constant dense<0.000000e+00> : vector<32x16xf32>
    %99 = tpu.matmul %95, %98, %cst_75 {dimension_numbers = #tpu.dot_dimension_numbers<[1], [0], [0], [1], [0, 0, 1, 1], [], []>} : vector<32x16xf32>, vector<16x16xf32>, vector<32x16xf32> -> vector<32x16xf32>
    %c248 = arith.constant 248 : index
    %c0_76 = arith.constant 0 : index
    %100 = vector.load %arg2[%c248, %c0_76] : memref<528x32xf32, #tpu.memory_space<vmem>>, vector<16x16xf32>
    %cst_77 = arith.constant dense<0.000000e+00> : vector<32x16xf32>
    %101 = tpu.matmul %97, %100, %cst_77 {dimension_numbers = #tpu.dot_dimension_numbers<[1], [0], [0], [1], [0, 0, 1, 1], [], []>} : vector<32x16xf32>, vector<16x16xf32>, vector<32x16xf32> -> vector<32x16xf32>
    %102 = arith.addf %101, %99 : vector<32x16xf32>
    %c280 = arith.constant 280 : index
    %c0_78 = arith.constant 0 : index
    %103 = vector.load %arg2[%c280, %c0_78] : memref<528x32xf32, #tpu.memory_space<vmem>>, vector<1x16xf32>
    %104 = vector.broadcast %103 : vector<1x16xf32> to vector<32x16xf32>
    %105 = arith.addf %102, %104 : vector<32x16xf32>
    %cst_79 = arith.constant 0.000000e+00 : f32
    %106 = vector.broadcast %cst_79 : f32 to vector<32x16xf32>
    %107 = arith.maximumf %105, %106 : vector<32x16xf32>
    %c16_80 = arith.constant 16 : index
    %c0_81 = arith.constant 0 : index
    %108 = vector.load %arg4[%c16_80, %c0_81] : memref<48x16xf32, #tpu.memory_space<vmem>>, vector<32x16xf32>
    tpu.vector_store %arg4[%c16_80, %c0_81], %107 {strides = array<i32>} : memref<48x16xf32, #tpu.memory_space<vmem>>, vector<32x16xf32>,
    %c0_82 = arith.constant 0 : index
    %c0_83 = arith.constant 0 : index
    %109 = vector.load %arg4[%c0_82, %c0_83] : memref<48x16xf32, #tpu.memory_space<vmem>>, vector<32x16xf32>
    %c288 = arith.constant 288 : index
    %c0_84 = arith.constant 0 : index
    %110 = vector.load %arg2[%c288, %c0_84] : memref<528x32xf32, #tpu.memory_space<vmem>>, vector<16x16xf32>
    %cst_85 = arith.constant dense<0.000000e+00> : vector<32x16xf32>
    %111 = tpu.matmul %109, %110, %cst_85 {dimension_numbers = #tpu.dot_dimension_numbers<[1], [0], [0], [1], [0, 0, 1, 1], [], []>} : vector<32x16xf32>, vector<16x16xf32>, vector<32x16xf32> -> vector<32x16xf32>
    %c304 = arith.constant 304 : index
    %c0_86 = arith.constant 0 : index
    %112 = vector.load %arg2[%c304, %c0_86] : memref<528x32xf32, #tpu.memory_space<vmem>>, vector<16x16xf32>
    %cst_87 = arith.constant dense<0.000000e+00> : vector<32x16xf32>
    %113 = tpu.matmul %107, %112, %cst_87 {dimension_numbers = #tpu.dot_dimension_numbers<[1], [0], [0], [1], [0, 0, 1, 1], [], []>} : vector<32x16xf32>, vector<16x16xf32>, vector<32x16xf32> -> vector<32x16xf32>
    %114 = arith.addf %111, %113 : vector<32x16xf32>
    %c320 = arith.constant 320 : index
    %c0_88 = arith.constant 0 : index
    %115 = vector.load %arg2[%c320, %c0_88] : memref<528x32xf32, #tpu.memory_space<vmem>>, vector<1x16xf32>
    %116 = vector.broadcast %115 : vector<1x16xf32> to vector<32x16xf32>
    %117 = arith.addf %114, %116 : vector<32x16xf32>
    %cst_89 = arith.constant 0.000000e+00 : f32
    %118 = vector.broadcast %cst_89 : f32 to vector<32x16xf32>
    %119 = arith.maximumf %117, %118 : vector<32x16xf32>
    %120 = arith.addf %119, %95 : vector<32x16xf32>
    %cst_90 = arith.constant 0.000000e+00 : f32
    %121 = vector.broadcast %cst_90 : f32 to vector<32x16xf32>
    %122 = arith.maximumf %120, %121 : vector<32x16xf32>
    %c328 = arith.constant 328 : index
    %c0_91 = arith.constant 0 : index
    %123 = vector.load %arg2[%c328, %c0_91] : memref<528x32xf32, #tpu.memory_space<vmem>>, vector<5x32xf32>
    %cst_92 = arith.constant dense<0.000000e+00> : vector<2x32xf32>
    %124 = tpu.matmul %2, %123, %cst_92 {dimension_numbers = #tpu.dot_dimension_numbers<[1], [0], [0], [1], [0, 0, 1, 1], [], []>} : vector<2x5xf32>, vector<5x32xf32>, vector<2x32xf32> -> vector<2x32xf32>
    %c336 = arith.constant 336 : index
    %c0_93 = arith.constant 0 : index
    %125 = vector.load %arg2[%c336, %c0_93] : memref<528x32xf32, #tpu.memory_space<vmem>>, vector<1x32xf32>
    %126 = vector.broadcast %125 : vector<1x32xf32> to vector<2x32xf32>
    %127 = arith.addf %124, %126 : vector<2x32xf32>
    %cst_94 = arith.constant 0.000000e+00 : f32
    %128 = vector.broadcast %cst_94 : f32 to vector<2x32xf32>
    %129 = arith.maximumf %127, %128 : vector<2x32xf32>
    %130 = vector.extract_strided_slice %129 {offsets = [0, 0], sizes = [2, 16], strides = [1, 1]} : vector<2x32xf32> to vector<2x16xf32>
    %c344 = arith.constant 344 : index
    %c0_95 = arith.constant 0 : index
    %131 = vector.load %arg2[%c344, %c0_95] : memref<528x32xf32, #tpu.memory_space<vmem>>, vector<16x16xf32>
    %cst_96 = arith.constant dense<0.000000e+00> : vector<2x16xf32>
    %132 = tpu.matmul %130, %131, %cst_96 {dimension_numbers = #tpu.dot_dimension_numbers<[1], [0], [0], [1], [0, 0, 1, 1], [], []>} : vector<2x16xf32>, vector<16x16xf32>, vector<2x16xf32> -> vector<2x16xf32>
    %c360 = arith.constant 360 : index
    %c0_97 = arith.constant 0 : index
    %133 = vector.load %arg2[%c360, %c0_97] : memref<528x32xf32, #tpu.memory_space<vmem>>, vector<1x16xf32>
    %134 = vector.broadcast %133 : vector<1x16xf32> to vector<2x16xf32>
    %135 = arith.addf %132, %134 : vector<2x16xf32>
    %cst_98 = arith.constant 0.000000e+00 : f32
    %136 = vector.broadcast %cst_98 : f32 to vector<2x16xf32>
    %137 = arith.maximumf %135, %136 : vector<2x16xf32>
    %c368 = arith.constant 368 : index
    %c0_99 = arith.constant 0 : index
    %138 = vector.load %arg2[%c368, %c0_99] : memref<528x32xf32, #tpu.memory_space<vmem>>, vector<16x16xf32>
    %cst_100 = arith.constant dense<0.000000e+00> : vector<2x16xf32>
    %139 = tpu.matmul %137, %138, %cst_100 {dimension_numbers = #tpu.dot_dimension_numbers<[1], [0], [0], [1], [0, 0, 1, 1], [], []>} : vector<2x16xf32>, vector<16x16xf32>, vector<2x16xf32> -> vector<2x16xf32>
    %c384 = arith.constant 384 : index
    %c0_101 = arith.constant 0 : index
    %140 = vector.load %arg2[%c384, %c0_101] : memref<528x32xf32, #tpu.memory_space<vmem>>, vector<1x16xf32>
    %141 = vector.broadcast %140 : vector<1x16xf32> to vector<2x16xf32>
    %142 = arith.addf %139, %141 : vector<2x16xf32>
    %143 = vector.extract_strided_slice %129 {offsets = [0, 16], sizes = [2, 16], strides = [1, 1]} : vector<2x32xf32> to vector<2x16xf32>
    %c392 = arith.constant 392 : index
    %c0_102 = arith.constant 0 : index
    %144 = vector.load %arg2[%c392, %c0_102] : memref<528x32xf32, #tpu.memory_space<vmem>>, vector<16x16xf32>
    %cst_103 = arith.constant dense<0.000000e+00> : vector<2x16xf32>
    %145 = tpu.matmul %143, %144, %cst_103 {dimension_numbers = #tpu.dot_dimension_numbers<[1], [0], [0], [1], [0, 0, 1, 1], [], []>} : vector<2x16xf32>, vector<16x16xf32>, vector<2x16xf32> -> vector<2x16xf32>
    %c408 = arith.constant 408 : index
    %c0_104 = arith.constant 0 : index
    %146 = vector.load %arg2[%c408, %c0_104] : memref<528x32xf32, #tpu.memory_space<vmem>>, vector<1x16xf32>
    %147 = vector.broadcast %146 : vector<1x16xf32> to vector<2x16xf32>
    %148 = arith.addf %145, %147 : vector<2x16xf32>
    %cst_105 = arith.constant 0.000000e+00 : f32
    %149 = vector.broadcast %cst_105 : f32 to vector<2x16xf32>
    %150 = arith.maximumf %148, %149 : vector<2x16xf32>
    %c416 = arith.constant 416 : index
    %c0_106 = arith.constant 0 : index
    %151 = vector.load %arg2[%c416, %c0_106] : memref<528x32xf32, #tpu.memory_space<vmem>>, vector<16x1xf32>
    %cst_107 = arith.constant dense<0.000000e+00> : vector<2x1xf32>
    %152 = tpu.matmul %150, %151, %cst_107 {dimension_numbers = #tpu.dot_dimension_numbers<[1], [0], [0], [1], [0, 0, 1, 1], [], []>} : vector<2x16xf32>, vector<16x1xf32>, vector<2x1xf32> -> vector<2x1xf32>
    %c432 = arith.constant 432 : index
    %c0_108 = arith.constant 0 : index
    %153 = vector.load %arg2[%c432, %c0_108] : memref<528x32xf32, #tpu.memory_space<vmem>>, vector<1x1xf32>
    %154 = vector.broadcast %153 : vector<1x1xf32> to vector<2x1xf32>
    %155 = arith.addf %152, %154 : vector<2x1xf32>
    %c456 = arith.constant 456 : index
    %c0_109 = arith.constant 0 : index
    %156 = vector.load %arg2[%c456, %c0_109] : memref<528x32xf32, #tpu.memory_space<vmem>>, vector<16x16xf32>
    %cst_110 = arith.constant dense<0.000000e+00> : vector<2x16xf32>
    %157 = tpu.matmul %142, %156, %cst_110 {dimension_numbers = #tpu.dot_dimension_numbers<[1], [0], [0], [1], [0, 0, 1, 1], [], []>} : vector<2x16xf32>, vector<16x16xf32>, vector<2x16xf32> -> vector<2x16xf32>
    %c440 = arith.constant 440 : index
    %c0_111 = arith.constant 0 : index
    %158 = vector.load %arg2[%c440, %c0_111] : memref<528x32xf32, #tpu.memory_space<vmem>>, vector<16x16xf32>
    %cst_112 = arith.constant dense<0.000000e+00> : vector<32x16xf32>
    %159 = tpu.matmul %122, %158, %cst_112 {dimension_numbers = #tpu.dot_dimension_numbers<[1], [0], [0], [1], [0, 0, 1, 1], [], []>} : vector<32x16xf32>, vector<16x16xf32>, vector<32x16xf32> -> vector<32x16xf32>
    %160 = vector.shape_cast %157 : vector<2x16xf32> to vector<1x2x16xf32>
    %161 = vector.shape_cast %160 : vector<1x2x16xf32> to vector<1x2x16xf32>
    %162 = vector.broadcast %161 : vector<1x2x16xf32> to vector<16x2x16xf32>
    %163 = vector.shape_cast %162 : vector<16x2x16xf32> to vector<32x16xf32>
    %164 = arith.addf %159, %163 : vector<32x16xf32>
    %c472 = arith.constant 472 : index
    %c0_113 = arith.constant 0 : index
    %165 = vector.load %arg2[%c472, %c0_113] : memref<528x32xf32, #tpu.memory_space<vmem>>, vector<1x16xf32>
    %166 = vector.broadcast %165 : vector<1x16xf32> to vector<32x16xf32>
    %167 = arith.addf %164, %166 : vector<32x16xf32>
    %cst_114 = arith.constant 0.000000e+00 : f32
    %168 = vector.broadcast %cst_114 : f32 to vector<32x16xf32>
    %169 = arith.maximumf %167, %168 : vector<32x16xf32>
    %c480 = arith.constant 480 : index
    %c0_115 = arith.constant 0 : index
    %170 = vector.load %arg2[%c480, %c0_115] : memref<528x32xf32, #tpu.memory_space<vmem>>, vector<16x16xf32>
    %cst_116 = arith.constant dense<0.000000e+00> : vector<32x16xf32>
    %171 = tpu.matmul %169, %170, %cst_116 {dimension_numbers = #tpu.dot_dimension_numbers<[1], [0], [0], [1], [0, 0, 1, 1], [], []>} : vector<32x16xf32>, vector<16x16xf32>, vector<32x16xf32> -> vector<32x16xf32>
    %c496 = arith.constant 496 : index
    %c0_117 = arith.constant 0 : index
    %172 = vector.load %arg2[%c496, %c0_117] : memref<528x32xf32, #tpu.memory_space<vmem>>, vector<1x16xf32>
    %173 = vector.broadcast %172 : vector<1x16xf32> to vector<32x16xf32>
    %174 = arith.addf %171, %173 : vector<32x16xf32>
    %cst_118 = arith.constant 0.000000e+00 : f32
    %175 = vector.broadcast %cst_118 : f32 to vector<32x16xf32>
    %176 = arith.maximumf %174, %175 : vector<32x16xf32>
    %c504 = arith.constant 504 : index
    %c0_119 = arith.constant 0 : index
    %177 = vector.load %arg2[%c504, %c0_119] : memref<528x32xf32, #tpu.memory_space<vmem>>, vector<16x1xf32>
    %cst_120 = arith.constant dense<0.000000e+00> : vector<32x1xf32>
    %178 = tpu.matmul %176, %177, %cst_120 {dimension_numbers = #tpu.dot_dimension_numbers<[1], [0], [0], [1], [0, 0, 1, 1], [], []>} : vector<32x16xf32>, vector<16x1xf32>, vector<32x1xf32> -> vector<32x1xf32>
    %c520 = arith.constant 520 : index
    %c0_121 = arith.constant 0 : index
    %179 = vector.load %arg2[%c520, %c0_121] : memref<528x32xf32, #tpu.memory_space<vmem>>, vector<1x1xf32>
    %180 = vector.broadcast %179 : vector<1x1xf32> to vector<32x1xf32>
    %181 = arith.addf %178, %180 : vector<32x1xf32>
    %182 = vector.shape_cast %155 : vector<2x1xf32> to vector<1x2x1xf32>
    %183 = vector.shape_cast %182 : vector<1x2x1xf32> to vector<1x2x1xf32>
    %184 = vector.broadcast %183 : vector<1x2x1xf32> to vector<16x2x1xf32>
    %185 = vector.shape_cast %184 : vector<16x2x1xf32> to vector<32x1xf32>
    %186 = arith.addf %181, %185 : vector<32x1xf32>
    %c0_122 = arith.constant 0 : index
    %c0_123 = arith.constant 0 : index
    %187 = vector.load %arg3[%c0_122, %c0_123] : memref<32x1xf32, #tpu.memory_space<vmem>>, vector<32x1xf32>
    tpu.vector_store %arg3[%c0_122, %c0_123], %186 {strides = array<i32>} : memref<32x1xf32, #tpu.memory_space<vmem>>, vector<32x1xf32>,
    return
  }
}

</mosaic_0001>

<llo_original>
// kernel: tpu_custom_call.1
$region0: #{tpu_custom_call.1}
  #allocation0 [shape = 'u32[]', space=smem, size = 0x4, offset = 0x4, fixed_abs, tag = 'smem constant byte address 0x4 - core index']
  #allocation1 [shape = 'u32[144,128]{1,0:T(1,128)}', space=vmem, size = 0x12000, scoped, tag = 'internal scratch']
  #allocation2 [shape = 'f32[48,16]{1,0:T(8,128)}', space=vmem, size = 0x6000, scoped, tag = 'scratch operand']
  %s0 = inlined_call_operand.vmem [shape: f32[32,6], index: 0, kind: input, shape index: {}]
  %s1 = inlined_call_operand.vmem [shape: f32[2,5], index: 1, kind: input, shape index: {}]
  %s2 = inlined_call_operand.vmem [shape: f32[528,32], index: 2, kind: input, shape index: {}]
  %s3 = inlined_call_operand.vmem [shape: f32[32,1], index: 3, kind: output, shape index: {}]
  %s4 = sld [smem:[#allocation0]]
  $region22: #{tpu_custom_call.1} parent=0
    _
  %s6 = ssub.s32 1, %s4
  %s7 = scalar_select 0, %s6, %s4
  // Predicated region
  $region2: #{tpu_custom_call.1} parent=0 // pred_check
    _
  $region3: #{tpu_custom_call.1} parent=0 // pred_check_branch
    %9 = sbr.rel (0) target = $region5
  $region4: #{tpu_custom_call.1} parent=0 // pred_region
    _
  $region5: #{tpu_custom_call.1} parent=0 // pred_fallthru
    _
  // Predicated region
  $region6: #{tpu_custom_call.1} parent=0 // pred_check
    _
  $region7: #{tpu_custom_call.1} parent=0 // pred_check_branch
    %11 = sbr.rel (0) target = $region9
  $region8: #{tpu_custom_call.1} parent=0 // pred_region
    _
  $region9: #{tpu_custom_call.1} parent=0 // pred_fallthru
    _
  // Predicated region
  $region10: #{tpu_custom_call.1} parent=0 // pred_check
    _
  $region11: #{tpu_custom_call.1} parent=0 // pred_check_branch
    %13 = sbr.rel (0) target = $region13
  $region12: #{tpu_custom_call.1} parent=0 // pred_region
    _
  $region13: #{tpu_custom_call.1} parent=0 // pred_fallthru
    _
  %vm14 = vcmask 130048
  %15 = vst.msk [vmem:[#allocation2] sm:$0xff] %vm14, 0.0
  %16 = vst.msk [vmem:[#allocation2 + $0x8] sm:$0xff] %vm14, 0.0
  %v17 = vld [vmem:[%s1] sm:$0x3]
  %v18 = vld [vmem:[%s0] sm:$0xff]
  %v19 = vld [vmem:[%s0 + $0x8] sm:$0xff]
  %v20 = vld [vmem:[%s0 + $0x10] sm:$0xff]
  %v21 = vld [vmem:[%s0 + $0x18] sm:$0xff]
  %vm22 = vcmask 48128
  %23 = vst.msk [vmem:[#allocation2 + $0x10] sm:$0xff] %vm22, %v18
  %24 = vst.msk [vmem:[#allocation2 + $0x18] sm:$0xff] %vm22, %v19
  %25 = vst.msk [vmem:[#allocation2 + $0x20] sm:$0xff] %vm22, %v20
  %26 = vst.msk [vmem:[#allocation2 + $0x28] sm:$0xff] %vm22, %v21
  %v28 = vcombine.low %v17, %v17
  %v30 = vunpack.c.l.s4 1983009808
  %v31 = vunpack.c.0.s8 %v30
  %v32 = vlaneseq
  %v33 = vshrl.u32 %v32, 7
  %v34 = vsub.s32 %v31, %v33
  %v35 = vrot.slane %v28, %v34
  %v36 = vcombine.low %v35, %v35
  %37 = vrot.lane.b32.xlu0 %v36, 6
  %v38 = vpop.permute.xlu0 %37
  %vm40 = vcmask 89136
  %41 = vst.msk [vmem:[#allocation2 + $0x10] sm:$0xff] %vm40, %v38
  %42 = vst.msk [vmem:[#allocation2 + $0x18] sm:$0xff] %vm40, %v38
  %43 = vst.msk [vmem:[#allocation2 + $0x20] sm:$0xff] %vm40, %v38
  %44 = vst.msk [vmem:[#allocation2 + $0x28] sm:$0xff] %vm40, %v38
  %v45 = vld [vmem:[#allocation2 + $0xe] sm:$0xff]
  %v46 = vld [vmem:[#allocation2 + $0x16] sm:$0xff]
  %v47 = vld [vmem:[#allocation2 + $0x1e] sm:$0xff]
  %v48 = vld [vmem:[#allocation2 + $0x26] sm:$0xff]
  %v49 = vld [vmem:[#allocation2 + $0x10] sm:$0xff]
  %v50 = vld [vmem:[#allocation2 + $0x18] sm:$0xff]
  %v51 = vld [vmem:[#allocation2 + $0x20] sm:$0xff]
  %v52 = vld [vmem:[#allocation2 + $0x28] sm:$0xff]
  %v53 = vld [vmem:[%s2 + $0x10] sm:$0xff]
  %v54 = vld [vmem:[%s2 + $0x18] sm:$0x7]
  %vm55 = vcmask 89088
  %v57 = vsel %vm55, %v49, 0
  %v60 = vsel %vm55, %v50, 0
  %v63 = vsel %vm55, %v51, 0
  %v66 = vsel %vm55, %v52, 0
  %vm68 = vcmask 1042432
  %v70 = vsel %vm68, %v54, 0
  %72 = vmatprep.subr.mxu0 0.0
  %73 = vmatpush1.msra.mxu0 %v53
  %74 = vmatprep.subr.mxu0 0.0
  %75 = vmatpush1.msra.mxu0 %v70
  %76 = vmatprep.subr.mxu0 0.0
  %77 = vmatpush1.msra.mxu0 0.0
  %78 = vmatprep.subr.mxu0 0.0
  %79 = vmatpush1.msra.mxu0 0.0
  %80 = vmatprep.subr.mxu0 0.0
  %81 = vmatpush1.msra.mxu0 0.0
  %82 = vmatprep.subr.mxu0 0.0
  %83 = vmatpush1.msra.mxu0 0.0
  %84 = vmatprep.subr.mxu0 0.0
  %85 = vmatpush1.msra.mxu0 0.0
  %86 = vmatprep.subr.mxu0 0.0
  %87 = vmatpush1.msra.mxu0 0.0
  %88 = vmatprep.subr.mxu0 0.0
  %89 = vmatpush1.msra.mxu0 0.0
  %90 = vmatprep.subr.mxu0 0.0
  %91 = vmatpush1.msra.mxu0 0.0
  %92 = vmatprep.subr.mxu0 0.0
  %93 = vmatpush1.msra.mxu0 0.0
  %94 = vmatprep.subr.mxu0 0.0
  %95 = vmatpush1.msra.mxu0 0.0
  %96 = vmatprep.subr.mxu0 0.0
  %97 = vmatpush1.msra.mxu0 0.0
  %98 = vmatprep.subr.mxu0 0.0
  %99 = vmatpush1.msra.mxu0 0.0
  %100 = vmatprep.subr.mxu0 0.0
  %101 = vmatpush1.msra.mxu0 0.0
  %102 = vmatprep.subr.mxu0 0.0
  %103 = vmatpush1.msra.mxu0 0.0
  %104 = vmatprep.subr.mxu0 0.0
  %105 = vmatpush1.msra.mxu0 0.0
  %106 = vmatprep.subr.mxu0 0.0
  %107 = vmatpush1.msra.mxu0 0.0
  %108 = vmatprep.subr.mxu0 0.0
  %109 = vmatpush1.msra.mxu0 0.0
  %110 = vmatprep.subr.mxu0 0.0
  %111 = vmatpush1.msra.mxu0 0.0
  %112 = vmatprep.subr.mxu0 0.0
  %113 = vmatpush1.msra.mxu0 0.0
  %114 = vmatprep.subr.mxu0 0.0
  %115 = vmatpush1.msra.mxu0 0.0
  %116 = vmatprep.subr.mxu0 0.0
  %117 = vmatpush1.msra.mxu0 0.0
  %118 = vmatprep.subr.mxu0 0.0
  %119 = vmatpush1.msra.mxu0 0.0
  %120 = vmatprep.subr.mxu0 0.0
  %121 = vmatpush1.msra.mxu0 0.0
  %122 = vmatprep.subr.mxu0 0.0
  %123 = vmatpush1.msra.mxu0 0.0
  %124 = vmatprep.subr.mxu0 0.0
  %125 = vmatpush1.msra.mxu0 0.0
  %126 = vmatprep.subr.mxu0 0.0
  %127 = vmatpush1.msra.mxu0 0.0
  %128 = vmatprep.subr.mxu0 0.0
  %129 = vmatpush1.msra.mxu0 0.0
  %130 = vmatprep.subr.mxu0 0.0
  %131 = vmatpush1.msra.mxu0 0.0
  %132 = vmatprep.subr.mxu0 0.0
  %133 = vmatpush1.msra.mxu0 0.0
  %134 = vmatprep.subr.mxu0 0.0
  %135 = vmatpush1.msra.mxu0 0.0
  %136 = vmatprep.mubr.f32.mxu0 0.0
  %137 = vmatmul.mubr.f32.gmra.mrb[0].mxu0 %v57
  %v138 = vpop.f32.mrb[0].mxu0
  %v139 = vadd.f32 0.0, %v138
  %v140 = vpop.f32.mrb[0].mxu0
  %141 = vmatprep.mubr.f32.mxu0 0.0
  %142 = vmatmul.mubr.f32.gmra.mrb[0].mxu0 %v60
  %v143 = vpop.f32.mrb[0].mxu0
  %v144 = vadd.f32 0.0, %v143
  %v145 = vpop.f32.mrb[0].mxu0
  %146 = vmatprep.mubr.f32.mxu0 0.0
  %147 = vmatmul.mubr.f32.gmra.mrb[0].mxu0 %v63
  %v148 = vpop.f32.mrb[0].mxu0
  %v149 = vadd.f32 0.0, %v148
  %v150 = vpop.f32.mrb[0].mxu0
  %151 = vmatprep.mubr.f32.mxu0 0.0
  %152 = vmatmul.mubr.f32.gmra.mrb[0].mxu0 %v66
  %v153 = vpop.f32.mrb[0].mxu0
  %v154 = vadd.f32 0.0, %v153
  %v155 = vpop.f32.mrb[0].mxu0
  %156 = vdwg.mxu0
  %v157 = vld [vmem:[%s2 + $0x20] sm:$0x1]
  %v158 = vlaneseq
  %v159 = vshrl.u32 %v158, 7
  %v160 = vsub.s32 0, %v159
  %v161 = vrot.slane %v157, %v160
  %163 = vrot.lane.b32.xlu0 %v161, 16
  %v164 = vpop.permute.xlu0 %163
  %v166 = vadd.f32 %v139, %v164
  %v167 = vadd.f32 %v144, %v164
  %v168 = vadd.f32 %v149, %v164
  %v169 = vadd.f32 %v154, %v164
  %v170 = vld [vmem:[%s2] sm:$0xff]
  %v171 = vld [vmem:[%s2 + $0x8] sm:$0x7]
  %v173 = vsel %vm55, %v45, 0
  %v176 = vsel %vm55, %v46, 0
  %v179 = vsel %vm55, %v47, 0
  %v182 = vsel %vm55, %v48, 0
  %v185 = vsel %vm68, %v171, 0
  %187 = vmatprep.subr.mxu0 0.0
  %188 = vmatpush1.msra.mxu0 %v170
  %189 = vmatprep.subr.mxu0 0.0
  %190 = vmatpush1.msra.mxu0 %v185
  %191 = vmatprep.subr.mxu0 0.0
  %192 = vmatpush1.msra.mxu0 0.0
  %193 = vmatprep.subr.mxu0 0.0
  %194 = vmatpush1.msra.mxu0 0.0
  %195 = vmatprep.subr.mxu0 0.0
  %196 = vmatpush1.msra.mxu0 0.0
  %197 = vmatprep.subr.mxu0 0.0
  %198 = vmatpush1.msra.mxu0 0.0
  %199 = vmatprep.subr.mxu0 0.0
  %200 = vmatpush1.msra.mxu0 0.0
  %201 = vmatprep.subr.mxu0 0.0
  %202 = vmatpush1.msra.mxu0 0.0
  %203 = vmatprep.subr.mxu0 0.0
  %204 = vmatpush1.msra.mxu0 0.0
  %205 = vmatprep.subr.mxu0 0.0
  %206 = vmatpush1.msra.mxu0 0.0
  %207 = vmatprep.subr.mxu0 0.0
  %208 = vmatpush1.msra.mxu0 0.0
  %209 = vmatprep.subr.mxu0 0.0
  %210 = vmatpush1.msra.mxu0 0.0
  %211 = vmatprep.subr.mxu0 0.0
  %212 = vmatpush1.msra.mxu0 0.0
  %213 = vmatprep.subr.mxu0 0.0
  %214 = vmatpush1.msra.mxu0 0.0
  %215 = vmatprep.subr.mxu0 0.0
  %216 = vmatpush1.msra.mxu0 0.0
  %217 = vmatprep.subr.mxu0 0.0
  %218 = vmatpush1.msra.mxu0 0.0
  %219 = vmatprep.subr.mxu0 0.0
  %220 = vmatpush1.msra.mxu0 0.0
  %221 = vmatprep.subr.mxu0 0.0
  %222 = vmatpush1.msra.mxu0 0.0
  %223 = vmatprep.subr.mxu0 0.0
  %224 = vmatpush1.msra.mxu0 0.0
  %225 = vmatprep.subr.mxu0 0.0
  %226 = vmatpush1.msra.mxu0 0.0
  %227 = vmatprep.subr.mxu0 0.0
  %228 = vmatpush1.msra.mxu0 0.0
  %229 = vmatprep.subr.mxu0 0.0
  %230 = vmatpush1.msra.mxu0 0.0
  %231 = vmatprep.subr.mxu0 0.0
  %232 = vmatpush1.msra.mxu0 0.0
  %233 = vmatprep.subr.mxu0 0.0
  %234 = vmatpush1.msra.mxu0 0.0
  %235 = vmatprep.subr.mxu0 0.0
  %236 = vmatpush1.msra.mxu0 0.0
  %237 = vmatprep.subr.mxu0 0.0
  %238 = vmatpush1.msra.mxu0 0.0
  %239 = vmatprep.subr.mxu0 0.0
  %240 = vmatpush1.msra.mxu0 0.0
  %241 = vmatprep.subr.mxu0 0.0
  %242 = vmatpush1.msra.mxu0 0.0
  %243 = vmatprep.subr.mxu0 0.0
  %244 = vmatpush1.msra.mxu0 0.0
  %245 = vmatprep.subr.mxu0 0.0
  %246 = vmatpush1.msra.mxu0 0.0
  %247 = vmatprep.subr.mxu0 0.0
  %248 = vmatpush1.msra.mxu0 0.0
  %249 = vmatprep.subr.mxu0 0.0
  %250 = vmatpush1.msra.mxu0 0.0
  %251 = vmatprep.mubr.f32.mxu0 0.0
  %252 = vmatmul.mubr.f32.gmra.mrb[0].mxu0 %v173
  %v253 = vpop.f32.mrb[0].mxu0
  %v254 = vadd.f32 %v139, %v253
  %v255 = vpop.f32.mrb[0].mxu0
  %256 = vmatprep.mubr.f32.mxu0 0.0
  %257 = vmatmul.mubr.f32.gmra.mrb[0].mxu0 %v176
  %v258 = vpop.f32.mrb[0].mxu0
  %v259 = vadd.f32 %v144, %v258
  %v260 = vpop.f32.mrb[0].mxu0
  %261 = vmatprep.mubr.f32.mxu0 0.0
  %262 = vmatmul.mubr.f32.gmra.mrb[0].mxu0 %v179
  %v263 = vpop.f32.mrb[0].mxu0
  %v264 = vadd.f32 %v149, %v263
  %v265 = vpop.f32.mrb[0].mxu0
  %266 = vmatprep.mubr.f32.mxu0 0.0
  %267 = vmatmul.mubr.f32.gmra.mrb[0].mxu0 %v182
  %v268 = vpop.f32.mrb[0].mxu0
  %v269 = vadd.f32 %v154, %v268
  %v270 = vpop.f32.mrb[0].mxu0
  %271 = vdwg.mxu0
  %v272 = vld [vmem:[%s2 + $0x28] sm:$0x1]
  %v273 = vlaneseq
  %v274 = vshrl.u32 %v273, 7
  %v275 = vsub.s32 0, %v274
  %v276 = vrot.slane %v272, %v275
  %v277 = vadd.f32 %v254, %v276
  %v278 = vadd.f32 %v259, %v276
  %v279 = vadd.f32 %v264, %v276
  %v280 = vadd.f32 %v269, %v276
  %v281 = vmax.f32 %v277, 0.0
  %v282 = vmax.f32 %v278, 0.0
  %v283 = vmax.f32 %v279, 0.0
  %v284 = vmax.f32 %v280, 0.0
  %285 = vst.msk [vmem:[#allocation2 + $0x10] sm:$0xff] %vm14, %v281
  %286 = vst.msk [vmem:[#allocation2 + $0x18] sm:$0xff] %vm14, %v282
  %287 = vst.msk [vmem:[#allocation2 + $0x20] sm:$0xff] %vm14, %v283
  %288 = vst.msk [vmem:[#allocation2 + $0x28] sm:$0xff] %vm14, %v284
  %v289 = vld [vmem:[#allocation2 + $0xe] sm:$0xff]
  %v290 = vld [vmem:[#allocation2 + $0x16] sm:$0xff]
  %v291 = vld [vmem:[#allocation2 + $0x1e] sm:$0xff]
  %v292 = vld [vmem:[#allocation2 + $0x26] sm:$0xff]
  %v293 = vld [vmem:[%s2 + $0x30] sm:$0xff]
  %v294 = vld [vmem:[%s2 + $0x38] sm:$0xff]
  %v295 = vld [vmem:[%s2 + $0x40] sm:$0xff]
  %v296 = vld [vmem:[%s2 + $0x48] sm:$0xff]
  %v298 = vsel %vm14, %v281, 0
  %v301 = vsel %vm14, %v282, 0
  %v304 = vsel %vm14, %v283, 0
  %v307 = vsel %vm14, %v284, 0
  %309 = vmatprep.subr.mxu0 0.0
  %310 = vmatpush1.msra.mxu0 %v295
  %311 = vmatprep.subr.mxu0 0.0
  %312 = vmatpush1.msra.mxu0 %v296
  %313 = vmatprep.subr.mxu0 0.0
  %314 = vmatpush1.msra.mxu0 0.0
  %315 = vmatprep.subr.mxu0 0.0
  %316 = vmatpush1.msra.mxu0 0.0
  %317 = vmatprep.subr.mxu0 0.0
  %318 = vmatpush1.msra.mxu0 0.0
  %319 = vmatprep.subr.mxu0 0.0
  %320 = vmatpush1.msra.mxu0 0.0
  %321 = vmatprep.subr.mxu0 0.0
  %322 = vmatpush1.msra.mxu0 0.0
  %323 = vmatprep.subr.mxu0 0.0
  %324 = vmatpush1.msra.mxu0 0.0
  %325 = vmatprep.subr.mxu0 0.0
  %326 = vmatpush1.msra.mxu0 0.0
  %327 = vmatprep.subr.mxu0 0.0
  %328 = vmatpush1.msra.mxu0 0.0
  %329 = vmatprep.subr.mxu0 0.0
  %330 = vmatpush1.msra.mxu0 0.0
  %331 = vmatprep.subr.mxu0 0.0
  %332 = vmatpush1.msra.mxu0 0.0
  %333 = vmatprep.subr.mxu0 0.0
  %334 = vmatpush1.msra.mxu0 0.0
  %335 = vmatprep.subr.mxu0 0.0
  %336 = vmatpush1.msra.mxu0 0.0
  %337 = vmatprep.subr.mxu0 0.0
  %338 = vmatpush1.msra.mxu0 0.0
  %339 = vmatprep.subr.mxu0 0.0
  %340 = vmatpush1.msra.mxu0 0.0
  %341 = vmatprep.subr.mxu0 0.0
  %342 = vmatpush1.msra.mxu0 0.0
  %343 = vmatprep.subr.mxu0 0.0
  %344 = vmatpush1.msra.mxu0 0.0
  %345 = vmatprep.subr.mxu0 0.0
  %346 = vmatpush1.msra.mxu0 0.0
  %347 = vmatprep.subr.mxu0 0.0
  %348 = vmatpush1.msra.mxu0 0.0
  %349 = vmatprep.subr.mxu0 0.0
  %350 = vmatpush1.msra.mxu0 0.0
  %351 = vmatprep.subr.mxu0 0.0
  %352 = vmatpush1.msra.mxu0 0.0
  %353 = vmatprep.subr.mxu0 0.0
  %354 = vmatpush1.msra.mxu0 0.0
  %355 = vmatprep.subr.mxu0 0.0
  %356 = vmatpush1.msra.mxu0 0.0
  %357 = vmatprep.subr.mxu0 0.0
  %358 = vmatpush1.msra.mxu0 0.0
  %359 = vmatprep.subr.mxu0 0.0
  %360 = vmatpush1.msra.mxu0 0.0
  %361 = vmatprep.subr.mxu0 0.0
  %362 = vmatpush1.msra.mxu0 0.0
  %363 = vmatprep.subr.mxu0 0.0
  %364 = vmatpush1.msra.mxu0 0.0
  %365 = vmatprep.subr.mxu0 0.0
  %366 = vmatpush1.msra.mxu0 0.0
  %367 = vmatprep.subr.mxu0 0.0
  %368 = vmatpush1.msra.mxu0 0.0
  %369 = vmatprep.subr.mxu0 0.0
  %370 = vmatpush1.msra.mxu0 0.0
  %371 = vmatprep.subr.mxu0 0.0
  %372 = vmatpush1.msra.mxu0 0.0
  %373 = vmatprep.mubr.f32.mxu0 0.0
  %374 = vmatmul.mubr.f32.gmra.mrb[0].mxu0 %v298
  %v375 = vpop.f32.mrb[0].mxu0
  %v376 = vadd.f32 0.0, %v375
  %v377 = vpop.f32.mrb[0].mxu0
  %378 = vmatprep.mubr.f32.mxu0 0.0
  %379 = vmatmul.mubr.f32.gmra.mrb[0].mxu0 %v301
  %v380 = vpop.f32.mrb[0].mxu0
  %v381 = vadd.f32 0.0, %v380
  %v382 = vpop.f32.mrb[0].mxu0
  %383 = vmatprep.mubr.f32.mxu0 0.0
  %384 = vmatmul.mubr.f32.gmra.mrb[0].mxu0 %v304
  %v385 = vpop.f32.mrb[0].mxu0
  %v386 = vadd.f32 0.0, %v385
  %v387 = vpop.f32.mrb[0].mxu0
  %388 = vmatprep.mubr.f32.mxu0 0.0
  %389 = vmatmul.mubr.f32.gmra.mrb[0].mxu0 %v307
  %v390 = vpop.f32.mrb[0].mxu0
  %v391 = vadd.f32 0.0, %v390
  %v392 = vpop.f32.mrb[0].mxu0
  %393 = vdwg.mxu0
  %v395 = vsel %vm14, %v289, 0
  %v398 = vsel %vm14, %v290, 0
  %v401 = vsel %vm14, %v291, 0
  %v404 = vsel %vm14, %v292, 0
  %406 = vmatprep.subr.mxu0 0.0
  %407 = vmatpush1.msra.mxu0 %v293
  %408 = vmatprep.subr.mxu0 0.0
  %409 = vmatpush1.msra.mxu0 %v294
  %410 = vmatprep.subr.mxu0 0.0
  %411 = vmatpush1.msra.mxu0 0.0
  %412 = vmatprep.subr.mxu0 0.0
  %413 = vmatpush1.msra.mxu0 0.0
  %414 = vmatprep.subr.mxu0 0.0
  %415 = vmatpush1.msra.mxu0 0.0
  %416 = vmatprep.subr.mxu0 0.0
  %417 = vmatpush1.msra.mxu0 0.0
  %418 = vmatprep.subr.mxu0 0.0
  %419 = vmatpush1.msra.mxu0 0.0
  %420 = vmatprep.subr.mxu0 0.0
  %421 = vmatpush1.msra.mxu0 0.0
  %422 = vmatprep.subr.mxu0 0.0
  %423 = vmatpush1.msra.mxu0 0.0
  %424 = vmatprep.subr.mxu0 0.0
  %425 = vmatpush1.msra.mxu0 0.0
  %426 = vmatprep.subr.mxu0 0.0
  %427 = vmatpush1.msra.mxu0 0.0
  %428 = vmatprep.subr.mxu0 0.0
  %429 = vmatpush1.msra.mxu0 0.0
  %430 = vmatprep.subr.mxu0 0.0
  %431 = vmatpush1.msra.mxu0 0.0
  %432 = vmatprep.subr.mxu0 0.0
  %433 = vmatpush1.msra.mxu0 0.0
  %434 = vmatprep.subr.mxu0 0.0
  %435 = vmatpush1.msra.mxu0 0.0
  %436 = vmatprep.subr.mxu0 0.0
  %437 = vmatpush1.msra.mxu0 0.0
  %438 = vmatprep.subr.mxu0 0.0
  %439 = vmatpush1.msra.mxu0 0.0
  %440 = vmatprep.subr.mxu0 0.0
  %441 = vmatpush1.msra.mxu0 0.0
  %442 = vmatprep.subr.mxu0 0.0
  %443 = vmatpush1.msra.mxu0 0.0
  %444 = vmatprep.subr.mxu0 0.0
  %445 = vmatpush1.msra.mxu0 0.0
  %446 = vmatprep.subr.mxu0 0.0
  %447 = vmatpush1.msra.mxu0 0.0
  %448 = vmatprep.subr.mxu0 0.0
  %449 = vmatpush1.msra.mxu0 0.0
  %450 = vmatprep.subr.mxu0 0.0
  %451 = vmatpush1.msra.mxu0 0.0
  %452 = vmatprep.subr.mxu0 0.0
  %453 = vmatpush1.msra.mxu0 0.0
  %454 = vmatprep.subr.mxu0 0.0
  %455 = vmatpush1.msra.mxu0 0.0
  %456 = vmatprep.subr.mxu0 0.0
  %457 = vmatpush1.msra.mxu0 0.0
  %458 = vmatprep.subr.mxu0 0.0
  %459 = vmatpush1.msra.mxu0 0.0
  %460 = vmatprep.subr.mxu0 0.0
  %461 = vmatpush1.msra.mxu0 0.0
  %462 = vmatprep.subr.mxu0 0.0
  %463 = vmatpush1.msra.mxu0 0.0
  %464 = vmatprep.subr.mxu0 0.0
  %465 = vmatpush1.msra.mxu0 0.0
  %466 = vmatprep.subr.mxu0 0.0
  %467 = vmatpush1.msra.mxu0 0.0
  %468 = vmatprep.subr.mxu0 0.0
  %469 = vmatpush1.msra.mxu0 0.0
  %470 = vmatprep.mubr.f32.mxu0 0.0
  %471 = vmatmul.mubr.f32.gmra.mrb[0].mxu0 %v395
  %v472 = vpop.f32.mrb[0].mxu0
  %v473 = vadd.f32 %v376, %v472
  %v474 = vpop.f32.mrb[0].mxu0
  %475 = vmatprep.mubr.f32.mxu0 0.0
  %476 = vmatmul.mubr.f32.gmra.mrb[0].mxu0 %v398
  %v477 = vpop.f32.mrb[0].mxu0
  %v478 = vadd.f32 %v381, %v477
  %v479 = vpop.f32.mrb[0].mxu0
  %480 = vmatprep.mubr.f32.mxu0 0.0
  %481 = vmatmul.mubr.f32.gmra.mrb[0].mxu0 %v401
  %v482 = vpop.f32.mrb[0].mxu0
  %v483 = vadd.f32 %v386, %v482
  %v484 = vpop.f32.mrb[0].mxu0
  %485 = vmatprep.mubr.f32.mxu0 0.0
  %486 = vmatmul.mubr.f32.gmra.mrb[0].mxu0 %v404
  %v487 = vpop.f32.mrb[0].mxu0
  %v488 = vadd.f32 %v391, %v487
  %v489 = vpop.f32.mrb[0].mxu0
  %490 = vdwg.mxu0
  %v491 = vld [vmem:[%s2 + $0x50] sm:$0x1]
  %v492 = vlaneseq
  %v493 = vshrl.u32 %v492, 7
  %v494 = vsub.s32 0, %v493
  %v495 = vrot.slane %v491, %v494
  %v496 = vadd.f32 %v473, %v495
  %v497 = vadd.f32 %v478, %v495
  %v498 = vadd.f32 %v483, %v495
  %v499 = vadd.f32 %v488, %v495
  %v500 = vmax.f32 %v496, 0.0
  %v501 = vmax.f32 %v497, 0.0
  %v502 = vmax.f32 %v498, 0.0
  %v503 = vmax.f32 %v499, 0.0
  %508 = vrot.lane.b32.xlu0 %v166, 112
  %v509 = vpop.permute.xlu0 %508
  %510 = vrot.lane.b32.xlu0 %v167, 112
  %v511 = vpop.permute.xlu0 %510
  %512 = vrot.lane.b32.xlu0 %v168, 112
  %v513 = vpop.permute.xlu0 %512
  %514 = vrot.lane.b32.xlu0 %v169, 112
  %v515 = vpop.permute.xlu0 %514
  %v520 = vadd.f32 %v500, %v509
  %v521 = vadd.f32 %v501, %v511
  %v522 = vadd.f32 %v502, %v513
  %v523 = vadd.f32 %v503, %v515
  %v524 = vmax.f32 %v520, 0.0
  %v525 = vmax.f32 %v521, 0.0
  %v526 = vmax.f32 %v522, 0.0
  %v527 = vmax.f32 %v523, 0.0
  %528 = vst.msk [vmem:[#allocation2 + $0x10] sm:$0xff] %vm14, %v524
  %529 = vst.msk [vmem:[#allocation2 + $0x18] sm:$0xff] %vm14, %v525
  %530 = vst.msk [vmem:[#allocation2 + $0x20] sm:$0xff] %vm14, %v526
  %531 = vst.msk [vmem:[#allocation2 + $0x28] sm:$0xff] %vm14, %v527
  %v532 = vld [vmem:[#allocation2 + $0xc] sm:$0xff]
  %v533 = vld [vmem:[#allocation2 + $0x14] sm:$0xff]
  %v534 = vld [vmem:[#allocation2 + $0x1c] sm:$0xff]
  %v535 = vld [vmem:[#allocation2 + $0x24] sm:$0xff]
  %v536 = vld [vmem:[%s2 + $0x68] sm:$0xff]
  %v537 = vld [vmem:[%s2 + $0x70] sm:$0xff]
  %v539 = vsel %vm14, %v524, 0
  %v542 = vsel %vm14, %v525, 0
  %v545 = vsel %vm14, %v526, 0
  %v548 = vsel %vm14, %v527, 0
  %550 = vmatprep.subr.mxu0 0.0
  %551 = vmatpush1.msra.mxu0 %v536
  %552 = vmatprep.subr.mxu0 0.0
  %553 = vmatpush1.msra.mxu0 %v537
  %554 = vmatprep.subr.mxu0 0.0
  %555 = vmatpush1.msra.mxu0 0.0
  %556 = vmatprep.subr.mxu0 0.0
  %557 = vmatpush1.msra.mxu0 0.0
  %558 = vmatprep.subr.mxu0 0.0
  %559 = vmatpush1.msra.mxu0 0.0
  %560 = vmatprep.subr.mxu0 0.0
  %561 = vmatpush1.msra.mxu0 0.0
  %562 = vmatprep.subr.mxu0 0.0
  %563 = vmatpush1.msra.mxu0 0.0
  %564 = vmatprep.subr.mxu0 0.0
  %565 = vmatpush1.msra.mxu0 0.0
  %566 = vmatprep.subr.mxu0 0.0
  %567 = vmatpush1.msra.mxu0 0.0
  %568 = vmatprep.subr.mxu0 0.0
  %569 = vmatpush1.msra.mxu0 0.0
  %570 = vmatprep.subr.mxu0 0.0
  %571 = vmatpush1.msra.mxu0 0.0
  %572 = vmatprep.subr.mxu0 0.0
  %573 = vmatpush1.msra.mxu0 0.0
  %574 = vmatprep.subr.mxu0 0.0
  %575 = vmatpush1.msra.mxu0 0.0
  %576 = vmatprep.subr.mxu0 0.0
  %577 = vmatpush1.msra.mxu0 0.0
  %578 = vmatprep.subr.mxu0 0.0
  %579 = vmatpush1.msra.mxu0 0.0
  %580 = vmatprep.subr.mxu0 0.0
  %581 = vmatpush1.msra.mxu0 0.0
  %582 = vmatprep.subr.mxu0 0.0
  %583 = vmatpush1.msra.mxu0 0.0
  %584 = vmatprep.subr.mxu0 0.0
  %585 = vmatpush1.msra.mxu0 0.0
  %586 = vmatprep.subr.mxu0 0.0
  %587 = vmatpush1.msra.mxu0 0.0
  %588 = vmatprep.subr.mxu0 0.0
  %589 = vmatpush1.msra.mxu0 0.0
  %590 = vmatprep.subr.mxu0 0.0
  %591 = vmatpush1.msra.mxu0 0.0
  %592 = vmatprep.subr.mxu0 0.0
  %593 = vmatpush1.msra.mxu0 0.0
  %594 = vmatprep.subr.mxu0 0.0
  %595 = vmatpush1.msra.mxu0 0.0
  %596 = vmatprep.subr.mxu0 0.0
  %597 = vmatpush1.msra.mxu0 0.0
  %598 = vmatprep.subr.mxu0 0.0
  %599 = vmatpush1.msra.mxu0 0.0
  %600 = vmatprep.subr.mxu0 0.0
  %601 = vmatpush1.msra.mxu0 0.0
  %602 = vmatprep.subr.mxu0 0.0
  %603 = vmatpush1.msra.mxu0 0.0
  %604 = vmatprep.subr.mxu0 0.0
  %605 = vmatpush1.msra.mxu0 0.0
  %606 = vmatprep.subr.mxu0 0.0
  %607 = vmatpush1.msra.mxu0 0.0
  %608 = vmatprep.subr.mxu0 0.0
  %609 = vmatpush1.msra.mxu0 0.0
  %610 = vmatprep.subr.mxu0 0.0
  %611 = vmatpush1.msra.mxu0 0.0
  %612 = vmatprep.subr.mxu0 0.0
  %613 = vmatpush1.msra.mxu0 0.0
  %614 = vmatprep.mubr.f32.mxu0 0.0
  %615 = vmatmul.mubr.f32.gmra.mrb[0].mxu0 %v539
  %v616 = vpop.f32.mrb[0].mxu0
  %v617 = vadd.f32 0.0, %v616
  %v618 = vpop.f32.mrb[0].mxu0
  %619 = vmatprep.mubr.f32.mxu0 0.0
  %620 = vmatmul.mubr.f32.gmra.mrb[0].mxu0 %v542
  %v621 = vpop.f32.mrb[0].mxu0
  %v622 = vadd.f32 0.0, %v621
  %v623 = vpop.f32.mrb[0].mxu0
  %624 = vmatprep.mubr.f32.mxu0 0.0
  %625 = vmatmul.mubr.f32.gmra.mrb[0].mxu0 %v545
  %v626 = vpop.f32.mrb[0].mxu0
  %v627 = vadd.f32 0.0, %v626
  %v628 = vpop.f32.mrb[0].mxu0
  %629 = vmatprep.mubr.f32.mxu0 0.0
  %630 = vmatmul.mubr.f32.gmra.mrb[0].mxu0 %v548
  %v631 = vpop.f32.mrb[0].mxu0
  %v632 = vadd.f32 0.0, %v631
  %v633 = vpop.f32.mrb[0].mxu0
  %634 = vdwg.mxu0
  %v635 = vld [vmem:[%s2 + $0x58] sm:$0xff]
  %v636 = vld [vmem:[%s2 + $0x60] sm:$0xff]
  %v638 = vsel %vm14, %v532, 0
  %v641 = vsel %vm14, %v533, 0
  %v644 = vsel %vm14, %v534, 0
  %v647 = vsel %vm14, %v535, 0
  %649 = vmatprep.subr.mxu0 0.0
  %650 = vmatpush1.msra.mxu0 %v635
  %651 = vmatprep.subr.mxu0 0.0
  %652 = vmatpush1.msra.mxu0 %v636
  %653 = vmatprep.subr.mxu0 0.0
  %654 = vmatpush1.msra.mxu0 0.0
  %655 = vmatprep.subr.mxu0 0.0
  %656 = vmatpush1.msra.mxu0 0.0
  %657 = vmatprep.subr.mxu0 0.0
  %658 = vmatpush1.msra.mxu0 0.0
  %659 = vmatprep.subr.mxu0 0.0
  %660 = vmatpush1.msra.mxu0 0.0
  %661 = vmatprep.subr.mxu0 0.0
  %662 = vmatpush1.msra.mxu0 0.0
  %663 = vmatprep.subr.mxu0 0.0
  %664 = vmatpush1.msra.mxu0 0.0
  %665 = vmatprep.subr.mxu0 0.0
  %666 = vmatpush1.msra.mxu0 0.0
  %667 = vmatprep.subr.mxu0 0.0
  %668 = vmatpush1.msra.mxu0 0.0
  %669 = vmatprep.subr.mxu0 0.0
  %670 = vmatpush1.msra.mxu0 0.0
  %671 = vmatprep.subr.mxu0 0.0
  %672 = vmatpush1.msra.mxu0 0.0
  %673 = vmatprep.subr.mxu0 0.0
  %674 = vmatpush1.msra.mxu0 0.0
  %675 = vmatprep.subr.mxu0 0.0
  %676 = vmatpush1.msra.mxu0 0.0
  %677 = vmatprep.subr.mxu0 0.0
  %678 = vmatpush1.msra.mxu0 0.0
  %679 = vmatprep.subr.mxu0 0.0
  %680 = vmatpush1.msra.mxu0 0.0
  %681 = vmatprep.subr.mxu0 0.0
  %682 = vmatpush1.msra.mxu0 0.0
  %683 = vmatprep.subr.mxu0 0.0
  %684 = vmatpush1.msra.mxu0 0.0
  %685 = vmatprep.subr.mxu0 0.0
  %686 = vmatpush1.msra.mxu0 0.0
  %687 = vmatprep.subr.mxu0 0.0
  %688 = vmatpush1.msra.mxu0 0.0
  %689 = vmatprep.subr.mxu0 0.0
  %690 = vmatpush1.msra.mxu0 0.0
  %691 = vmatprep.subr.mxu0 0.0
  %692 = vmatpush1.msra.mxu0 0.0
  %693 = vmatprep.subr.mxu0 0.0
  %694 = vmatpush1.msra.mxu0 0.0
  %695 = vmatprep.subr.mxu0 0.0
  %696 = vmatpush1.msra.mxu0 0.0
  %697 = vmatprep.subr.mxu0 0.0
  %698 = vmatpush1.msra.mxu0 0.0
  %699 = vmatprep.subr.mxu0 0.0
  %700 = vmatpush1.msra.mxu0 0.0
  %701 = vmatprep.subr.mxu0 0.0
  %702 = vmatpush1.msra.mxu0 0.0
  %703 = vmatprep.subr.mxu0 0.0
  %704 = vmatpush1.msra.mxu0 0.0
  %705 = vmatprep.subr.mxu0 0.0
  %706 = vmatpush1.msra.mxu0 0.0
  %707 = vmatprep.subr.mxu0 0.0
  %708 = vmatpush1.msra.mxu0 0.0
  %709 = vmatprep.subr.mxu0 0.0
  %710 = vmatpush1.msra.mxu0 0.0
  %711 = vmatprep.subr.mxu0 0.0
  %712 = vmatpush1.msra.mxu0 0.0
  %713 = vmatprep.mubr.f32.mxu0 0.0
  %714 = vmatmul.mubr.f32.gmra.mrb[0].mxu0 %v638
  %v715 = vpop.f32.mrb[0].mxu0
  %v716 = vadd.f32 %v617, %v715
  %v717 = vpop.f32.mrb[0].mxu0
  %718 = vmatprep.mubr.f32.mxu0 0.0
  %719 = vmatmul.mubr.f32.gmra.mrb[0].mxu0 %v641
  %v720 = vpop.f32.mrb[0].mxu0
  %v721 = vadd.f32 %v622, %v720
  %v722 = vpop.f32.mrb[0].mxu0
  %723 = vmatprep.mubr.f32.mxu0 0.0
  %724 = vmatmul.mubr.f32.gmra.mrb[0].mxu0 %v644
  %v725 = vpop.f32.mrb[0].mxu0
  %v726 = vadd.f32 %v627, %v725
  %v727 = vpop.f32.mrb[0].mxu0
  %728 = vmatprep.mubr.f32.mxu0 0.0
  %729 = vmatmul.mubr.f32.gmra.mrb[0].mxu0 %v647
  %v730 = vpop.f32.mrb[0].mxu0
  %v731 = vadd.f32 %v632, %v730
  %v732 = vpop.f32.mrb[0].mxu0
  %733 = vdwg.mxu0
  %v734 = vld [vmem:[%s2 + $0x78] sm:$0x1]
  %v735 = vlaneseq
  %v736 = vshrl.u32 %v735, 7
  %v737 = vsub.s32 0, %v736
  %v738 = vrot.slane %v734, %v737
  %v739 = vadd.f32 %v716, %v738
  %v740 = vadd.f32 %v721, %v738
  %v741 = vadd.f32 %v726, %v738
  %v742 = vadd.f32 %v731, %v738
  %v743 = vmax.f32 %v739, 0.0
  %v744 = vmax.f32 %v740, 0.0
  %v745 = vmax.f32 %v741, 0.0
  %v746 = vmax.f32 %v742, 0.0
  %747 = vst.msk [vmem:[#allocation2 + $0x10] sm:$0xff] %vm14, %v743
  %748 = vst.msk [vmem:[#allocation2 + $0x18] sm:$0xff] %vm14, %v744
  %749 = vst.msk [vmem:[#allocation2 + $0x20] sm:$0xff] %vm14, %v745
  %750 = vst.msk [vmem:[#allocation2 + $0x28] sm:$0xff] %vm14, %v746
  %v751 = vld [vmem:[#allocation2 + $0xc] sm:$0xff]
  %v752 = vld [vmem:[#allocation2 + $0x14] sm:$0xff]
  %v753 = vld [vmem:[#allocation2 + $0x1c] sm:$0xff]
  %v754 = vld [vmem:[#allocation2 + $0x24] sm:$0xff]
  %v755 = vld [vmem:[%s2 + $0x80] sm:$0xff]
  %v756 = vld [vmem:[%s2 + $0x88] sm:$0xff]
  %v757 = vld [vmem:[%s2 + $0x90] sm:$0xff]
  %v758 = vld [vmem:[%s2 + $0x98] sm:$0xff]
  %v760 = vsel %vm14, %v743, 0
  %v763 = vsel %vm14, %v744, 0
  %v766 = vsel %vm14, %v745, 0
  %v769 = vsel %vm14, %v746, 0
  %771 = vmatprep.subr.mxu0 0.0
  %772 = vmatpush1.msra.mxu0 %v757
  %773 = vmatprep.subr.mxu0 0.0
  %774 = vmatpush1.msra.mxu0 %v758
  %775 = vmatprep.subr.mxu0 0.0
  %776 = vmatpush1.msra.mxu0 0.0
  %777 = vmatprep.subr.mxu0 0.0
  %778 = vmatpush1.msra.mxu0 0.0
  %779 = vmatprep.subr.mxu0 0.0
  %780 = vmatpush1.msra.mxu0 0.0
  %781 = vmatprep.subr.mxu0 0.0
  %782 = vmatpush1.msra.mxu0 0.0
  %783 = vmatprep.subr.mxu0 0.0
  %784 = vmatpush1.msra.mxu0 0.0
  %785 = vmatprep.subr.mxu0 0.0
  %786 = vmatpush1.msra.mxu0 0.0
  %787 = vmatprep.subr.mxu0 0.0
  %788 = vmatpush1.msra.mxu0 0.0
  %789 = vmatprep.subr.mxu0 0.0
  %790 = vmatpush1.msra.mxu0 0.0
  %791 = vmatprep.subr.mxu0 0.0
  %792 = vmatpush1.msra.mxu0 0.0
  %793 = vmatprep.subr.mxu0 0.0
  %794 = vmatpush1.msra.mxu0 0.0
  %795 = vmatprep.subr.mxu0 0.0
  %796 = vmatpush1.msra.mxu0 0.0
  %797 = vmatprep.subr.mxu0 0.0
  %798 = vmatpush1.msra.mxu0 0.0
  %799 = vmatprep.subr.mxu0 0.0
  %800 = vmatpush1.msra.mxu0 0.0
  %801 = vmatprep.subr.mxu0 0.0
  %802 = vmatpush1.msra.mxu0 0.0
  %803 = vmatprep.subr.mxu0 0.0
  %804 = vmatpush1.msra.mxu0 0.0
  %805 = vmatprep.subr.mxu0 0.0
  %806 = vmatpush1.msra.mxu0 0.0
  %807 = vmatprep.subr.mxu0 0.0
  %808 = vmatpush1.msra.mxu0 0.0
  %809 = vmatprep.subr.mxu0 0.0
  %810 = vmatpush1.msra.mxu0 0.0
  %811 = vmatprep.subr.mxu0 0.0
  %812 = vmatpush1.msra.mxu0 0.0
  %813 = vmatprep.subr.mxu0 0.0
  %814 = vmatpush1.msra.mxu0 0.0
  %815 = vmatprep.subr.mxu0 0.0
  %816 = vmatpush1.msra.mxu0 0.0
  %817 = vmatprep.subr.mxu0 0.0
  %818 = vmatpush1.msra.mxu0 0.0
  %819 = vmatprep.subr.mxu0 0.0
  %820 = vmatpush1.msra.mxu0 0.0
  %821 = vmatprep.subr.mxu0 0.0
  %822 = vmatpush1.msra.mxu0 0.0
  %823 = vmatprep.subr.mxu0 0.0
  %824 = vmatpush1.msra.mxu0 0.0
  %825 = vmatprep.subr.mxu0 0.0
  %826 = vmatpush1.msra.mxu0 0.0
  %827 = vmatprep.subr.mxu0 0.0
  %828 = vmatpush1.msra.mxu0 0.0
  %829 = vmatprep.subr.mxu0 0.0
  %830 = vmatpush1.msra.mxu0 0.0
  %831 = vmatprep.subr.mxu0 0.0
  %832 = vmatpush1.msra.mxu0 0.0
  %833 = vmatprep.subr.mxu0 0.0
  %834 = vmatpush1.msra.mxu0 0.0
  %835 = vmatprep.mubr.f32.mxu0 0.0
  %836 = vmatmul.mubr.f32.gmra.mrb[0].mxu0 %v760
  %v837 = vpop.f32.mrb[0].mxu0
  %v838 = vadd.f32 0.0, %v837
  %v839 = vpop.f32.mrb[0].mxu0
  %840 = vmatprep.mubr.f32.mxu0 0.0
  %841 = vmatmul.mubr.f32.gmra.mrb[0].mxu0 %v763
  %v842 = vpop.f32.mrb[0].mxu0
  %v843 = vadd.f32 0.0, %v842
  %v844 = vpop.f32.mrb[0].mxu0
  %845 = vmatprep.mubr.f32.mxu0 0.0
  %846 = vmatmul.mubr.f32.gmra.mrb[0].mxu0 %v766
  %v847 = vpop.f32.mrb[0].mxu0
  %v848 = vadd.f32 0.0, %v847
  %v849 = vpop.f32.mrb[0].mxu0
  %850 = vmatprep.mubr.f32.mxu0 0.0
  %851 = vmatmul.mubr.f32.gmra.mrb[0].mxu0 %v769
  %v852 = vpop.f32.mrb[0].mxu0
  %v853 = vadd.f32 0.0, %v852
  %v854 = vpop.f32.mrb[0].mxu0
  %855 = vdwg.mxu0
  %v857 = vsel %vm14, %v751, 0
  %v860 = vsel %vm14, %v752, 0
  %v863 = vsel %vm14, %v753, 0
  %v866 = vsel %vm14, %v754, 0
  %868 = vmatprep.subr.mxu0 0.0
  %869 = vmatpush1.msra.mxu0 %v755
  %870 = vmatprep.subr.mxu0 0.0
  %871 = vmatpush1.msra.mxu0 %v756
  %872 = vmatprep.subr.mxu0 0.0
  %873 = vmatpush1.msra.mxu0 0.0
  %874 = vmatprep.subr.mxu0 0.0
  %875 = vmatpush1.msra.mxu0 0.0
  %876 = vmatprep.subr.mxu0 0.0
  %877 = vmatpush1.msra.mxu0 0.0
  %878 = vmatprep.subr.mxu0 0.0
  %879 = vmatpush1.msra.mxu0 0.0
  %880 = vmatprep.subr.mxu0 0.0
  %881 = vmatpush1.msra.mxu0 0.0
  %882 = vmatprep.subr.mxu0 0.0
  %883 = vmatpush1.msra.mxu0 0.0
  %884 = vmatprep.subr.mxu0 0.0
  %885 = vmatpush1.msra.mxu0 0.0
  %886 = vmatprep.subr.mxu0 0.0
  %887 = vmatpush1.msra.mxu0 0.0
  %888 = vmatprep.subr.mxu0 0.0
  %889 = vmatpush1.msra.mxu0 0.0
  %890 = vmatprep.subr.mxu0 0.0
  %891 = vmatpush1.msra.mxu0 0.0
  %892 = vmatprep.subr.mxu0 0.0
  %893 = vmatpush1.msra.mxu0 0.0
  %894 = vmatprep.subr.mxu0 0.0
  %895 = vmatpush1.msra.mxu0 0.0
  %896 = vmatprep.subr.mxu0 0.0
  %897 = vmatpush1.msra.mxu0 0.0
  %898 = vmatprep.subr.mxu0 0.0
  %899 = vmatpush1.msra.mxu0 0.0
  %900 = vmatprep.subr.mxu0 0.0
  %901 = vmatpush1.msra.mxu0 0.0
  %902 = vmatprep.subr.mxu0 0.0
  %903 = vmatpush1.msra.mxu0 0.0
  %904 = vmatprep.subr.mxu0 0.0
  %905 = vmatpush1.msra.mxu0 0.0
  %906 = vmatprep.subr.mxu0 0.0
  %907 = vmatpush1.msra.mxu0 0.0
  %908 = vmatprep.subr.mxu0 0.0
  %909 = vmatpush1.msra.mxu0 0.0
  %910 = vmatprep.subr.mxu0 0.0
  %911 = vmatpush1.msra.mxu0 0.0
  %912 = vmatprep.subr.mxu0 0.0
  %913 = vmatpush1.msra.mxu0 0.0
  %914 = vmatprep.subr.mxu0 0.0
  %915 = vmatpush1.msra.mxu0 0.0
  %916 = vmatprep.subr.mxu0 0.0
  %917 = vmatpush1.msra.mxu0 0.0
  %918 = vmatprep.subr.mxu0 0.0
  %919 = vmatpush1.msra.mxu0 0.0
  %920 = vmatprep.subr.mxu0 0.0
  %921 = vmatpush1.msra.mxu0 0.0
  %922 = vmatprep.subr.mxu0 0.0
  %923 = vmatpush1.msra.mxu0 0.0
  %924 = vmatprep.subr.mxu0 0.0
  %925 = vmatpush1.msra.mxu0 0.0
  %926 = vmatprep.subr.mxu0 0.0
  %927 = vmatpush1.msra.mxu0 0.0
  %928 = vmatprep.subr.mxu0 0.0
  %929 = vmatpush1.msra.mxu0 0.0
  %930 = vmatprep.subr.mxu0 0.0
  %931 = vmatpush1.msra.mxu0 0.0
  %932 = vmatprep.mubr.f32.mxu0 0.0
  %933 = vmatmul.mubr.f32.gmra.mrb[0].mxu0 %v857
  %v934 = vpop.f32.mrb[0].mxu0
  %v935 = vadd.f32 %v838, %v934
  %v936 = vpop.f32.mrb[0].mxu0
  %937 = vmatprep.mubr.f32.mxu0 0.0
  %938 = vmatmul.mubr.f32.gmra.mrb[0].mxu0 %v860
  %v939 = vpop.f32.mrb[0].mxu0
  %v940 = vadd.f32 %v843, %v939
  %v941 = vpop.f32.mrb[0].mxu0
  %942 = vmatprep.mubr.f32.mxu0 0.0
  %943 = vmatmul.mubr.f32.gmra.mrb[0].mxu0 %v863
  %v944 = vpop.f32.mrb[0].mxu0
  %v945 = vadd.f32 %v848, %v944
  %v946 = vpop.f32.mrb[0].mxu0
  %947 = vmatprep.mubr.f32.mxu0 0.0
  %948 = vmatmul.mubr.f32.gmra.mrb[0].mxu0 %v866
  %v949 = vpop.f32.mrb[0].mxu0
  %v950 = vadd.f32 %v853, %v949
  %v951 = vpop.f32.mrb[0].mxu0
  %952 = vdwg.mxu0
  %v953 = vld [vmem:[%s2 + $0xa0] sm:$0x1]
  %v954 = vlaneseq
  %v955 = vshrl.u32 %v954, 7
  %v956 = vsub.s32 0, %v955
  %v957 = vrot.slane %v953, %v956
  %v958 = vadd.f32 %v935, %v957
  %v959 = vadd.f32 %v940, %v957
  %v960 = vadd.f32 %v945, %v957
  %v961 = vadd.f32 %v950, %v957
  %v962 = vmax.f32 %v958, 0.0
  %v963 = vmax.f32 %v959, 0.0
  %v964 = vmax.f32 %v960, 0.0
  %v965 = vmax.f32 %v961, 0.0
  %v966 = vadd.f32 %v962, %v524
  %v967 = vadd.f32 %v963, %v525
  %v968 = vadd.f32 %v964, %v526
  %v969 = vadd.f32 %v965, %v527
  %v970 = vmax.f32 %v966, 0.0
  %v971 = vmax.f32 %v967, 0.0
  %v972 = vmax.f32 %v968, 0.0
  %v973 = vmax.f32 %v969, 0.0
  %974 = vst.msk [vmem:[#allocation2 + $0x10] sm:$0xff] %vm14, %v970
  %975 = vst.msk [vmem:[#allocation2 + $0x18] sm:$0xff] %vm14, %v971
  %976 = vst.msk [vmem:[#allocation2 + $0x20] sm:$0xff] %vm14, %v972
  %977 = vst.msk [vmem:[#allocation2 + $0x28] sm:$0xff] %vm14, %v973
  %v978 = vld [vmem:[#allocation2 + $0x8] sm:$0xff]
  %v979 = vld [vmem:[#allocation2 + $0x10] sm:$0xff]
  %v980 = vld [vmem:[#allocation2 + $0x18] sm:$0xff]
  %v981 = vld [vmem:[#allocation2 + $0x20] sm:$0xff]
  %v982 = vld [vmem:[%s2 + $0xb8] sm:$0xff]
  %v983 = vld [vmem:[%s2 + $0xc0] sm:$0xff]
  %v985 = vsel %vm14, %v970, 0
  %v988 = vsel %vm14, %v971, 0
  %v991 = vsel %vm14, %v972, 0
  %v994 = vsel %vm14, %v973, 0
  %996 = vmatprep.subr.mxu0 0.0
  %997 = vmatpush1.msra.mxu0 %v982
  %998 = vmatprep.subr.mxu0 0.0
  %999 = vmatpush1.msra.mxu0 %v983
  %1000 = vmatprep.subr.mxu0 0.0
  %1001 = vmatpush1.msra.mxu0 0.0
  %1002 = vmatprep.subr.mxu0 0.0
  %1003 = vmatpush1.msra.mxu0 0.0
  %1004 = vmatprep.subr.mxu0 0.0
  %1005 = vmatpush1.msra.mxu0 0.0
  %1006 = vmatprep.subr.mxu0 0.0
  %1007 = vmatpush1.msra.mxu0 0.0
  %1008 = vmatprep.subr.mxu0 0.0
  %1009 = vmatpush1.msra.mxu0 0.0
  %1010 = vmatprep.subr.mxu0 0.0
  %1011 = vmatpush1.msra.mxu0 0.0
  %1012 = vmatprep.subr.mxu0 0.0
  %1013 = vmatpush1.msra.mxu0 0.0
  %1014 = vmatprep.subr.mxu0 0.0
  %1015 = vmatpush1.msra.mxu0 0.0
  %1016 = vmatprep.subr.mxu0 0.0
  %1017 = vmatpush1.msra.mxu0 0.0
  %1018 = vmatprep.subr.mxu0 0.0
  %1019 = vmatpush1.msra.mxu0 0.0
  %1020 = vmatprep.subr.mxu0 0.0
  %1021 = vmatpush1.msra.mxu0 0.0
  %1022 = vmatprep.subr.mxu0 0.0
  %1023 = vmatpush1.msra.mxu0 0.0
  %1024 = vmatprep.subr.mxu0 0.0
  %1025 = vmatpush1.msra.mxu0 0.0
  %1026 = vmatprep.subr.mxu0 0.0
  %1027 = vmatpush1.msra.mxu0 0.0
  %1028 = vmatprep.subr.mxu0 0.0
  %1029 = vmatpush1.msra.mxu0 0.0
  %1030 = vmatprep.subr.mxu0 0.0
  %1031 = vmatpush1.msra.mxu0 0.0
  %1032 = vmatprep.subr.mxu0 0.0
  %1033 = vmatpush1.msra.mxu0 0.0
  %1034 = vmatprep.subr.mxu0 0.0
  %1035 = vmatpush1.msra.mxu0 0.0
  %1036 = vmatprep.subr.mxu0 0.0
  %1037 = vmatpush1.msra.mxu0 0.0
  %1038 = vmatprep.subr.mxu0 0.0
  %1039 = vmatpush1.msra.mxu0 0.0
  %1040 = vmatprep.subr.mxu0 0.0
  %1041 = vmatpush1.msra.mxu0 0.0
  %1042 = vmatprep.subr.mxu0 0.0
  %1043 = vmatpush1.msra.mxu0 0.0
  %1044 = vmatprep.subr.mxu0 0.0
  %1045 = vmatpush1.msra.mxu0 0.0
  %1046 = vmatprep.subr.mxu0 0.0
  %1047 = vmatpush1.msra.mxu0 0.0
  %1048 = vmatprep.subr.mxu0 0.0
  %1049 = vmatpush1.msra.mxu0 0.0
  %1050 = vmatprep.subr.mxu0 0.0
  %1051 = vmatpush1.msra.mxu0 0.0
  %1052 = vmatprep.subr.mxu0 0.0
  %1053 = vmatpush1.msra.mxu0 0.0
  %1054 = vmatprep.subr.mxu0 0.0
  %1055 = vmatpush1.msra.mxu0 0.0
  %1056 = vmatprep.subr.mxu0 0.0
  %1057 = vmatpush1.msra.mxu0 0.0
  %1058 = vmatprep.subr.mxu0 0.0
  %1059 = vmatpush1.msra.mxu0 0.0
  %1060 = vmatprep.mubr.f32.mxu0 0.0
  %1061 = vmatmul.mubr.f32.gmra.mrb[0].mxu0 %v985
  %v1062 = vpop.f32.mrb[0].mxu0
  %v1063 = vadd.f32 0.0, %v1062
  %v1064 = vpop.f32.mrb[0].mxu0
  %1065 = vmatprep.mubr.f32.mxu0 0.0
  %1066 = vmatmul.mubr.f32.gmra.mrb[0].mxu0 %v988
  %v1067 = vpop.f32.mrb[0].mxu0
  %v1068 = vadd.f32 0.0, %v1067
  %v1069 = vpop.f32.mrb[0].mxu0
  %1070 = vmatprep.mubr.f32.mxu0 0.0
  %1071 = vmatmul.mubr.f32.gmra.mrb[0].mxu0 %v991
  %v1072 = vpop.f32.mrb[0].mxu0
  %v1073 = vadd.f32 0.0, %v1072
  %v1074 = vpop.f32.mrb[0].mxu0
  %1075 = vmatprep.mubr.f32.mxu0 0.0
  %1076 = vmatmul.mubr.f32.gmra.mrb[0].mxu0 %v994
  %v1077 = vpop.f32.mrb[0].mxu0
  %v1078 = vadd.f32 0.0, %v1077
  %v1079 = vpop.f32.mrb[0].mxu0
  %1080 = vdwg.mxu0
  %v1081 = vld [vmem:[%s2 + $0xa8] sm:$0xff]
  %v1082 = vld [vmem:[%s2 + $0xb0] sm:$0xff]
  %v1084 = vsel %vm14, %v978, 0
  %v1087 = vsel %vm14, %v979, 0
  %v1090 = vsel %vm14, %v980, 0
  %v1093 = vsel %vm14, %v981, 0
  %1095 = vmatprep.subr.mxu0 0.0
  %1096 = vmatpush1.msra.mxu0 %v1081
  %1097 = vmatprep.subr.mxu0 0.0
  %1098 = vmatpush1.msra.mxu0 %v1082
  %1099 = vmatprep.subr.mxu0 0.0
  %1100 = vmatpush1.msra.mxu0 0.0
  %1101 = vmatprep.subr.mxu0 0.0
  %1102 = vmatpush1.msra.mxu0 0.0
  %1103 = vmatprep.subr.mxu0 0.0
  %1104 = vmatpush1.msra.mxu0 0.0
  %1105 = vmatprep.subr.mxu0 0.0
  %1106 = vmatpush1.msra.mxu0 0.0
  %1107 = vmatprep.subr.mxu0 0.0
  %1108 = vmatpush1.msra.mxu0 0.0
  %1109 = vmatprep.subr.mxu0 0.0
  %1110 = vmatpush1.msra.mxu0 0.0
  %1111 = vmatprep.subr.mxu0 0.0
  %1112 = vmatpush1.msra.mxu0 0.0
  %1113 = vmatprep.subr.mxu0 0.0
  %1114 = vmatpush1.msra.mxu0 0.0
  %1115 = vmatprep.subr.mxu0 0.0
  %1116 = vmatpush1.msra.mxu0 0.0
  %1117 = vmatprep.subr.mxu0 0.0
  %1118 = vmatpush1.msra.mxu0 0.0
  %1119 = vmatprep.subr.mxu0 0.0
  %1120 = vmatpush1.msra.mxu0 0.0
  %1121 = vmatprep.subr.mxu0 0.0
  %1122 = vmatpush1.msra.mxu0 0.0
  %1123 = vmatprep.subr.mxu0 0.0
  %1124 = vmatpush1.msra.mxu0 0.0
  %1125 = vmatprep.subr.mxu0 0.0
  %1126 = vmatpush1.msra.mxu0 0.0
  %1127 = vmatprep.subr.mxu0 0.0
  %1128 = vmatpush1.msra.mxu0 0.0
  %1129 = vmatprep.subr.mxu0 0.0
  %1130 = vmatpush1.msra.mxu0 0.0
  %1131 = vmatprep.subr.mxu0 0.0
  %1132 = vmatpush1.msra.mxu0 0.0
  %1133 = vmatprep.subr.mxu0 0.0
  %1134 = vmatpush1.msra.mxu0 0.0
  %1135 = vmatprep.subr.mxu0 0.0
  %1136 = vmatpush1.msra.mxu0 0.0
  %1137 = vmatprep.subr.mxu0 0.0
  %1138 = vmatpush1.msra.mxu0 0.0
  %1139 = vmatprep.subr.mxu0 0.0
  %1140 = vmatpush1.msra.mxu0 0.0
  %1141 = vmatprep.subr.mxu0 0.0
  %1142 = vmatpush1.msra.mxu0 0.0
  %1143 = vmatprep.subr.mxu0 0.0
  %1144 = vmatpush1.msra.mxu0 0.0
  %1145 = vmatprep.subr.mxu0 0.0
  %1146 = vmatpush1.msra.mxu0 0.0
  %1147 = vmatprep.subr.mxu0 0.0
  %1148 = vmatpush1.msra.mxu0 0.0
  %1149 = vmatprep.subr.mxu0 0.0
  %1150 = vmatpush1.msra.mxu0 0.0
  %1151 = vmatprep.subr.mxu0 0.0
  %1152 = vmatpush1.msra.mxu0 0.0
  %1153 = vmatprep.subr.mxu0 0.0
  %1154 = vmatpush1.msra.mxu0 0.0
  %1155 = vmatprep.subr.mxu0 0.0
  %1156 = vmatpush1.msra.mxu0 0.0
  %1157 = vmatprep.subr.mxu0 0.0
  %1158 = vmatpush1.msra.mxu0 0.0
  %1159 = vmatprep.mubr.f32.mxu0 0.0
  %1160 = vmatmul.mubr.f32.gmra.mrb[0].mxu0 %v1084
  %v1161 = vpop.f32.mrb[0].mxu0
  %v1162 = vadd.f32 %v1063, %v1161
  %v1163 = vpop.f32.mrb[0].mxu0
  %1164 = vmatprep.mubr.f32.mxu0 0.0
  %1165 = vmatmul.mubr.f32.gmra.mrb[0].mxu0 %v1087
  %v1166 = vpop.f32.mrb[0].mxu0
  %v1167 = vadd.f32 %v1068, %v1166
  %v1168 = vpop.f32.mrb[0].mxu0
  %1169 = vmatprep.mubr.f32.mxu0 0.0
  %1170 = vmatmul.mubr.f32.gmra.mrb[0].mxu0 %v1090
  %v1171 = vpop.f32.mrb[0].mxu0
  %v1172 = vadd.f32 %v1073, %v1171
  %v1173 = vpop.f32.mrb[0].mxu0
  %1174 = vmatprep.mubr.f32.mxu0 0.0
  %1175 = vmatmul.mubr.f32.gmra.mrb[0].mxu0 %v1093
  %v1176 = vpop.f32.mrb[0].mxu0
  %v1177 = vadd.f32 %v1078, %v1176
  %v1178 = vpop.f32.mrb[0].mxu0
  %1179 = vdwg.mxu0
  %v1180 = vld [vmem:[%s2 + $0xc8] sm:$0x1]
  %v1181 = vlaneseq
  %v1182 = vshrl.u32 %v1181, 7
  %v1183 = vsub.s32 0, %v1182
  %v1184 = vrot.slane %v1180, %v1183
  %v1185 = vadd.f32 %v1162, %v1184
  %v1186 = vadd.f32 %v1167, %v1184
  %v1187 = vadd.f32 %v1172, %v1184
  %v1188 = vadd.f32 %v1177, %v1184
  %v1189 = vmax.f32 %v1185, 0.0
  %v1190 = vmax.f32 %v1186, 0.0
  %v1191 = vmax.f32 %v1187, 0.0
  %v1192 = vmax.f32 %v1188, 0.0
  %1193 = vst.msk [vmem:[#allocation2 + $0x10] sm:$0xff] %vm14, %v1189
  %1194 = vst.msk [vmem:[#allocation2 + $0x18] sm:$0xff] %vm14, %v1190
  %1195 = vst.msk [vmem:[#allocation2 + $0x20] sm:$0xff] %vm14, %v1191
  %1196 = vst.msk [vmem:[#allocation2 + $0x28] sm:$0xff] %vm14, %v1192
  %v1197 = vld [vmem:[#allocation2 + $0x8] sm:$0xff]
  %v1198 = vld [vmem:[#allocation2 + $0x10] sm:$0xff]
  %v1199 = vld [vmem:[#allocation2 + $0x18] sm:$0xff]
  %v1200 = vld [vmem:[#allocation2 + $0x20] sm:$0xff]
  %v1201 = vld [vmem:[%s2 + $0xd0] sm:$0xff]
  %v1202 = vld [vmem:[%s2 + $0xd8] sm:$0xff]
  %v1203 = vld [vmem:[%s2 + $0xe0] sm:$0xff]
  %v1204 = vld [vmem:[%s2 + $0xe8] sm:$0xff]
  %v1206 = vsel %vm14, %v1189, 0
  %v1209 = vsel %vm14, %v1190, 0
  %v1212 = vsel %vm14, %v1191, 0
  %v1215 = vsel %vm14, %v1192, 0
  %1217 = vmatprep.subr.mxu0 0.0
  %1218 = vmatpush1.msra.mxu0 %v1203
  %1219 = vmatprep.subr.mxu0 0.0
  %1220 = vmatpush1.msra.mxu0 %v1204
  %1221 = vmatprep.subr.mxu0 0.0
  %1222 = vmatpush1.msra.mxu0 0.0
  %1223 = vmatprep.subr.mxu0 0.0
  %1224 = vmatpush1.msra.mxu0 0.0
  %1225 = vmatprep.subr.mxu0 0.0
  %1226 = vmatpush1.msra.mxu0 0.0
  %1227 = vmatprep.subr.mxu0 0.0
  %1228 = vmatpush1.msra.mxu0 0.0
  %1229 = vmatprep.subr.mxu0 0.0
  %1230 = vmatpush1.msra.mxu0 0.0
  %1231 = vmatprep.subr.mxu0 0.0
  %1232 = vmatpush1.msra.mxu0 0.0
  %1233 = vmatprep.subr.mxu0 0.0
  %1234 = vmatpush1.msra.mxu0 0.0
  %1235 = vmatprep.subr.mxu0 0.0
  %1236 = vmatpush1.msra.mxu0 0.0
  %1237 = vmatprep.subr.mxu0 0.0
  %1238 = vmatpush1.msra.mxu0 0.0
  %1239 = vmatprep.subr.mxu0 0.0
  %1240 = vmatpush1.msra.mxu0 0.0
  %1241 = vmatprep.subr.mxu0 0.0
  %1242 = vmatpush1.msra.mxu0 0.0
  %1243 = vmatprep.subr.mxu0 0.0
  %1244 = vmatpush1.msra.mxu0 0.0
  %1245 = vmatprep.subr.mxu0 0.0
  %1246 = vmatpush1.msra.mxu0 0.0
  %1247 = vmatprep.subr.mxu0 0.0
  %1248 = vmatpush1.msra.mxu0 0.0
  %1249 = vmatprep.subr.mxu0 0.0
  %1250 = vmatpush1.msra.mxu0 0.0
  %1251 = vmatprep.subr.mxu0 0.0
  %1252 = vmatpush1.msra.mxu0 0.0
  %1253 = vmatprep.subr.mxu0 0.0
  %1254 = vmatpush1.msra.mxu0 0.0
  %1255 = vmatprep.subr.mxu0 0.0
  %1256 = vmatpush1.msra.mxu0 0.0
  %1257 = vmatprep.subr.mxu0 0.0
  %1258 = vmatpush1.msra.mxu0 0.0
  %1259 = vmatprep.subr.mxu0 0.0
  %1260 = vmatpush1.msra.mxu0 0.0
  %1261 = vmatprep.subr.mxu0 0.0
  %1262 = vmatpush1.msra.mxu0 0.0
  %1263 = vmatprep.subr.mxu0 0.0
  %1264 = vmatpush1.msra.mxu0 0.0
  %1265 = vmatprep.subr.mxu0 0.0
  %1266 = vmatpush1.msra.mxu0 0.0
  %1267 = vmatprep.subr.mxu0 0.0
  %1268 = vmatpush1.msra.mxu0 0.0
  %1269 = vmatprep.subr.mxu0 0.0
  %1270 = vmatpush1.msra.mxu0 0.0
  %1271 = vmatprep.subr.mxu0 0.0
  %1272 = vmatpush1.msra.mxu0 0.0
  %1273 = vmatprep.subr.mxu0 0.0
  %1274 = vmatpush1.msra.mxu0 0.0
  %1275 = vmatprep.subr.mxu0 0.0
  %1276 = vmatpush1.msra.mxu0 0.0
  %1277 = vmatprep.subr.mxu0 0.0
  %1278 = vmatpush1.msra.mxu0 0.0
  %1279 = vmatprep.subr.mxu0 0.0
  %1280 = vmatpush1.msra.mxu0 0.0
  %1281 = vmatprep.mubr.f32.mxu0 0.0
  %1282 = vmatmul.mubr.f32.gmra.mrb[0].mxu0 %v1206
  %v1283 = vpop.f32.mrb[0].mxu0
  %v1284 = vadd.f32 0.0, %v1283
  %v1285 = vpop.f32.mrb[0].mxu0
  %1286 = vmatprep.mubr.f32.mxu0 0.0
  %1287 = vmatmul.mubr.f32.gmra.mrb[0].mxu0 %v1209
  %v1288 = vpop.f32.mrb[0].mxu0
  %v1289 = vadd.f32 0.0, %v1288
  %v1290 = vpop.f32.mrb[0].mxu0
  %1291 = vmatprep.mubr.f32.mxu0 0.0
  %1292 = vmatmul.mubr.f32.gmra.mrb[0].mxu0 %v1212
  %v1293 = vpop.f32.mrb[0].mxu0
  %v1294 = vadd.f32 0.0, %v1293
  %v1295 = vpop.f32.mrb[0].mxu0
  %1296 = vmatprep.mubr.f32.mxu0 0.0
  %1297 = vmatmul.mubr.f32.gmra.mrb[0].mxu0 %v1215
  %v1298 = vpop.f32.mrb[0].mxu0
  %v1299 = vadd.f32 0.0, %v1298
  %v1300 = vpop.f32.mrb[0].mxu0
  %1301 = vdwg.mxu0
  %v1303 = vsel %vm14, %v1197, 0
  %v1306 = vsel %vm14, %v1198, 0
  %v1309 = vsel %vm14, %v1199, 0
  %v1312 = vsel %vm14, %v1200, 0
  %1314 = vmatprep.subr.mxu0 0.0
  %1315 = vmatpush1.msra.mxu0 %v1201
  %1316 = vmatprep.subr.mxu0 0.0
  %1317 = vmatpush1.msra.mxu0 %v1202
  %1318 = vmatprep.subr.mxu0 0.0
  %1319 = vmatpush1.msra.mxu0 0.0
  %1320 = vmatprep.subr.mxu0 0.0
  %1321 = vmatpush1.msra.mxu0 0.0
  %1322 = vmatprep.subr.mxu0 0.0
  %1323 = vmatpush1.msra.mxu0 0.0
  %1324 = vmatprep.subr.mxu0 0.0
  %1325 = vmatpush1.msra.mxu0 0.0
  %1326 = vmatprep.subr.mxu0 0.0
  %1327 = vmatpush1.msra.mxu0 0.0
  %1328 = vmatprep.subr.mxu0 0.0
  %1329 = vmatpush1.msra.mxu0 0.0
  %1330 = vmatprep.subr.mxu0 0.0
  %1331 = vmatpush1.msra.mxu0 0.0
  %1332 = vmatprep.subr.mxu0 0.0
  %1333 = vmatpush1.msra.mxu0 0.0
  %1334 = vmatprep.subr.mxu0 0.0
  %1335 = vmatpush1.msra.mxu0 0.0
  %1336 = vmatprep.subr.mxu0 0.0
  %1337 = vmatpush1.msra.mxu0 0.0
  %1338 = vmatprep.subr.mxu0 0.0
  %1339 = vmatpush1.msra.mxu0 0.0
  %1340 = vmatprep.subr.mxu0 0.0
  %1341 = vmatpush1.msra.mxu0 0.0
  %1342 = vmatprep.subr.mxu0 0.0
  %1343 = vmatpush1.msra.mxu0 0.0
  %1344 = vmatprep.subr.mxu0 0.0
  %1345 = vmatpush1.msra.mxu0 0.0
  %1346 = vmatprep.subr.mxu0 0.0
  %1347 = vmatpush1.msra.mxu0 0.0
  %1348 = vmatprep.subr.mxu0 0.0
  %1349 = vmatpush1.msra.mxu0 0.0
  %1350 = vmatprep.subr.mxu0 0.0
  %1351 = vmatpush1.msra.mxu0 0.0
  %1352 = vmatprep.subr.mxu0 0.0
  %1353 = vmatpush1.msra.mxu0 0.0
  %1354 = vmatprep.subr.mxu0 0.0
  %1355 = vmatpush1.msra.mxu0 0.0
  %1356 = vmatprep.subr.mxu0 0.0
  %1357 = vmatpush1.msra.mxu0 0.0
  %1358 = vmatprep.subr.mxu0 0.0
  %1359 = vmatpush1.msra.mxu0 0.0
  %1360 = vmatprep.subr.mxu0 0.0
  %1361 = vmatpush1.msra.mxu0 0.0
  %1362 = vmatprep.subr.mxu0 0.0
  %1363 = vmatpush1.msra.mxu0 0.0
  %1364 = vmatprep.subr.mxu0 0.0
  %1365 = vmatpush1.msra.mxu0 0.0
  %1366 = vmatprep.subr.mxu0 0.0
  %1367 = vmatpush1.msra.mxu0 0.0
  %1368 = vmatprep.subr.mxu0 0.0
  %1369 = vmatpush1.msra.mxu0 0.0
  %1370 = vmatprep.subr.mxu0 0.0
  %1371 = vmatpush1.msra.mxu0 0.0
  %1372 = vmatprep.subr.mxu0 0.0
  %1373 = vmatpush1.msra.mxu0 0.0
  %1374 = vmatprep.subr.mxu0 0.0
  %1375 = vmatpush1.msra.mxu0 0.0
  %1376 = vmatprep.subr.mxu0 0.0
  %1377 = vmatpush1.msra.mxu0 0.0
  %1378 = vmatprep.mubr.f32.mxu0 0.0
  %1379 = vmatmul.mubr.f32.gmra.mrb[0].mxu0 %v1303
  %v1380 = vpop.f32.mrb[0].mxu0
  %v1381 = vadd.f32 %v1284, %v1380
  %v1382 = vpop.f32.mrb[0].mxu0
  %1383 = vmatprep.mubr.f32.mxu0 0.0
  %1384 = vmatmul.mubr.f32.gmra.mrb[0].mxu0 %v1306
  %v1385 = vpop.f32.mrb[0].mxu0
  %v1386 = vadd.f32 %v1289, %v1385
  %v1387 = vpop.f32.mrb[0].mxu0
  %1388 = vmatprep.mubr.f32.mxu0 0.0
  %1389 = vmatmul.mubr.f32.gmra.mrb[0].mxu0 %v1309
  %v1390 = vpop.f32.mrb[0].mxu0
  %v1391 = vadd.f32 %v1294, %v1390
  %v1392 = vpop.f32.mrb[0].mxu0
  %1393 = vmatprep.mubr.f32.mxu0 0.0
  %1394 = vmatmul.mubr.f32.gmra.mrb[0].mxu0 %v1312
  %v1395 = vpop.f32.mrb[0].mxu0
  %v1396 = vadd.f32 %v1299, %v1395
  %v1397 = vpop.f32.mrb[0].mxu0
  %1398 = vdwg.mxu0
  %v1399 = vld [vmem:[%s2 + $0xf0] sm:$0x1]
  %v1400 = vlaneseq
  %v1401 = vshrl.u32 %v1400, 7
  %v1402 = vsub.s32 0, %v1401
  %v1403 = vrot.slane %v1399, %v1402
  %v1404 = vadd.f32 %v1381, %v1403
  %v1405 = vadd.f32 %v1386, %v1403
  %v1406 = vadd.f32 %v1391, %v1403
  %v1407 = vadd.f32 %v1396, %v1403
  %v1408 = vmax.f32 %v1404, 0.0
  %v1409 = vmax.f32 %v1405, 0.0
  %v1410 = vmax.f32 %v1406, 0.0
  %v1411 = vmax.f32 %v1407, 0.0
  %v1412 = vadd.f32 %v1408, %v970
  %v1413 = vadd.f32 %v1409, %v971
  %v1414 = vadd.f32 %v1410, %v972
  %v1415 = vadd.f32 %v1411, %v973
  %v1416 = vmax.f32 %v1412, 0.0
  %v1417 = vmax.f32 %v1413, 0.0
  %v1418 = vmax.f32 %v1414, 0.0
  %v1419 = vmax.f32 %v1415, 0.0
  %1420 = vst.msk [vmem:[#allocation2 + $0x10] sm:$0xff] %vm14, %v1416
  %1421 = vst.msk [vmem:[#allocation2 + $0x18] sm:$0xff] %vm14, %v1417
  %1422 = vst.msk [vmem:[#allocation2 + $0x20] sm:$0xff] %vm14, %v1418
  %1423 = vst.msk [vmem:[#allocation2 + $0x28] sm:$0xff] %vm14, %v1419
  %v1424 = vld [vmem:[#allocation2] sm:$0xff]
  %v1425 = vld [vmem:[#allocation2 + $0x8] sm:$0xff]
  %v1426 = vld [vmem:[#allocation2 + $0x10] sm:$0xff]
  %v1427 = vld [vmem:[#allocation2 + $0x18] sm:$0xff]
  %v1428 = vld [vmem:[%s2 + $0x108] sm:$0xff]
  %v1429 = vld [vmem:[%s2 + $0x110] sm:$0xff]
  %v1431 = vsel %vm14, %v1416, 0
  %v1434 = vsel %vm14, %v1417, 0
  %v1437 = vsel %vm14, %v1418, 0
  %v1440 = vsel %vm14, %v1419, 0
  %1442 = vmatprep.subr.mxu0 0.0
  %1443 = vmatpush1.msra.mxu0 %v1428
  %1444 = vmatprep.subr.mxu0 0.0
  %1445 = vmatpush1.msra.mxu0 %v1429
  %1446 = vmatprep.subr.mxu0 0.0
  %1447 = vmatpush1.msra.mxu0 0.0
  %1448 = vmatprep.subr.mxu0 0.0
  %1449 = vmatpush1.msra.mxu0 0.0
  %1450 = vmatprep.subr.mxu0 0.0
  %1451 = vmatpush1.msra.mxu0 0.0
  %1452 = vmatprep.subr.mxu0 0.0
  %1453 = vmatpush1.msra.mxu0 0.0
  %1454 = vmatprep.subr.mxu0 0.0
  %1455 = vmatpush1.msra.mxu0 0.0
  %1456 = vmatprep.subr.mxu0 0.0
  %1457 = vmatpush1.msra.mxu0 0.0
  %1458 = vmatprep.subr.mxu0 0.0
  %1459 = vmatpush1.msra.mxu0 0.0
  %1460 = vmatprep.subr.mxu0 0.0
  %1461 = vmatpush1.msra.mxu0 0.0
  %1462 = vmatprep.subr.mxu0 0.0
  %1463 = vmatpush1.msra.mxu0 0.0
  %1464 = vmatprep.subr.mxu0 0.0
  %1465 = vmatpush1.msra.mxu0 0.0
  %1466 = vmatprep.subr.mxu0 0.0
  %1467 = vmatpush1.msra.mxu0 0.0
  %1468 = vmatprep.subr.mxu0 0.0
  %1469 = vmatpush1.msra.mxu0 0.0
  %1470 = vmatprep.subr.mxu0 0.0
  %1471 = vmatpush1.msra.mxu0 0.0
  %1472 = vmatprep.subr.mxu0 0.0
  %1473 = vmatpush1.msra.mxu0 0.0
  %1474 = vmatprep.subr.mxu0 0.0
  %1475 = vmatpush1.msra.mxu0 0.0
  %1476 = vmatprep.subr.mxu0 0.0
  %1477 = vmatpush1.msra.mxu0 0.0
  %1478 = vmatprep.subr.mxu0 0.0
  %1479 = vmatpush1.msra.mxu0 0.0
  %1480 = vmatprep.subr.mxu0 0.0
  %1481 = vmatpush1.msra.mxu0 0.0
  %1482 = vmatprep.subr.mxu0 0.0
  %1483 = vmatpush1.msra.mxu0 0.0
  %1484 = vmatprep.subr.mxu0 0.0
  %1485 = vmatpush1.msra.mxu0 0.0
  %1486 = vmatprep.subr.mxu0 0.0
  %1487 = vmatpush1.msra.mxu0 0.0
  %1488 = vmatprep.subr.mxu0 0.0
  %1489 = vmatpush1.msra.mxu0 0.0
  %1490 = vmatprep.subr.mxu0 0.0
  %1491 = vmatpush1.msra.mxu0 0.0
  %1492 = vmatprep.subr.mxu0 0.0
  %1493 = vmatpush1.msra.mxu0 0.0
  %1494 = vmatprep.subr.mxu0 0.0
  %1495 = vmatpush1.msra.mxu0 0.0
  %1496 = vmatprep.subr.mxu0 0.0
  %1497 = vmatpush1.msra.mxu0 0.0
  %1498 = vmatprep.subr.mxu0 0.0
  %1499 = vmatpush1.msra.mxu0 0.0
  %1500 = vmatprep.subr.mxu0 0.0
  %1501 = vmatpush1.msra.mxu0 0.0
  %1502 = vmatprep.subr.mxu0 0.0
  %1503 = vmatpush1.msra.mxu0 0.0
  %1504 = vmatprep.subr.mxu0 0.0
  %1505 = vmatpush1.msra.mxu0 0.0
  %1506 = vmatprep.mubr.f32.mxu0 0.0
  %1507 = vmatmul.mubr.f32.gmra.mrb[0].mxu0 %v1431
  %v1508 = vpop.f32.mrb[0].mxu0
  %v1509 = vadd.f32 0.0, %v1508
  %v1510 = vpop.f32.mrb[0].mxu0
  %1511 = vmatprep.mubr.f32.mxu0 0.0
  %1512 = vmatmul.mubr.f32.gmra.mrb[0].mxu0 %v1434
  %v1513 = vpop.f32.mrb[0].mxu0
  %v1514 = vadd.f32 0.0, %v1513
  %v1515 = vpop.f32.mrb[0].mxu0
  %1516 = vmatprep.mubr.f32.mxu0 0.0
  %1517 = vmatmul.mubr.f32.gmra.mrb[0].mxu0 %v1437
  %v1518 = vpop.f32.mrb[0].mxu0
  %v1519 = vadd.f32 0.0, %v1518
  %v1520 = vpop.f32.mrb[0].mxu0
  %1521 = vmatprep.mubr.f32.mxu0 0.0
  %1522 = vmatmul.mubr.f32.gmra.mrb[0].mxu0 %v1440
  %v1523 = vpop.f32.mrb[0].mxu0
  %v1524 = vadd.f32 0.0, %v1523
  %v1525 = vpop.f32.mrb[0].mxu0
  %1526 = vdwg.mxu0
  %v1527 = vld [vmem:[%s2 + $0xf8] sm:$0xff]
  %v1528 = vld [vmem:[%s2 + $0x100] sm:$0xff]
  %v1530 = vsel %vm14, %v1424, 0
  %v1533 = vsel %vm14, %v1425, 0
  %v1536 = vsel %vm14, %v1426, 0
  %v1539 = vsel %vm14, %v1427, 0
  %1541 = vmatprep.subr.mxu0 0.0
  %1542 = vmatpush1.msra.mxu0 %v1527
  %1543 = vmatprep.subr.mxu0 0.0
  %1544 = vmatpush1.msra.mxu0 %v1528
  %1545 = vmatprep.subr.mxu0 0.0
  %1546 = vmatpush1.msra.mxu0 0.0
  %1547 = vmatprep.subr.mxu0 0.0
  %1548 = vmatpush1.msra.mxu0 0.0
  %1549 = vmatprep.subr.mxu0 0.0
  %1550 = vmatpush1.msra.mxu0 0.0
  %1551 = vmatprep.subr.mxu0 0.0
  %1552 = vmatpush1.msra.mxu0 0.0
  %1553 = vmatprep.subr.mxu0 0.0
  %1554 = vmatpush1.msra.mxu0 0.0
  %1555 = vmatprep.subr.mxu0 0.0
  %1556 = vmatpush1.msra.mxu0 0.0
  %1557 = vmatprep.subr.mxu0 0.0
  %1558 = vmatpush1.msra.mxu0 0.0
  %1559 = vmatprep.subr.mxu0 0.0
  %1560 = vmatpush1.msra.mxu0 0.0
  %1561 = vmatprep.subr.mxu0 0.0
  %1562 = vmatpush1.msra.mxu0 0.0
  %1563 = vmatprep.subr.mxu0 0.0
  %1564 = vmatpush1.msra.mxu0 0.0
  %1565 = vmatprep.subr.mxu0 0.0
  %1566 = vmatpush1.msra.mxu0 0.0
  %1567 = vmatprep.subr.mxu0 0.0
  %1568 = vmatpush1.msra.mxu0 0.0
  %1569 = vmatprep.subr.mxu0 0.0
  %1570 = vmatpush1.msra.mxu0 0.0
  %1571 = vmatprep.subr.mxu0 0.0
  %1572 = vmatpush1.msra.mxu0 0.0
  %1573 = vmatprep.subr.mxu0 0.0
  %1574 = vmatpush1.msra.mxu0 0.0
  %1575 = vmatprep.subr.mxu0 0.0
  %1576 = vmatpush1.msra.mxu0 0.0
  %1577 = vmatprep.subr.mxu0 0.0
  %1578 = vmatpush1.msra.mxu0 0.0
  %1579 = vmatprep.subr.mxu0 0.0
  %1580 = vmatpush1.msra.mxu0 0.0
  %1581 = vmatprep.subr.mxu0 0.0
  %1582 = vmatpush1.msra.mxu0 0.0
  %1583 = vmatprep.subr.mxu0 0.0
  %1584 = vmatpush1.msra.mxu0 0.0
  %1585 = vmatprep.subr.mxu0 0.0
  %1586 = vmatpush1.msra.mxu0 0.0
  %1587 = vmatprep.subr.mxu0 0.0
  %1588 = vmatpush1.msra.mxu0 0.0
  %1589 = vmatprep.subr.mxu0 0.0
  %1590 = vmatpush1.msra.mxu0 0.0
  %1591 = vmatprep.subr.mxu0 0.0
  %1592 = vmatpush1.msra.mxu0 0.0
  %1593 = vmatprep.subr.mxu0 0.0
  %1594 = vmatpush1.msra.mxu0 0.0
  %1595 = vmatprep.subr.mxu0 0.0
  %1596 = vmatpush1.msra.mxu0 0.0
  %1597 = vmatprep.subr.mxu0 0.0
  %1598 = vmatpush1.msra.mxu0 0.0
  %1599 = vmatprep.subr.mxu0 0.0
  %1600 = vmatpush1.msra.mxu0 0.0
  %1601 = vmatprep.subr.mxu0 0.0
  %1602 = vmatpush1.msra.mxu0 0.0
  %1603 = vmatprep.subr.mxu0 0.0
  %1604 = vmatpush1.msra.mxu0 0.0
  %1605 = vmatprep.mubr.f32.mxu0 0.0
  %1606 = vmatmul.mubr.f32.gmra.mrb[0].mxu0 %v1530
  %v1607 = vpop.f32.mrb[0].mxu0
  %v1608 = vadd.f32 %v1509, %v1607
  %v1609 = vpop.f32.mrb[0].mxu0
  %1610 = vmatprep.mubr.f32.mxu0 0.0
  %1611 = vmatmul.mubr.f32.gmra.mrb[0].mxu0 %v1533
  %v1612 = vpop.f32.mrb[0].mxu0
  %v1613 = vadd.f32 %v1514, %v1612
  %v1614 = vpop.f32.mrb[0].mxu0
  %1615 = vmatprep.mubr.f32.mxu0 0.0
  %1616 = vmatmul.mubr.f32.gmra.mrb[0].mxu0 %v1536
  %v1617 = vpop.f32.mrb[0].mxu0
  %v1618 = vadd.f32 %v1519, %v1617
  %v1619 = vpop.f32.mrb[0].mxu0
  %1620 = vmatprep.mubr.f32.mxu0 0.0
  %1621 = vmatmul.mubr.f32.gmra.mrb[0].mxu0 %v1539
  %v1622 = vpop.f32.mrb[0].mxu0
  %v1623 = vadd.f32 %v1524, %v1622
  %v1624 = vpop.f32.mrb[0].mxu0
  %1625 = vdwg.mxu0
  %v1626 = vld [vmem:[%s2 + $0x118] sm:$0x1]
  %v1627 = vlaneseq
  %v1628 = vshrl.u32 %v1627, 7
  %v1629 = vsub.s32 0, %v1628
  %v1630 = vrot.slane %v1626, %v1629
  %v1631 = vadd.f32 %v1608, %v1630
  %v1632 = vadd.f32 %v1613, %v1630
  %v1633 = vadd.f32 %v1618, %v1630
  %v1634 = vadd.f32 %v1623, %v1630
  %v1635 = vmax.f32 %v1631, 0.0
  %v1636 = vmax.f32 %v1632, 0.0
  %v1637 = vmax.f32 %v1633, 0.0
  %v1638 = vmax.f32 %v1634, 0.0
  %1639 = vst.msk [vmem:[#allocation2 + $0x10] sm:$0xff] %vm14, %v1635
  %1640 = vst.msk [vmem:[#allocation2 + $0x18] sm:$0xff] %vm14, %v1636
  %1641 = vst.msk [vmem:[#allocation2 + $0x20] sm:$0xff] %vm14, %v1637
  %1642 = vst.msk [vmem:[#allocation2 + $0x28] sm:$0xff] %vm14, %v1638
  %v1643 = vld [vmem:[#allocation2] sm:$0xff]
  %v1644 = vld [vmem:[#allocation2 + $0x8] sm:$0xff]
  %v1645 = vld [vmem:[#allocation2 + $0x10] sm:$0xff]
  %v1646 = vld [vmem:[#allocation2 + $0x18] sm:$0xff]
  %v1647 = vld [vmem:[%s2 + $0x120] sm:$0xff]
  %v1648 = vld [vmem:[%s2 + $0x128] sm:$0xff]
  %v1649 = vld [vmem:[%s2 + $0x130] sm:$0xff]
  %v1650 = vld [vmem:[%s2 + $0x138] sm:$0xff]
  %v1652 = vsel %vm14, %v1635, 0
  %v1655 = vsel %vm14, %v1636, 0
  %v1658 = vsel %vm14, %v1637, 0
  %v1661 = vsel %vm14, %v1638, 0
  %1663 = vmatprep.subr.mxu0 0.0
  %1664 = vmatpush1.msra.mxu0 %v1649
  %1665 = vmatprep.subr.mxu0 0.0
  %1666 = vmatpush1.msra.mxu0 %v1650
  %1667 = vmatprep.subr.mxu0 0.0
  %1668 = vmatpush1.msra.mxu0 0.0
  %1669 = vmatprep.subr.mxu0 0.0
  %1670 = vmatpush1.msra.mxu0 0.0
  %1671 = vmatprep.subr.mxu0 0.0
  %1672 = vmatpush1.msra.mxu0 0.0
  %1673 = vmatprep.subr.mxu0 0.0
  %1674 = vmatpush1.msra.mxu0 0.0
  %1675 = vmatprep.subr.mxu0 0.0
  %1676 = vmatpush1.msra.mxu0 0.0
  %1677 = vmatprep.subr.mxu0 0.0
  %1678 = vmatpush1.msra.mxu0 0.0
  %1679 = vmatprep.subr.mxu0 0.0
  %1680 = vmatpush1.msra.mxu0 0.0
  %1681 = vmatprep.subr.mxu0 0.0
  %1682 = vmatpush1.msra.mxu0 0.0
  %1683 = vmatprep.subr.mxu0 0.0
  %1684 = vmatpush1.msra.mxu0 0.0
  %1685 = vmatprep.subr.mxu0 0.0
  %1686 = vmatpush1.msra.mxu0 0.0
  %1687 = vmatprep.subr.mxu0 0.0
  %1688 = vmatpush1.msra.mxu0 0.0
  %1689 = vmatprep.subr.mxu0 0.0
  %1690 = vmatpush1.msra.mxu0 0.0
  %1691 = vmatprep.subr.mxu0 0.0
  %1692 = vmatpush1.msra.mxu0 0.0
  %1693 = vmatprep.subr.mxu0 0.0
  %1694 = vmatpush1.msra.mxu0 0.0
  %1695 = vmatprep.subr.mxu0 0.0
  %1696 = vmatpush1.msra.mxu0 0.0
  %1697 = vmatprep.subr.mxu0 0.0
  %1698 = vmatpush1.msra.mxu0 0.0
  %1699 = vmatprep.subr.mxu0 0.0
  %1700 = vmatpush1.msra.mxu0 0.0
  %1701 = vmatprep.subr.mxu0 0.0
  %1702 = vmatpush1.msra.mxu0 0.0
  %1703 = vmatprep.subr.mxu0 0.0
  %1704 = vmatpush1.msra.mxu0 0.0
  %1705 = vmatprep.subr.mxu0 0.0
  %1706 = vmatpush1.msra.mxu0 0.0
  %1707 = vmatprep.subr.mxu0 0.0
  %1708 = vmatpush1.msra.mxu0 0.0
  %1709 = vmatprep.subr.mxu0 0.0
  %1710 = vmatpush1.msra.mxu0 0.0
  %1711 = vmatprep.subr.mxu0 0.0
  %1712 = vmatpush1.msra.mxu0 0.0
  %1713 = vmatprep.subr.mxu0 0.0
  %1714 = vmatpush1.msra.mxu0 0.0
  %1715 = vmatprep.subr.mxu0 0.0
  %1716 = vmatpush1.msra.mxu0 0.0
  %1717 = vmatprep.subr.mxu0 0.0
  %1718 = vmatpush1.msra.mxu0 0.0
  %1719 = vmatprep.subr.mxu0 0.0
  %1720 = vmatpush1.msra.mxu0 0.0
  %1721 = vmatprep.subr.mxu0 0.0
  %1722 = vmatpush1.msra.mxu0 0.0
  %1723 = vmatprep.subr.mxu0 0.0
  %1724 = vmatpush1.msra.mxu0 0.0
  %1725 = vmatprep.subr.mxu0 0.0
  %1726 = vmatpush1.msra.mxu0 0.0
  %1727 = vmatprep.mubr.f32.mxu0 0.0
  %1728 = vmatmul.mubr.f32.gmra.mrb[0].mxu0 %v1652
  %v1729 = vpop.f32.mrb[0].mxu0
  %v1730 = vadd.f32 0.0, %v1729
  %v1731 = vpop.f32.mrb[0].mxu0
  %1732 = vmatprep.mubr.f32.mxu0 0.0
  %1733 = vmatmul.mubr.f32.gmra.mrb[0].mxu0 %v1655
  %v1734 = vpop.f32.mrb[0].mxu0
  %v1735 = vadd.f32 0.0, %v1734
  %v1736 = vpop.f32.mrb[0].mxu0
  %1737 = vmatprep.mubr.f32.mxu0 0.0
  %1738 = vmatmul.mubr.f32.gmra.mrb[0].mxu0 %v1658
  %v1739 = vpop.f32.mrb[0].mxu0
  %v1740 = vadd.f32 0.0, %v1739
  %v1741 = vpop.f32.mrb[0].mxu0
  %1742 = vmatprep.mubr.f32.mxu0 0.0
  %1743 = vmatmul.mubr.f32.gmra.mrb[0].mxu0 %v1661
  %v1744 = vpop.f32.mrb[0].mxu0
  %v1745 = vadd.f32 0.0, %v1744
  %v1746 = vpop.f32.mrb[0].mxu0
  %1747 = vdwg.mxu0
  %v1749 = vsel %vm14, %v1643, 0
  %v1752 = vsel %vm14, %v1644, 0
  %v1755 = vsel %vm14, %v1645, 0
  %v1758 = vsel %vm14, %v1646, 0
  %1760 = vmatprep.subr.mxu0 0.0
  %1761 = vmatpush1.msra.mxu0 %v1647
  %1762 = vmatprep.subr.mxu0 0.0
  %1763 = vmatpush1.msra.mxu0 %v1648
  %1764 = vmatprep.subr.mxu0 0.0
  %1765 = vmatpush1.msra.mxu0 0.0
  %1766 = vmatprep.subr.mxu0 0.0
  %1767 = vmatpush1.msra.mxu0 0.0
  %1768 = vmatprep.subr.mxu0 0.0
  %1769 = vmatpush1.msra.mxu0 0.0
  %1770 = vmatprep.subr.mxu0 0.0
  %1771 = vmatpush1.msra.mxu0 0.0
  %1772 = vmatprep.subr.mxu0 0.0
  %1773 = vmatpush1.msra.mxu0 0.0
  %1774 = vmatprep.subr.mxu0 0.0
  %1775 = vmatpush1.msra.mxu0 0.0
  %1776 = vmatprep.subr.mxu0 0.0
  %1777 = vmatpush1.msra.mxu0 0.0
  %1778 = vmatprep.subr.mxu0 0.0
  %1779 = vmatpush1.msra.mxu0 0.0
  %1780 = vmatprep.subr.mxu0 0.0
  %1781 = vmatpush1.msra.mxu0 0.0
  %1782 = vmatprep.subr.mxu0 0.0
  %1783 = vmatpush1.msra.mxu0 0.0
  %1784 = vmatprep.subr.mxu0 0.0
  %1785 = vmatpush1.msra.mxu0 0.0
  %1786 = vmatprep.subr.mxu0 0.0
  %1787 = vmatpush1.msra.mxu0 0.0
  %1788 = vmatprep.subr.mxu0 0.0
  %1789 = vmatpush1.msra.mxu0 0.0
  %1790 = vmatprep.subr.mxu0 0.0
  %1791 = vmatpush1.msra.mxu0 0.0
  %1792 = vmatprep.subr.mxu0 0.0
  %1793 = vmatpush1.msra.mxu0 0.0
  %1794 = vmatprep.subr.mxu0 0.0
  %1795 = vmatpush1.msra.mxu0 0.0
  %1796 = vmatprep.subr.mxu0 0.0
  %1797 = vmatpush1.msra.mxu0 0.0
  %1798 = vmatprep.subr.mxu0 0.0
  %1799 = vmatpush1.msra.mxu0 0.0
  %1800 = vmatprep.subr.mxu0 0.0
  %1801 = vmatpush1.msra.mxu0 0.0
  %1802 = vmatprep.subr.mxu0 0.0
  %1803 = vmatpush1.msra.mxu0 0.0
  %1804 = vmatprep.subr.mxu0 0.0
  %1805 = vmatpush1.msra.mxu0 0.0
  %1806 = vmatprep.subr.mxu0 0.0
  %1807 = vmatpush1.msra.mxu0 0.0
  %1808 = vmatprep.subr.mxu0 0.0
  %1809 = vmatpush1.msra.mxu0 0.0
  %1810 = vmatprep.subr.mxu0 0.0
  %1811 = vmatpush1.msra.mxu0 0.0
  %1812 = vmatprep.subr.mxu0 0.0
  %1813 = vmatpush1.msra.mxu0 0.0
  %1814 = vmatprep.subr.mxu0 0.0
  %1815 = vmatpush1.msra.mxu0 0.0
  %1816 = vmatprep.subr.mxu0 0.0
  %1817 = vmatpush1.msra.mxu0 0.0
  %1818 = vmatprep.subr.mxu0 0.0
  %1819 = vmatpush1.msra.mxu0 0.0
  %1820 = vmatprep.subr.mxu0 0.0
  %1821 = vmatpush1.msra.mxu0 0.0
  %1822 = vmatprep.subr.mxu0 0.0
  %1823 = vmatpush1.msra.mxu0 0.0
  %1824 = vmatprep.mubr.f32.mxu0 0.0
  %1825 = vmatmul.mubr.f32.gmra.mrb[0].mxu0 %v1749
  %v1826 = vpop.f32.mrb[0].mxu0
  %v1827 = vadd.f32 %v1730, %v1826
  %v1828 = vpop.f32.mrb[0].mxu0
  %1829 = vmatprep.mubr.f32.mxu0 0.0
  %1830 = vmatmul.mubr.f32.gmra.mrb[0].mxu0 %v1752
  %v1831 = vpop.f32.mrb[0].mxu0
  %v1832 = vadd.f32 %v1735, %v1831
  %v1833 = vpop.f32.mrb[0].mxu0
  %1834 = vmatprep.mubr.f32.mxu0 0.0
  %1835 = vmatmul.mubr.f32.gmra.mrb[0].mxu0 %v1755
  %v1836 = vpop.f32.mrb[0].mxu0
  %v1837 = vadd.f32 %v1740, %v1836
  %v1838 = vpop.f32.mrb[0].mxu0
  %1839 = vmatprep.mubr.f32.mxu0 0.0
  %1840 = vmatmul.mubr.f32.gmra.mrb[0].mxu0 %v1758
  %v1841 = vpop.f32.mrb[0].mxu0
  %v1842 = vadd.f32 %v1745, %v1841
  %v1843 = vpop.f32.mrb[0].mxu0
  %1844 = vdwg.mxu0
  %v1845 = vld [vmem:[%s2 + $0x140] sm:$0x1]
  %v1846 = vlaneseq
  %v1847 = vshrl.u32 %v1846, 7
  %v1848 = vsub.s32 0, %v1847
  %v1849 = vrot.slane %v1845, %v1848
  %v1850 = vadd.f32 %v1827, %v1849
  %v1851 = vadd.f32 %v1832, %v1849
  %v1852 = vadd.f32 %v1837, %v1849
  %v1853 = vadd.f32 %v1842, %v1849
  %v1854 = vmax.f32 %v1850, 0.0
  %v1855 = vmax.f32 %v1851, 0.0
  %v1856 = vmax.f32 %v1852, 0.0
  %v1857 = vmax.f32 %v1853, 0.0
  %v1858 = vadd.f32 %v1854, %v1416
  %v1859 = vadd.f32 %v1855, %v1417
  %v1860 = vadd.f32 %v1856, %v1418
  %v1861 = vadd.f32 %v1857, %v1419
  %v1862 = vmax.f32 %v1858, 0.0
  %v1863 = vmax.f32 %v1859, 0.0
  %v1864 = vmax.f32 %v1860, 0.0
  %v1865 = vmax.f32 %v1861, 0.0
  %v1866 = vld [vmem:[%s2 + $0x148] sm:$0x1f]
  %v1867 = vld [vmem:[%s2 + $0x150] sm:$0x1]
  %v1868 = vlaneseq
  %v1869 = vshrl.u32 %v1868, 7
  %v1870 = vsub.s32 0, %v1869
  %v1871 = vrot.slane %v1867, %v1870
  %vm1872 = vcmask 39936
  %v1873 = vsel %vm1872, %v17, 0
  %vm1875 = vcmask 1044480
  %v1877 = vsel %vm1875, %v1866, 0
  %1879 = vmatprep.subr.mxu0 0.0
  %1880 = vmatpush1.msra.mxu0 %v1877
  %1881 = vmatprep.subr.mxu0 0.0
  %1882 = vmatpush1.msra.mxu0 0.0
  %1883 = vmatprep.subr.mxu0 0.0
  %1884 = vmatpush1.msra.mxu0 0.0
  %1885 = vmatprep.subr.mxu0 0.0
  %1886 = vmatpush1.msra.mxu0 0.0
  %1887 = vmatprep.subr.mxu0 0.0
  %1888 = vmatpush1.msra.mxu0 0.0
  %1889 = vmatprep.subr.mxu0 0.0
  %1890 = vmatpush1.msra.mxu0 0.0
  %1891 = vmatprep.subr.mxu0 0.0
  %1892 = vmatpush1.msra.mxu0 0.0
  %1893 = vmatprep.subr.mxu0 0.0
  %1894 = vmatpush1.msra.mxu0 0.0
  %1895 = vmatprep.subr.mxu0 0.0
  %1896 = vmatpush1.msra.mxu0 0.0
  %1897 = vmatprep.subr.mxu0 0.0
  %1898 = vmatpush1.msra.mxu0 0.0
  %1899 = vmatprep.subr.mxu0 0.0
  %1900 = vmatpush1.msra.mxu0 0.0
  %1901 = vmatprep.subr.mxu0 0.0
  %1902 = vmatpush1.msra.mxu0 0.0
  %1903 = vmatprep.subr.mxu0 0.0
  %1904 = vmatpush1.msra.mxu0 0.0
  %1905 = vmatprep.subr.mxu0 0.0
  %1906 = vmatpush1.msra.mxu0 0.0
  %1907 = vmatprep.subr.mxu0 0.0
  %1908 = vmatpush1.msra.mxu0 0.0
  %1909 = vmatprep.subr.mxu0 0.0
  %1910 = vmatpush1.msra.mxu0 0.0
  %1911 = vmatprep.subr.mxu0 0.0
  %1912 = vmatpush1.msra.mxu0 0.0
  %1913 = vmatprep.subr.mxu0 0.0
  %1914 = vmatpush1.msra.mxu0 0.0
  %1915 = vmatprep.subr.mxu0 0.0
  %1916 = vmatpush1.msra.mxu0 0.0
  %1917 = vmatprep.subr.mxu0 0.0
  %1918 = vmatpush1.msra.mxu0 0.0
  %1919 = vmatprep.subr.mxu0 0.0
  %1920 = vmatpush1.msra.mxu0 0.0
  %1921 = vmatprep.subr.mxu0 0.0
  %1922 = vmatpush1.msra.mxu0 0.0
  %1923 = vmatprep.subr.mxu0 0.0
  %1924 = vmatpush1.msra.mxu0 0.0
  %1925 = vmatprep.subr.mxu0 0.0
  %1926 = vmatpush1.msra.mxu0 0.0
  %1927 = vmatprep.subr.mxu0 0.0
  %1928 = vmatpush1.msra.mxu0 0.0
  %1929 = vmatprep.subr.mxu0 0.0
  %1930 = vmatpush1.msra.mxu0 0.0
  %1931 = vmatprep.subr.mxu0 0.0
  %1932 = vmatpush1.msra.mxu0 0.0
  %1933 = vmatprep.subr.mxu0 0.0
  %1934 = vmatpush1.msra.mxu0 0.0
  %1935 = vmatprep.subr.mxu0 0.0
  %1936 = vmatpush1.msra.mxu0 0.0
  %1937 = vmatprep.subr.mxu0 0.0
  %1938 = vmatpush1.msra.mxu0 0.0
  %1939 = vmatprep.subr.mxu0 0.0
  %1940 = vmatpush1.msra.mxu0 0.0
  %1941 = vmatprep.subr.mxu0 0.0
  %1942 = vmatpush1.msra.mxu0 0.0
  %1943 = vmatprep.mubr.f32.mxu0 0.0
  %1944 = vmatmul.mubr.f32.gmra.mrb[0].mxu0 %v1873
  %v1945 = vpop.f32.mrb[0].mxu0
  %v1946 = vadd.f32 %v1871, %v1945
  %v1947 = vpop.f32.mrb[0].mxu0
  %1948 = vdwg.mxu0
  %v1949 = vmax.f32 %v1946, 0.0
  %v1950 = vld [vmem:[%s2 + $0x158] sm:$0xff]
  %v1951 = vld [vmem:[%s2 + $0x160] sm:$0xff]
  %v1952 = vld [vmem:[%s2 + $0x168] sm:$0x1]
  %v1953 = vlaneseq
  %v1954 = vshrl.u32 %v1953, 7
  %v1955 = vsub.s32 0, %v1954
  %v1956 = vrot.slane %v1952, %v1955
  %v1958 = vsel %vm14, %v1949, 0
  %1960 = vmatprep.subr.mxu0 0.0
  %1961 = vmatpush1.msra.mxu0 %v1950
  %1962 = vmatprep.subr.mxu0 0.0
  %1963 = vmatpush1.msra.mxu0 %v1951
  %1964 = vmatprep.subr.mxu0 0.0
  %1965 = vmatpush1.msra.mxu0 0.0
  %1966 = vmatprep.subr.mxu0 0.0
  %1967 = vmatpush1.msra.mxu0 0.0
  %1968 = vmatprep.subr.mxu0 0.0
  %1969 = vmatpush1.msra.mxu0 0.0
  %1970 = vmatprep.subr.mxu0 0.0
  %1971 = vmatpush1.msra.mxu0 0.0
  %1972 = vmatprep.subr.mxu0 0.0
  %1973 = vmatpush1.msra.mxu0 0.0
  %1974 = vmatprep.subr.mxu0 0.0
  %1975 = vmatpush1.msra.mxu0 0.0
  %1976 = vmatprep.subr.mxu0 0.0
  %1977 = vmatpush1.msra.mxu0 0.0
  %1978 = vmatprep.subr.mxu0 0.0
  %1979 = vmatpush1.msra.mxu0 0.0
  %1980 = vmatprep.subr.mxu0 0.0
  %1981 = vmatpush1.msra.mxu0 0.0
  %1982 = vmatprep.subr.mxu0 0.0
  %1983 = vmatpush1.msra.mxu0 0.0
  %1984 = vmatprep.subr.mxu0 0.0
  %1985 = vmatpush1.msra.mxu0 0.0
  %1986 = vmatprep.subr.mxu0 0.0
  %1987 = vmatpush1.msra.mxu0 0.0
  %1988 = vmatprep.subr.mxu0 0.0
  %1989 = vmatpush1.msra.mxu0 0.0
  %1990 = vmatprep.subr.mxu0 0.0
  %1991 = vmatpush1.msra.mxu0 0.0
  %1992 = vmatprep.subr.mxu0 0.0
  %1993 = vmatpush1.msra.mxu0 0.0
  %1994 = vmatprep.subr.mxu0 0.0
  %1995 = vmatpush1.msra.mxu0 0.0
  %1996 = vmatprep.subr.mxu0 0.0
  %1997 = vmatpush1.msra.mxu0 0.0
  %1998 = vmatprep.subr.mxu0 0.0
  %1999 = vmatpush1.msra.mxu0 0.0
  %2000 = vmatprep.subr.mxu0 0.0
  %2001 = vmatpush1.msra.mxu0 0.0
  %2002 = vmatprep.subr.mxu0 0.0
  %2003 = vmatpush1.msra.mxu0 0.0
  %2004 = vmatprep.subr.mxu0 0.0
  %2005 = vmatpush1.msra.mxu0 0.0
  %2006 = vmatprep.subr.mxu0 0.0
  %2007 = vmatpush1.msra.mxu0 0.0
  %2008 = vmatprep.subr.mxu0 0.0
  %2009 = vmatpush1.msra.mxu0 0.0
  %2010 = vmatprep.subr.mxu0 0.0
  %2011 = vmatpush1.msra.mxu0 0.0
  %2012 = vmatprep.subr.mxu0 0.0
  %2013 = vmatpush1.msra.mxu0 0.0
  %2014 = vmatprep.subr.mxu0 0.0
  %2015 = vmatpush1.msra.mxu0 0.0
  %2016 = vmatprep.subr.mxu0 0.0
  %2017 = vmatpush1.msra.mxu0 0.0
  %2018 = vmatprep.subr.mxu0 0.0
  %2019 = vmatpush1.msra.mxu0 0.0
  %2020 = vmatprep.subr.mxu0 0.0
  %2021 = vmatpush1.msra.mxu0 0.0
  %2022 = vmatprep.subr.mxu0 0.0
  %2023 = vmatpush1.msra.mxu0 0.0
  %2024 = vmatprep.mubr.f32.mxu0 0.0
  %2025 = vmatmul.mubr.f32.gmra.mrb[0].mxu0 %v1958
  %v2026 = vpop.f32.mrb[0].mxu0
  %v2027 = vadd.f32 %v1956, %v2026
  %v2028 = vpop.f32.mrb[0].mxu0
  %2029 = vdwg.mxu0
  %v2030 = vmax.f32 %v2027, 0.0
  %v2031 = vld [vmem:[%s2 + $0x170] sm:$0xff]
  %v2032 = vld [vmem:[%s2 + $0x178] sm:$0xff]
  %v2033 = vld [vmem:[%s2 + $0x180] sm:$0x1]
  %v2034 = vlaneseq
  %v2035 = vshrl.u32 %v2034, 7
  %v2036 = vsub.s32 0, %v2035
  %v2037 = vrot.slane %v2033, %v2036
  %v2039 = vsel %vm14, %v2030, 0
  %2041 = vmatprep.subr.mxu0 0.0
  %2042 = vmatpush1.msra.mxu0 %v2031
  %2043 = vmatprep.subr.mxu0 0.0
  %2044 = vmatpush1.msra.mxu0 %v2032
  %2045 = vmatprep.subr.mxu0 0.0
  %2046 = vmatpush1.msra.mxu0 0.0
  %2047 = vmatprep.subr.mxu0 0.0
  %2048 = vmatpush1.msra.mxu0 0.0
  %2049 = vmatprep.subr.mxu0 0.0
  %2050 = vmatpush1.msra.mxu0 0.0
  %2051 = vmatprep.subr.mxu0 0.0
  %2052 = vmatpush1.msra.mxu0 0.0
  %2053 = vmatprep.subr.mxu0 0.0
  %2054 = vmatpush1.msra.mxu0 0.0
  %2055 = vmatprep.subr.mxu0 0.0
  %2056 = vmatpush1.msra.mxu0 0.0
  %2057 = vmatprep.subr.mxu0 0.0
  %2058 = vmatpush1.msra.mxu0 0.0
  %2059 = vmatprep.subr.mxu0 0.0
  %2060 = vmatpush1.msra.mxu0 0.0
  %2061 = vmatprep.subr.mxu0 0.0
  %2062 = vmatpush1.msra.mxu0 0.0
  %2063 = vmatprep.subr.mxu0 0.0
  %2064 = vmatpush1.msra.mxu0 0.0
  %2065 = vmatprep.subr.mxu0 0.0
  %2066 = vmatpush1.msra.mxu0 0.0
  %2067 = vmatprep.subr.mxu0 0.0
  %2068 = vmatpush1.msra.mxu0 0.0
  %2069 = vmatprep.subr.mxu0 0.0
  %2070 = vmatpush1.msra.mxu0 0.0
  %2071 = vmatprep.subr.mxu0 0.0
  %2072 = vmatpush1.msra.mxu0 0.0
  %2073 = vmatprep.subr.mxu0 0.0
  %2074 = vmatpush1.msra.mxu0 0.0
  %2075 = vmatprep.subr.mxu0 0.0
  %2076 = vmatpush1.msra.mxu0 0.0
  %2077 = vmatprep.subr.mxu0 0.0
  %2078 = vmatpush1.msra.mxu0 0.0
  %2079 = vmatprep.subr.mxu0 0.0
  %2080 = vmatpush1.msra.mxu0 0.0
  %2081 = vmatprep.subr.mxu0 0.0
  %2082 = vmatpush1.msra.mxu0 0.0
  %2083 = vmatprep.subr.mxu0 0.0
  %2084 = vmatpush1.msra.mxu0 0.0
  %2085 = vmatprep.subr.mxu0 0.0
  %2086 = vmatpush1.msra.mxu0 0.0
  %2087 = vmatprep.subr.mxu0 0.0
  %2088 = vmatpush1.msra.mxu0 0.0
  %2089 = vmatprep.subr.mxu0 0.0
  %2090 = vmatpush1.msra.mxu0 0.0
  %2091 = vmatprep.subr.mxu0 0.0
  %2092 = vmatpush1.msra.mxu0 0.0
  %2093 = vmatprep.subr.mxu0 0.0
  %2094 = vmatpush1.msra.mxu0 0.0
  %2095 = vmatprep.subr.mxu0 0.0
  %2096 = vmatpush1.msra.mxu0 0.0
  %2097 = vmatprep.subr.mxu0 0.0
  %2098 = vmatpush1.msra.mxu0 0.0
  %2099 = vmatprep.subr.mxu0 0.0
  %2100 = vmatpush1.msra.mxu0 0.0
  %2101 = vmatprep.subr.mxu0 0.0
  %2102 = vmatpush1.msra.mxu0 0.0
  %2103 = vmatprep.subr.mxu0 0.0
  %2104 = vmatpush1.msra.mxu0 0.0
  %2105 = vmatprep.mubr.f32.mxu0 0.0
  %2106 = vmatmul.mubr.f32.gmra.mrb[0].mxu0 %v2039
  %v2107 = vpop.f32.mrb[0].mxu0
  %v2108 = vadd.f32 %v2037, %v2107
  %v2109 = vpop.f32.mrb[0].mxu0
  %2110 = vdwg.mxu0
  %v2111 = vld [vmem:[%s2 + $0x188] sm:$0xff]
  %v2112 = vld [vmem:[%s2 + $0x190] sm:$0xff]
  %v2113 = vld [vmem:[%s2 + $0x198] sm:$0x1]
  %v2114 = vlaneseq
  %v2115 = vshrl.u32 %v2114, 7
  %v2116 = vsub.s32 0, %v2115
  %v2117 = vrot.slane %v2113, %v2116
  %2118 = vrot.lane.b32.xlu0 %v1949, 112
  %v2119 = vpop.permute.xlu0 %2118
  %v2120 = vsel %vm14, %v2119, 0
  %2122 = vmatprep.subr.mxu0 0.0
  %2123 = vmatpush1.msra.mxu0 %v2111
  %2124 = vmatprep.subr.mxu0 0.0
  %2125 = vmatpush1.msra.mxu0 %v2112
  %2126 = vmatprep.subr.mxu0 0.0
  %2127 = vmatpush1.msra.mxu0 0.0
  %2128 = vmatprep.subr.mxu0 0.0
  %2129 = vmatpush1.msra.mxu0 0.0
  %2130 = vmatprep.subr.mxu0 0.0
  %2131 = vmatpush1.msra.mxu0 0.0
  %2132 = vmatprep.subr.mxu0 0.0
  %2133 = vmatpush1.msra.mxu0 0.0
  %2134 = vmatprep.subr.mxu0 0.0
  %2135 = vmatpush1.msra.mxu0 0.0
  %2136 = vmatprep.subr.mxu0 0.0
  %2137 = vmatpush1.msra.mxu0 0.0
  %2138 = vmatprep.subr.mxu0 0.0
  %2139 = vmatpush1.msra.mxu0 0.0
  %2140 = vmatprep.subr.mxu0 0.0
  %2141 = vmatpush1.msra.mxu0 0.0
  %2142 = vmatprep.subr.mxu0 0.0
  %2143 = vmatpush1.msra.mxu0 0.0
  %2144 = vmatprep.subr.mxu0 0.0
  %2145 = vmatpush1.msra.mxu0 0.0
  %2146 = vmatprep.subr.mxu0 0.0
  %2147 = vmatpush1.msra.mxu0 0.0
  %2148 = vmatprep.subr.mxu0 0.0
  %2149 = vmatpush1.msra.mxu0 0.0
  %2150 = vmatprep.subr.mxu0 0.0
  %2151 = vmatpush1.msra.mxu0 0.0
  %2152 = vmatprep.subr.mxu0 0.0
  %2153 = vmatpush1.msra.mxu0 0.0
  %2154 = vmatprep.subr.mxu0 0.0
  %2155 = vmatpush1.msra.mxu0 0.0
  %2156 = vmatprep.subr.mxu0 0.0
  %2157 = vmatpush1.msra.mxu0 0.0
  %2158 = vmatprep.subr.mxu0 0.0
  %2159 = vmatpush1.msra.mxu0 0.0
  %2160 = vmatprep.subr.mxu0 0.0
  %2161 = vmatpush1.msra.mxu0 0.0
  %2162 = vmatprep.subr.mxu0 0.0
  %2163 = vmatpush1.msra.mxu0 0.0
  %2164 = vmatprep.subr.mxu0 0.0
  %2165 = vmatpush1.msra.mxu0 0.0
  %2166 = vmatprep.subr.mxu0 0.0
  %2167 = vmatpush1.msra.mxu0 0.0
  %2168 = vmatprep.subr.mxu0 0.0
  %2169 = vmatpush1.msra.mxu0 0.0
  %2170 = vmatprep.subr.mxu0 0.0
  %2171 = vmatpush1.msra.mxu0 0.0
  %2172 = vmatprep.subr.mxu0 0.0
  %2173 = vmatpush1.msra.mxu0 0.0
  %2174 = vmatprep.subr.mxu0 0.0
  %2175 = vmatpush1.msra.mxu0 0.0
  %2176 = vmatprep.subr.mxu0 0.0
  %2177 = vmatpush1.msra.mxu0 0.0
  %2178 = vmatprep.subr.mxu0 0.0
  %2179 = vmatpush1.msra.mxu0 0.0
  %2180 = vmatprep.subr.mxu0 0.0
  %2181 = vmatpush1.msra.mxu0 0.0
  %2182 = vmatprep.subr.mxu0 0.0
  %2183 = vmatpush1.msra.mxu0 0.0
  %2184 = vmatprep.subr.mxu0 0.0
  %2185 = vmatpush1.msra.mxu0 0.0
  %2186 = vmatprep.mubr.f32.mxu0 0.0
  %2187 = vmatmul.mubr.f32.gmra.mrb[0].mxu0 %v2120
  %v2188 = vpop.f32.mrb[0].mxu0
  %v2189 = vadd.f32 %v2117, %v2188
  %v2190 = vpop.f32.mrb[0].mxu0
  %2191 = vdwg.mxu0
  %v2192 = vmax.f32 %v2189, 0.0
  %v2193 = vld [vmem:[%s2 + $0x1a0] sm:$0xff]
  %v2194 = vld [vmem:[%s2 + $0x1a8] sm:$0xff]
  %v2195 = vld [vmem:[%s2 + $0x1b0] sm:$0x1]
  %v2196 = vlaneseq
  %v2197 = vshrl.u32 %v2196, 7
  %v2198 = vsub.s32 0, %v2197
  %v2199 = vrot.slane %v2195, %v2198
  %v2201 = vsel %vm14, %v2192, 0
  %2203 = vmatprep.subr.mxu0 0.0
  %2204 = vmatpush1.msra.mxu0 %v2193
  %2205 = vmatprep.subr.mxu0 0.0
  %2206 = vmatpush1.msra.mxu0 %v2194
  %2207 = vmatprep.subr.mxu0 0.0
  %2208 = vmatpush1.msra.mxu0 0.0
  %2209 = vmatprep.subr.mxu0 0.0
  %2210 = vmatpush1.msra.mxu0 0.0
  %2211 = vmatprep.subr.mxu0 0.0
  %2212 = vmatpush1.msra.mxu0 0.0
  %2213 = vmatprep.subr.mxu0 0.0
  %2214 = vmatpush1.msra.mxu0 0.0
  %2215 = vmatprep.subr.mxu0 0.0
  %2216 = vmatpush1.msra.mxu0 0.0
  %2217 = vmatprep.subr.mxu0 0.0
  %2218 = vmatpush1.msra.mxu0 0.0
  %2219 = vmatprep.subr.mxu0 0.0
  %2220 = vmatpush1.msra.mxu0 0.0
  %2221 = vmatprep.subr.mxu0 0.0
  %2222 = vmatpush1.msra.mxu0 0.0
  %2223 = vmatprep.subr.mxu0 0.0
  %2224 = vmatpush1.msra.mxu0 0.0
  %2225 = vmatprep.subr.mxu0 0.0
  %2226 = vmatpush1.msra.mxu0 0.0
  %2227 = vmatprep.subr.mxu0 0.0
  %2228 = vmatpush1.msra.mxu0 0.0
  %2229 = vmatprep.subr.mxu0 0.0
  %2230 = vmatpush1.msra.mxu0 0.0
  %2231 = vmatprep.subr.mxu0 0.0
  %2232 = vmatpush1.msra.mxu0 0.0
  %2233 = vmatprep.subr.mxu0 0.0
  %2234 = vmatpush1.msra.mxu0 0.0
  %2235 = vmatprep.subr.mxu0 0.0
  %2236 = vmatpush1.msra.mxu0 0.0
  %2237 = vmatprep.subr.mxu0 0.0
  %2238 = vmatpush1.msra.mxu0 0.0
  %2239 = vmatprep.subr.mxu0 0.0
  %2240 = vmatpush1.msra.mxu0 0.0
  %2241 = vmatprep.subr.mxu0 0.0
  %2242 = vmatpush1.msra.mxu0 0.0
  %2243 = vmatprep.subr.mxu0 0.0
  %2244 = vmatpush1.msra.mxu0 0.0
  %2245 = vmatprep.subr.mxu0 0.0
  %2246 = vmatpush1.msra.mxu0 0.0
  %2247 = vmatprep.subr.mxu0 0.0
  %2248 = vmatpush1.msra.mxu0 0.0
  %2249 = vmatprep.subr.mxu0 0.0
  %2250 = vmatpush1.msra.mxu0 0.0
  %2251 = vmatprep.subr.mxu0 0.0
  %2252 = vmatpush1.msra.mxu0 0.0
  %2253 = vmatprep.subr.mxu0 0.0
  %2254 = vmatpush1.msra.mxu0 0.0
  %2255 = vmatprep.subr.mxu0 0.0
  %2256 = vmatpush1.msra.mxu0 0.0
  %2257 = vmatprep.subr.mxu0 0.0
  %2258 = vmatpush1.msra.mxu0 0.0
  %2259 = vmatprep.subr.mxu0 0.0
  %2260 = vmatpush1.msra.mxu0 0.0
  %2261 = vmatprep.subr.mxu0 0.0
  %2262 = vmatpush1.msra.mxu0 0.0
  %2263 = vmatprep.subr.mxu0 0.0
  %2264 = vmatpush1.msra.mxu0 0.0
  %2265 = vmatprep.subr.mxu0 0.0
  %2266 = vmatpush1.msra.mxu0 0.0
  %2267 = vmatprep.mubr.f32.mxu0 0.0
  %2268 = vmatmul.mubr.f32.gmra.mrb[0].mxu0 %v2201
  %v2269 = vpop.f32.mrb[0].mxu0
  %v2270 = vadd.f32 %v2199, %v2269
  %v2271 = vpop.f32.mrb[0].mxu0
  %2272 = vdwg.mxu0
  %v2273 = vld [vmem:[%s2 + $0x1c8] sm:$0xff]
  %v2274 = vld [vmem:[%s2 + $0x1d0] sm:$0xff]
  %v2276 = vsel %vm14, %v2108, 0
  %2278 = vmatprep.subr.mxu0 0.0
  %2279 = vmatpush1.msra.mxu0 %v2273
  %2280 = vmatprep.subr.mxu0 0.0
  %2281 = vmatpush1.msra.mxu0 %v2274
  %2282 = vmatprep.subr.mxu0 0.0
  %2283 = vmatpush1.msra.mxu0 0.0
  %2284 = vmatprep.subr.mxu0 0.0
  %2285 = vmatpush1.msra.mxu0 0.0
  %2286 = vmatprep.subr.mxu0 0.0
  %2287 = vmatpush1.msra.mxu0 0.0
  %2288 = vmatprep.subr.mxu0 0.0
  %2289 = vmatpush1.msra.mxu0 0.0
  %2290 = vmatprep.subr.mxu0 0.0
  %2291 = vmatpush1.msra.mxu0 0.0
  %2292 = vmatprep.subr.mxu0 0.0
  %2293 = vmatpush1.msra.mxu0 0.0
  %2294 = vmatprep.subr.mxu0 0.0
  %2295 = vmatpush1.msra.mxu0 0.0
  %2296 = vmatprep.subr.mxu0 0.0
  %2297 = vmatpush1.msra.mxu0 0.0
  %2298 = vmatprep.subr.mxu0 0.0
  %2299 = vmatpush1.msra.mxu0 0.0
  %2300 = vmatprep.subr.mxu0 0.0
  %2301 = vmatpush1.msra.mxu0 0.0
  %2302 = vmatprep.subr.mxu0 0.0
  %2303 = vmatpush1.msra.mxu0 0.0
  %2304 = vmatprep.subr.mxu0 0.0
  %2305 = vmatpush1.msra.mxu0 0.0
  %2306 = vmatprep.subr.mxu0 0.0
  %2307 = vmatpush1.msra.mxu0 0.0
  %2308 = vmatprep.subr.mxu0 0.0
  %2309 = vmatpush1.msra.mxu0 0.0
  %2310 = vmatprep.subr.mxu0 0.0
  %2311 = vmatpush1.msra.mxu0 0.0
  %2312 = vmatprep.subr.mxu0 0.0
  %2313 = vmatpush1.msra.mxu0 0.0
  %2314 = vmatprep.subr.mxu0 0.0
  %2315 = vmatpush1.msra.mxu0 0.0
  %2316 = vmatprep.subr.mxu0 0.0
  %2317 = vmatpush1.msra.mxu0 0.0
  %2318 = vmatprep.subr.mxu0 0.0
  %2319 = vmatpush1.msra.mxu0 0.0
  %2320 = vmatprep.subr.mxu0 0.0
  %2321 = vmatpush1.msra.mxu0 0.0
  %2322 = vmatprep.subr.mxu0 0.0
  %2323 = vmatpush1.msra.mxu0 0.0
  %2324 = vmatprep.subr.mxu0 0.0
  %2325 = vmatpush1.msra.mxu0 0.0
  %2326 = vmatprep.subr.mxu0 0.0
  %2327 = vmatpush1.msra.mxu0 0.0
  %2328 = vmatprep.subr.mxu0 0.0
  %2329 = vmatpush1.msra.mxu0 0.0
  %2330 = vmatprep.subr.mxu0 0.0
  %2331 = vmatpush1.msra.mxu0 0.0
  %2332 = vmatprep.subr.mxu0 0.0
  %2333 = vmatpush1.msra.mxu0 0.0
  %2334 = vmatprep.subr.mxu0 0.0
  %2335 = vmatpush1.msra.mxu0 0.0
  %2336 = vmatprep.subr.mxu0 0.0
  %2337 = vmatpush1.msra.mxu0 0.0
  %2338 = vmatprep.subr.mxu0 0.0
  %2339 = vmatpush1.msra.mxu0 0.0
  %2340 = vmatprep.subr.mxu0 0.0
  %2341 = vmatpush1.msra.mxu0 0.0
  %2342 = vmatprep.mubr.f32.mxu0 0.0
  %2343 = vmatmul.mubr.f32.gmra.mrb[0].mxu0 %v2276
  %v2344 = vpop.f32.mrb[0].mxu0
  %v2345 = vadd.f32 0.0, %v2344
  %v2346 = vpop.f32.mrb[0].mxu0
  %2347 = vdwg.mxu0
  %v2348 = vld [vmem:[%s2 + $0x1b8] sm:$0xff]
  %v2349 = vld [vmem:[%s2 + $0x1c0] sm:$0xff]
  %v2351 = vcombine.low %v2345, %v2345
  %v2353 = vunpack.c.l.s4 1983009808
  %v2354 = vunpack.c.0.s8 %v2353
  %v2355 = vlaneseq
  %v2356 = vshrl.u32 %v2355, 7
  %v2357 = vsub.s32 %v2354, %v2356
  %v2358 = vrot.slane %v2351, %v2357
  %v2359 = vcombine.low %v2358, %v2358
  %v2362 = vsel %vm14, %v1862, 0
  %v2365 = vsel %vm14, %v1863, 0
  %v2368 = vsel %vm14, %v1864, 0
  %v2371 = vsel %vm14, %v1865, 0
  %2373 = vmatprep.subr.mxu0 0.0
  %2374 = vmatpush1.msra.mxu0 %v2348
  %2375 = vmatprep.subr.mxu0 0.0
  %2376 = vmatpush1.msra.mxu0 %v2349
  %2377 = vmatprep.subr.mxu0 0.0
  %2378 = vmatpush1.msra.mxu0 0.0
  %2379 = vmatprep.subr.mxu0 0.0
  %2380 = vmatpush1.msra.mxu0 0.0
  %2381 = vmatprep.subr.mxu0 0.0
  %2382 = vmatpush1.msra.mxu0 0.0
  %2383 = vmatprep.subr.mxu0 0.0
  %2384 = vmatpush1.msra.mxu0 0.0
  %2385 = vmatprep.subr.mxu0 0.0
  %2386 = vmatpush1.msra.mxu0 0.0
  %2387 = vmatprep.subr.mxu0 0.0
  %2388 = vmatpush1.msra.mxu0 0.0
  %2389 = vmatprep.subr.mxu0 0.0
  %2390 = vmatpush1.msra.mxu0 0.0
  %2391 = vmatprep.subr.mxu0 0.0
  %2392 = vmatpush1.msra.mxu0 0.0
  %2393 = vmatprep.subr.mxu0 0.0
  %2394 = vmatpush1.msra.mxu0 0.0
  %2395 = vmatprep.subr.mxu0 0.0
  %2396 = vmatpush1.msra.mxu0 0.0
  %2397 = vmatprep.subr.mxu0 0.0
  %2398 = vmatpush1.msra.mxu0 0.0
  %2399 = vmatprep.subr.mxu0 0.0
  %2400 = vmatpush1.msra.mxu0 0.0
  %2401 = vmatprep.subr.mxu0 0.0
  %2402 = vmatpush1.msra.mxu0 0.0
  %2403 = vmatprep.subr.mxu0 0.0
  %2404 = vmatpush1.msra.mxu0 0.0
  %2405 = vmatprep.subr.mxu0 0.0
  %2406 = vmatpush1.msra.mxu0 0.0
  %2407 = vmatprep.subr.mxu0 0.0
  %2408 = vmatpush1.msra.mxu0 0.0
  %2409 = vmatprep.subr.mxu0 0.0
  %2410 = vmatpush1.msra.mxu0 0.0
  %2411 = vmatprep.subr.mxu0 0.0
  %2412 = vmatpush1.msra.mxu0 0.0
  %2413 = vmatprep.subr.mxu0 0.0
  %2414 = vmatpush1.msra.mxu0 0.0
  %2415 = vmatprep.subr.mxu0 0.0
  %2416 = vmatpush1.msra.mxu0 0.0
  %2417 = vmatprep.subr.mxu0 0.0
  %2418 = vmatpush1.msra.mxu0 0.0
  %2419 = vmatprep.subr.mxu0 0.0
  %2420 = vmatpush1.msra.mxu0 0.0
  %2421 = vmatprep.subr.mxu0 0.0
  %2422 = vmatpush1.msra.mxu0 0.0
  %2423 = vmatprep.subr.mxu0 0.0
  %2424 = vmatpush1.msra.mxu0 0.0
  %2425 = vmatprep.subr.mxu0 0.0
  %2426 = vmatpush1.msra.mxu0 0.0
  %2427 = vmatprep.subr.mxu0 0.0
  %2428 = vmatpush1.msra.mxu0 0.0
  %2429 = vmatprep.subr.mxu0 0.0
  %2430 = vmatpush1.msra.mxu0 0.0
  %2431 = vmatprep.subr.mxu0 0.0
  %2432 = vmatpush1.msra.mxu0 0.0
  %2433 = vmatprep.subr.mxu0 0.0
  %2434 = vmatpush1.msra.mxu0 0.0
  %2435 = vmatprep.subr.mxu0 0.0
  %2436 = vmatpush1.msra.mxu0 0.0
  %2437 = vmatprep.mubr.f32.mxu0 0.0
  %2438 = vmatmul.mubr.f32.gmra.mrb[0].mxu0 %v2362
  %v2439 = vpop.f32.mrb[0].mxu0
  %v2440 = vadd.f32 %v2359, %v2439
  %v2441 = vpop.f32.mrb[0].mxu0
  %2442 = vmatprep.mubr.f32.mxu0 0.0
  %2443 = vmatmul.mubr.f32.gmra.mrb[0].mxu0 %v2365
  %v2444 = vpop.f32.mrb[0].mxu0
  %v2445 = vadd.f32 %v2359, %v2444
  %v2446 = vpop.f32.mrb[0].mxu0
  %2447 = vmatprep.mubr.f32.mxu0 0.0
  %2448 = vmatmul.mubr.f32.gmra.mrb[0].mxu0 %v2368
  %v2449 = vpop.f32.mrb[0].mxu0
  %v2450 = vadd.f32 %v2359, %v2449
  %v2451 = vpop.f32.mrb[0].mxu0
  %2452 = vmatprep.mubr.f32.mxu0 0.0
  %2453 = vmatmul.mubr.f32.gmra.mrb[0].mxu0 %v2371
  %v2454 = vpop.f32.mrb[0].mxu0
  %v2455 = vadd.f32 %v2359, %v2454
  %v2456 = vpop.f32.mrb[0].mxu0
  %2457 = vdwg.mxu0
  %v2458 = vld [vmem:[%s2 + $0x1d8] sm:$0x1]
  %v2459 = vlaneseq
  %v2460 = vshrl.u32 %v2459, 7
  %v2461 = vsub.s32 0, %v2460
  %v2462 = vrot.slane %v2458, %v2461
  %v2463 = vadd.f32 %v2440, %v2462
  %v2464 = vadd.f32 %v2445, %v2462
  %v2465 = vadd.f32 %v2450, %v2462
  %v2466 = vadd.f32 %v2455, %v2462
  %v2467 = vmax.f32 %v2463, 0.0
  %v2468 = vmax.f32 %v2464, 0.0
  %v2469 = vmax.f32 %v2465, 0.0
  %v2470 = vmax.f32 %v2466, 0.0
  %v2471 = vld [vmem:[%s2 + $0x1e0] sm:$0xff]
  %v2472 = vld [vmem:[%s2 + $0x1e8] sm:$0xff]
  %v2473 = vld [vmem:[%s2 + $0x1f0] sm:$0x1]
  %v2474 = vlaneseq
  %v2475 = vshrl.u32 %v2474, 7
  %v2476 = vsub.s32 0, %v2475
  %v2477 = vrot.slane %v2473, %v2476
  %v2479 = vsel %vm14, %v2467, 0
  %v2482 = vsel %vm14, %v2468, 0
  %v2485 = vsel %vm14, %v2469, 0
  %v2488 = vsel %vm14, %v2470, 0
  %2490 = vmatprep.subr.mxu0 0.0
  %2491 = vmatpush1.msra.mxu0 %v2471
  %2492 = vmatprep.subr.mxu0 0.0
  %2493 = vmatpush1.msra.mxu0 %v2472
  %2494 = vmatprep.subr.mxu0 0.0
  %2495 = vmatpush1.msra.mxu0 0.0
  %2496 = vmatprep.subr.mxu0 0.0
  %2497 = vmatpush1.msra.mxu0 0.0
  %2498 = vmatprep.subr.mxu0 0.0
  %2499 = vmatpush1.msra.mxu0 0.0
  %2500 = vmatprep.subr.mxu0 0.0
  %2501 = vmatpush1.msra.mxu0 0.0
  %2502 = vmatprep.subr.mxu0 0.0
  %2503 = vmatpush1.msra.mxu0 0.0
  %2504 = vmatprep.subr.mxu0 0.0
  %2505 = vmatpush1.msra.mxu0 0.0
  %2506 = vmatprep.subr.mxu0 0.0
  %2507 = vmatpush1.msra.mxu0 0.0
  %2508 = vmatprep.subr.mxu0 0.0
  %2509 = vmatpush1.msra.mxu0 0.0
  %2510 = vmatprep.subr.mxu0 0.0
  %2511 = vmatpush1.msra.mxu0 0.0
  %2512 = vmatprep.subr.mxu0 0.0
  %2513 = vmatpush1.msra.mxu0 0.0
  %2514 = vmatprep.subr.mxu0 0.0
  %2515 = vmatpush1.msra.mxu0 0.0
  %2516 = vmatprep.subr.mxu0 0.0
  %2517 = vmatpush1.msra.mxu0 0.0
  %2518 = vmatprep.subr.mxu0 0.0
  %2519 = vmatpush1.msra.mxu0 0.0
  %2520 = vmatprep.subr.mxu0 0.0
  %2521 = vmatpush1.msra.mxu0 0.0
  %2522 = vmatprep.subr.mxu0 0.0
  %2523 = vmatpush1.msra.mxu0 0.0
  %2524 = vmatprep.subr.mxu0 0.0
  %2525 = vmatpush1.msra.mxu0 0.0
  %2526 = vmatprep.subr.mxu0 0.0
  %2527 = vmatpush1.msra.mxu0 0.0
  %2528 = vmatprep.subr.mxu0 0.0
  %2529 = vmatpush1.msra.mxu0 0.0
  %2530 = vmatprep.subr.mxu0 0.0
  %2531 = vmatpush1.msra.mxu0 0.0
  %2532 = vmatprep.subr.mxu0 0.0
  %2533 = vmatpush1.msra.mxu0 0.0
  %2534 = vmatprep.subr.mxu0 0.0
  %2535 = vmatpush1.msra.mxu0 0.0
  %2536 = vmatprep.subr.mxu0 0.0
  %2537 = vmatpush1.msra.mxu0 0.0
  %2538 = vmatprep.subr.mxu0 0.0
  %2539 = vmatpush1.msra.mxu0 0.0
  %2540 = vmatprep.subr.mxu0 0.0
  %2541 = vmatpush1.msra.mxu0 0.0
  %2542 = vmatprep.subr.mxu0 0.0
  %2543 = vmatpush1.msra.mxu0 0.0
  %2544 = vmatprep.subr.mxu0 0.0
  %2545 = vmatpush1.msra.mxu0 0.0
  %2546 = vmatprep.subr.mxu0 0.0
  %2547 = vmatpush1.msra.mxu0 0.0
  %2548 = vmatprep.subr.mxu0 0.0
  %2549 = vmatpush1.msra.mxu0 0.0
  %2550 = vmatprep.subr.mxu0 0.0
  %2551 = vmatpush1.msra.mxu0 0.0
  %2552 = vmatprep.subr.mxu0 0.0
  %2553 = vmatpush1.msra.mxu0 0.0
  %2554 = vmatprep.mubr.f32.mxu0 0.0
  %2555 = vmatmul.mubr.f32.gmra.mrb[0].mxu0 %v2479
  %v2556 = vpop.f32.mrb[0].mxu0
  %v2557 = vadd.f32 %v2477, %v2556
  %v2558 = vpop.f32.mrb[0].mxu0
  %2559 = vmatprep.mubr.f32.mxu0 0.0
  %2560 = vmatmul.mubr.f32.gmra.mrb[0].mxu0 %v2482
  %v2561 = vpop.f32.mrb[0].mxu0
  %v2562 = vadd.f32 %v2477, %v2561
  %v2563 = vpop.f32.mrb[0].mxu0
  %2564 = vmatprep.mubr.f32.mxu0 0.0
  %2565 = vmatmul.mubr.f32.gmra.mrb[0].mxu0 %v2485
  %v2566 = vpop.f32.mrb[0].mxu0
  %v2567 = vadd.f32 %v2477, %v2566
  %v2568 = vpop.f32.mrb[0].mxu0
  %2569 = vmatprep.mubr.f32.mxu0 0.0
  %2570 = vmatmul.mubr.f32.gmra.mrb[0].mxu0 %v2488
  %v2571 = vpop.f32.mrb[0].mxu0
  %v2572 = vadd.f32 %v2477, %v2571
  %v2573 = vpop.f32.mrb[0].mxu0
  %2574 = vdwg.mxu0
  %v2575 = vmax.f32 %v2557, 0.0
  %v2576 = vmax.f32 %v2562, 0.0
  %v2577 = vmax.f32 %v2567, 0.0
  %v2578 = vmax.f32 %v2572, 0.0
  %v2579 = vld [vmem:[%s2 + $0x1f8] sm:$0xff]
  %v2580 = vld [vmem:[%s2 + $0x200] sm:$0xff]
  %v2581 = vld [vmem:[%s2 + $0x208] sm:$0x1]
  %v2582 = vlaneseq
  %v2583 = vshrl.u32 %v2582, 7
  %v2584 = vsub.s32 0, %v2583
  %v2585 = vrot.slane %v2581, %v2584
  %v2587 = vsel %vm14, %v2575, 0
  %v2590 = vsel %vm14, %v2576, 0
  %v2593 = vsel %vm14, %v2577, 0
  %v2596 = vsel %vm14, %v2578, 0
  %2598 = vmatprep.subr.mxu0 0.0
  %2599 = vmatpush1.msra.mxu0 %v2579
  %2600 = vmatprep.subr.mxu0 0.0
  %2601 = vmatpush1.msra.mxu0 %v2580
  %2602 = vmatprep.subr.mxu0 0.0
  %2603 = vmatpush1.msra.mxu0 0.0
  %2604 = vmatprep.subr.mxu0 0.0
  %2605 = vmatpush1.msra.mxu0 0.0
  %2606 = vmatprep.subr.mxu0 0.0
  %2607 = vmatpush1.msra.mxu0 0.0
  %2608 = vmatprep.subr.mxu0 0.0
  %2609 = vmatpush1.msra.mxu0 0.0
  %2610 = vmatprep.subr.mxu0 0.0
  %2611 = vmatpush1.msra.mxu0 0.0
  %2612 = vmatprep.subr.mxu0 0.0
  %2613 = vmatpush1.msra.mxu0 0.0
  %2614 = vmatprep.subr.mxu0 0.0
  %2615 = vmatpush1.msra.mxu0 0.0
  %2616 = vmatprep.subr.mxu0 0.0
  %2617 = vmatpush1.msra.mxu0 0.0
  %2618 = vmatprep.subr.mxu0 0.0
  %2619 = vmatpush1.msra.mxu0 0.0
  %2620 = vmatprep.subr.mxu0 0.0
  %2621 = vmatpush1.msra.mxu0 0.0
  %2622 = vmatprep.subr.mxu0 0.0
  %2623 = vmatpush1.msra.mxu0 0.0
  %2624 = vmatprep.subr.mxu0 0.0
  %2625 = vmatpush1.msra.mxu0 0.0
  %2626 = vmatprep.subr.mxu0 0.0
  %2627 = vmatpush1.msra.mxu0 0.0
  %2628 = vmatprep.subr.mxu0 0.0
  %2629 = vmatpush1.msra.mxu0 0.0
  %2630 = vmatprep.subr.mxu0 0.0
  %2631 = vmatpush1.msra.mxu0 0.0
  %2632 = vmatprep.subr.mxu0 0.0
  %2633 = vmatpush1.msra.mxu0 0.0
  %2634 = vmatprep.subr.mxu0 0.0
  %2635 = vmatpush1.msra.mxu0 0.0
  %2636 = vmatprep.subr.mxu0 0.0
  %2637 = vmatpush1.msra.mxu0 0.0
  %2638 = vmatprep.subr.mxu0 0.0
  %2639 = vmatpush1.msra.mxu0 0.0
  %2640 = vmatprep.subr.mxu0 0.0
  %2641 = vmatpush1.msra.mxu0 0.0
  %2642 = vmatprep.subr.mxu0 0.0
  %2643 = vmatpush1.msra.mxu0 0.0
  %2644 = vmatprep.subr.mxu0 0.0
  %2645 = vmatpush1.msra.mxu0 0.0
  %2646 = vmatprep.subr.mxu0 0.0
  %2647 = vmatpush1.msra.mxu0 0.0
  %2648 = vmatprep.subr.mxu0 0.0
  %2649 = vmatpush1.msra.mxu0 0.0
  %2650 = vmatprep.subr.mxu0 0.0
  %2651 = vmatpush1.msra.mxu0 0.0
  %2652 = vmatprep.subr.mxu0 0.0
  %2653 = vmatpush1.msra.mxu0 0.0
  %2654 = vmatprep.subr.mxu0 0.0
  %2655 = vmatpush1.msra.mxu0 0.0
  %2656 = vmatprep.subr.mxu0 0.0
  %2657 = vmatpush1.msra.mxu0 0.0
  %2658 = vmatprep.subr.mxu0 0.0
  %2659 = vmatpush1.msra.mxu0 0.0
  %2660 = vmatprep.subr.mxu0 0.0
  %2661 = vmatpush1.msra.mxu0 0.0
  %2662 = vmatprep.mubr.f32.mxu0 0.0
  %2663 = vmatmul.mubr.f32.gmra.mrb[0].mxu0 %v2587
  %v2664 = vpop.f32.mrb[0].mxu0
  %v2665 = vadd.f32 %v2585, %v2664
  %v2666 = vpop.f32.mrb[0].mxu0
  %2667 = vmatprep.mubr.f32.mxu0 0.0
  %2668 = vmatmul.mubr.f32.gmra.mrb[0].mxu0 %v2590
  %v2669 = vpop.f32.mrb[0].mxu0
  %v2670 = vadd.f32 %v2585, %v2669
  %v2671 = vpop.f32.mrb[0].mxu0
  %2672 = vmatprep.mubr.f32.mxu0 0.0
  %2673 = vmatmul.mubr.f32.gmra.mrb[0].mxu0 %v2593
  %v2674 = vpop.f32.mrb[0].mxu0
  %v2675 = vadd.f32 %v2585, %v2674
  %v2676 = vpop.f32.mrb[0].mxu0
  %2677 = vmatprep.mubr.f32.mxu0 0.0
  %2678 = vmatmul.mubr.f32.gmra.mrb[0].mxu0 %v2596
  %v2679 = vpop.f32.mrb[0].mxu0
  %v2680 = vadd.f32 %v2585, %v2679
  %v2681 = vpop.f32.mrb[0].mxu0
  %2682 = vdwg.mxu0
  %v2684 = vcombine.low %v2270, %v2270
  %v2686 = vunpack.c.l.s4 1983009808
  %v2687 = vunpack.c.0.s8 %v2686
  %v2688 = vlaneseq
  %v2689 = vshrl.u32 %v2688, 7
  %v2690 = vsub.s32 %v2687, %v2689
  %v2691 = vrot.slane %v2684, %v2690
  %v2692 = vcombine.low %v2691, %v2691
  %v2694 = vadd.f32 %v2665, %v2692
  %v2695 = vadd.f32 %v2670, %v2692
  %v2696 = vadd.f32 %v2675, %v2692
  %v2697 = vadd.f32 %v2680, %v2692
  %vm2698 = vcmask 7168
  %2699 = vst.msk [vmem:[%s3] sm:$0xff] %vm2698, %v2694
  %2700 = vst.msk [vmem:[%s3 + $0x8] sm:$0xff] %vm2698, %v2695
  %2701 = vst.msk [vmem:[%s3 + $0x10] sm:$0xff] %vm2698, %v2696
  %2702 = vst.msk [vmem:[%s3 + $0x18] sm:$0xff] %vm2698, %v2697
  // Predicated region
  $region14: #{tpu_custom_call.1} parent=0 // pred_check
    _
  $region15: #{tpu_custom_call.1} parent=0 // pred_check_branch
    %2704 = sbr.rel (0) target = $region17
  $region16: #{tpu_custom_call.1} parent=0 // pred_region
    _
  $region17: #{tpu_custom_call.1} parent=0 // pred_fallthru
    _
  // Predicated region
  $region18: #{tpu_custom_call.1} parent=0 // pred_check
    _
  $region19: #{tpu_custom_call.1} parent=0 // pred_check_branch
    %2706 = sbr.rel (0) target = $region21
  $region20: #{tpu_custom_call.1} parent=0 // pred_region
    _
  $region21: #{tpu_custom_call.1} parent=0 // pred_fallthru
    _

</llo_original>
